<compile_context>
chip_gen: v7x
topology: tpu7x:2x2x1
jax: 0.10.0
libtpu: 0.0.40
codegen_flags: <defaults>
</compile_context>

<pallas_src>
import numpy as np
import jax
import jax.numpy as jnp
from jax.experimental import pallas as pl
from jax.experimental.pallas import tpu as pltpu

_LANE = 128
_CBLK = 8          # channel chunk size for the scatter-max temporaries


def _tile_defaults():
    """Generation-aware (tm, tn, vmem_cap) selection."""
    kind = ''
    try:
        kind = jax.devices()[0].device_kind.lower()
    except Exception:
        pass
    if ('v5' in kind) or ('v6' in kind):
        # v5e / v6e: 128 MiB VMEM -> larger node tiles, roomier budget.
        return 128, 512, 96 << 20
    # v7x (64 MiB VMEM per TensorCore) and unknown chips: conservative.
    return 128, 256, 44 << 20


def _pool_scatter_max_kernel(sb_ref, st_ref, cl_ref, feat_ref, xt_ref,
                             sums_ref, xmax_ref, rhs_ref):
    """One work step (cluster block, node tile) of the segment reductions (aggr='max').

    sb_ref/st_ref: (S,)   int32 SMEM  cluster-block / node-tile index per work step
    cl_ref:        (1,TN) int32       sorted global cluster id per node (-1 = padding)
    feat_ref:      (TN,CW) f32        [x | pos | 1] per node (cluster-sorted)
    xt_ref:        (CP,TN) f32        channel-major node features (max path)
    sums_ref:      (TM,FW) f32        resident accumulator (xsum | psum | cnt | 0-pad)
    xmax_ref:      (CP,TM) f32        resident accumulator, channel-major scatter max
    rhs_ref:       (TN,FW) f32        VMEM scratch: lane-dense MXU RHS
    """
    s = pl.program_id(0)
    tm = sums_ref.shape[0]
    tn = cl_ref.shape[1]
    cw = feat_ref.shape[1]
    c_pad = xt_ref.shape[0]

    blk = sb_ref[s]
    prev_blk = sb_ref[jnp.maximum(s - 1, 0)]
    first_of_block = jnp.logical_or(s == 0, prev_blk != blk)

    # One-time zero of the RHS lane padding (lanes >= CW never change afterwards).
    @pl.when(s == 0)
    def _():
        rhs_ref[...] = jnp.zeros_like(rhs_ref)

    # Assemble the lane-dense MXU RHS in VMEM instead of streaming a zero-padded
    # 128-wide array from HBM (per-node HBM traffic is just [x|pos|1]).
    rhs_ref[:, :cw] = feat_ref[...]

    @pl.when(first_of_block)
    def _():
        sums_ref[...] = jnp.zeros_like(sums_ref)
        xmax_ref[...] = jnp.full_like(xmax_ref, -jnp.inf)

    # One-hot cluster membership of this node tile within the current cluster block.
    # Padding nodes (-1) and nodes of other blocks never match the iota rows.
    local = cl_ref[...] - blk * tm                                       # (1, TN)
    mask = jax.lax.broadcasted_iota(jnp.int32, (tm, tn), 0) == local     # (TM, TN)

    # Fused scatter-sum: one lane-dense MXU matmul yields xsum, psum and counts.
    sums_ref[...] += jnp.dot(mask.astype(jnp.float32), rhs_ref[...],
                             preferred_element_type=jnp.float32,
                             precision=jax.lax.Precision.HIGHEST)

    # Channel-blocked scatter-max: temporaries bounded at (_CBLK, TM, TN) regardless
    # of C, reusing the single (TM, TN) mask.  The chunk count is a trace-time
    # constant, so this is equivalent to lax.fori_loop(..., unroll=True).
    for i in range(c_pad // _CBLK):
        off = i * _CBLK
        xt = xt_ref[off:off + _CBLK, :]                                  # (CB, TN)
        masked = jnp.where(mask[None, :, :], xt[:, None, :], -jnp.inf)   # (CB, TM, TN)
        xmax_ref[off:off + _CBLK, :] = jnp.maximum(
            xmax_ref[off:off + _CBLK, :], jnp.max(masked, axis=-1))


def _pool_scatter_sum_kernel(sb_ref, st_ref, cl_ref, feat_ref, sums_ref, rhs_ref):
    """Sum-only variant (aggr='mean'): the max path is skipped entirely."""
    s = pl.program_id(0)
    tm = sums_ref.shape[0]
    tn = cl_ref.shape[1]
    cw = feat_ref.shape[1]

    blk = sb_ref[s]
    first_of_block = jnp.logical_or(s == 0, sb_ref[jnp.maximum(s - 1, 0)] != blk)

    @pl.when(s == 0)
    def _():
        rhs_ref[...] = jnp.zeros_like(rhs_ref)

    rhs_ref[:, :cw] = feat_ref[...]

    @pl.when(first_of_block)
    def _():
        sums_ref[...] = jnp.zeros_like(sums_ref)

    local = cl_ref[...] - blk * tm
    mask = jax.lax.broadcasted_iota(jnp.int32, (tm, tn), 0) == local
    sums_ref[...] += jnp.dot(mask.astype(jnp.float32), rhs_ref[...],
                             preferred_element_type=jnp.float32,
                             precision=jax.lax.Precision.HIGHEST)


def _work_list(cl_sorted, tm, tn, nb):
    """Enumerate only the (cluster block, node tile) pairs that overlap."""
    blocks = np.arange(nb, dtype=np.int64)
    starts = np.searchsorted(cl_sorted, blocks * tm, side='left')
    ends = np.searchsorted(cl_sorted, (blocks + 1) * tm, side='left') - 1
    empty = ends < starts                       # can only happen with non-consecutive ids
    t_lo = np.where(empty, 0, starts // tn).astype(np.int64)
    t_hi = np.where(empty, 0, np.maximum(ends, 0) // tn).astype(np.int64)
    counts = t_hi - t_lo + 1
    step_block = np.repeat(blocks.astype(np.int32), counts)
    step_tile = np.concatenate(
        [np.arange(t_lo[m], t_hi[m] + 1, dtype=np.int32) for m in range(nb)])
    return step_block, step_tile


def pool_scatter(x, pos, cluster, n_clusters, *, aggr='max', tm=None, tn=None):
    """Per-cluster feature max/sum, position sum and node counts via Pallas.

    `cluster` must hold consecutive ids in [0, n_clusters) (as produced by the
    consecutive relabeling).  Returns (xmax_or_None, xsum, psum, cnt), each sliced
    to n_clusters rows.
    """
    assert aggr in ('max', 'mean')
    compute_max = (aggr == 'max')

    x = jnp.asarray(x, jnp.float32)
    pos = jnp.asarray(pos, jnp.float32)
    n, c = x.shape
    p = pos.shape[1]
    cw = c + p + 1                                       # [x | pos | 1]
    fw = _LANE * (-(-cw // _LANE))                       # lane-dense RHS / output width
    c_pad = _CBLK * (-(-c // _CBLK))

    dflt_tm, dflt_tn, vmem_cap = _tile_defaults()
    tm = dflt_tm if tm is None else tm
    tn = dflt_tn if tn is None else tn
    assert tn % _LANE == 0
    assert tm % (_LANE if compute_max else 8) == 0       # xmax out-block lane constraint

    n_pad = tn * (-(-n // tn))
    m_pad = tm * (-(-max(n_clusters, 1) // tm))
    nb = m_pad // tm

    # ---- host glue: sort nodes by cluster id, build the sparse work-list ----
    cl_np = np.asarray(cluster, np.int64)
    order = np.argsort(cl_np, kind='stable')
    cl_sorted = cl_np[order]
    step_block, step_tile = _work_list(cl_sorted, tm, tn, nb)
    n_steps = int(step_block.shape[0])

    order_j = jnp.asarray(order, jnp.int32)
    x_s = jnp.take(x, order_j, axis=0)
    pos_s = jnp.take(pos, order_j, axis=0)

    cl_pad = jnp.full((1, n_pad), -1, jnp.int32).at[0, :n].set(
        jnp.asarray(cl_sorted, jnp.int32))
    feat = jnp.zeros((n_pad, cw), jnp.float32)
    feat = feat.at[:n, :c].set(x_s).at[:n, c:c + p].set(pos_s).at[:n, c + p].set(1.0)

    sb = jnp.asarray(step_block, jnp.int32)
    st = jnp.asarray(step_tile, jnp.int32)

    # Explicit VMEM budget from the (channel-blocked) tile footprint, 2x headroom,
    # capped per generation (v7x has only 64 MiB per TensorCore).
    est = (2 * 4 * (tn + tn * cw + (c_pad * tn if compute_max else 0))     # inputs x2
           + 2 * 4 * (tm * fw + (c_pad * tm if compute_max else 0))        # outputs x2
           + 4 * tn * fw                                                   # RHS scratch
           + 3 * 4 * tm * tn                                               # mask temps
           + (3 * 4 * _CBLK * tm * tn if compute_max else 0))              # max temps
    vmem_limit = int(min(vmem_cap, max(32 << 20, 2 * est)))

    cparams = pltpu.CompilerParams(
        dimension_semantics=("arbitrary",),
        vmem_limit_bytes=vmem_limit)

    cl_spec = pl.BlockSpec((1, tn), lambda i, sb_r, st_r: (0, st_r[i]))
    feat_spec = pl.BlockSpec((tn, cw), lambda i, sb_r, st_r: (st_r[i], 0))
    sums_spec = pl.BlockSpec((tm, fw), lambda i, sb_r, st_r: (sb_r[i], 0))
    scratch = [pltpu.VMEM((tn, fw), jnp.float32)]

    if compute_max:
        xt = jnp.zeros((c_pad, n_pad), jnp.float32).at[:c, :n].set(x_s.T)
        sums, xmax = pl.pallas_call(
            _pool_scatter_max_kernel,
            out_shape=(jax.ShapeDtypeStruct((m_pad, fw), jnp.float32),
                       jax.ShapeDtypeStruct((c_pad, m_pad), jnp.float32)),
            grid_spec=pltpu.PrefetchScalarGridSpec(
                num_scalar_prefetch=2,
                grid=(n_steps,),
                in_specs=[cl_spec, feat_spec,
                          pl.BlockSpec((c_pad, tn), lambda i, sb_r, st_r: (0, st_r[i]))],
                out_specs=(sums_spec,
                           pl.BlockSpec((c_pad, tm), lambda i, sb_r, st_r: (0, sb_r[i]))),
                scratch_shapes=scratch),
            compiler_params=cparams,
        )(sb, st, cl_pad, feat, xt)
        xmax_out = xmax[:c, :].T[:n_clusters]
    else:
        sums = pl.pallas_call(
            _pool_scatter_sum_kernel,
            out_shape=jax.ShapeDtypeStruct((m_pad, fw), jnp.float32),
            grid_spec=pltpu.PrefetchScalarGridSpec(
                num_scalar_prefetch=2,
                grid=(n_steps,),
                in_specs=[cl_spec, feat_spec],
                out_specs=sums_spec,
                scratch_shapes=scratch),
            compiler_params=cparams,
        )(sb, st, cl_pad, feat)
        xmax_out = None

    xsum = sums[:n_clusters, :c]
    psum = sums[:n_clusters, c:c + p]
    cnt = sums[:n_clusters, c + p:c + p + 1]
    return xmax_out, xsum, psum, cnt


class PoolingPallas:
    """JAX/Pallas port of dagr.model.layers.pooling.Pooling (forward semantics)."""

    def __init__(self, size, width, height, batch_size, transform=None,
                 aggr='max', keep_temporal_ordering=False, self_loop=False,
                 in_channels=-1):
        assert aggr in ('mean', 'max')
        self.aggr = aggr
        # buffers (deterministic, no learnable parameters in this configuration)
        self.voxel_size = np.concatenate([np.asarray(size, np.float64), [1.0]])
        self.start = np.zeros(4, np.float64)
        self.end = np.array([0.9999999, 0.9999999, 0.9999999, batch_size - 1], np.float64)
        self.wh_inv = 1.0 / np.array([[width, height]], np.float64)
        self.wh_inv_dev = jnp.asarray(self.wh_inv, jnp.float32)
        self.transform = transform
        self.keep_temporal_ordering = keep_temporal_ordering
        self.self_loop = self_loop
        # TODO(synk): BatchNormData branch (in_channels > 0) not instantiated (default is -1).

    def _grid_cluster(self, pos4):
        # torch_cluster.grid_cluster: first dim is the fastest-varying stride.
        num_voxels = np.floor((self.end - self.start) / self.voxel_size) + 1.0
        coords = np.floor((pos4 - self.start) / self.voxel_size).astype(np.int64)
        strides = np.concatenate([[1.0], np.cumprod(num_voxels)[:-1]]).astype(np.int64)
        return (coords * strides).sum(axis=-1)

    def forward(self, data):
        x, pos = data['x'], data['pos']
        batch, edge_index = data['batch'], data['edge_index']
        n = int(x.shape[0])
        if n == 0:
            return data

        pos_np = np.asarray(pos, np.float64)
        batch_np = np.asarray(batch, np.int64)
        ei_np = np.asarray(edge_index, np.int64)

        # ---- voxel clustering + consecutive relabel (host glue: dynamic shapes) ----
        pos4 = np.concatenate([pos_np, batch_np[:, None].astype(np.float64)], axis=-1)
        raw = self._grid_cluster(pos4)
        unique, inv = np.unique(raw, return_inverse=True)        # sorted, like torch.unique
        n_clusters = int(unique.shape[0])
        perm = np.zeros(n_clusters, dtype=np.int64)
        perm[inv] = np.arange(n, dtype=np.int64)                  # scatter_: last write wins

        # ---- coarsen edges (dynamic-shape dedup stays on host) ----
        ei = inv[ei_np]
        if self.self_loop:
            if ei.shape[1] > 0:
                ei = np.unique(ei, axis=1)
        else:
            ei = ei[:, ei[0] != ei[1]]
            if ei.shape[1] > 0:
                ei = np.unique(ei, axis=1)

        new_batch = batch_np[perm]

        if self.keep_temporal_ordering:
            t_max = np.full(n_clusters, -np.inf)
            np.maximum.at(t_max, inv, pos_np[:, -1])
            if ei.shape[1] > 0:
                t_src, t_dst = t_max[ei[0]], t_max[ei[1]]
                ei = ei[:, t_dst > t_src]

        # ---- heavy segment reductions on TPU + device-side epilogue ----
        xmax, xsum, psum, cnt = pool_scatter(x, pos, inv, n_clusters, aggr=self.aggr)
        new_pos = psum / cnt                                      # pool_pos = scatter mean
        new_x = xmax if self.aggr == 'max' else xsum / cnt

        # round_to_pixel on the (x, y) coordinates — stays on device (no host sync).
        xy = jnp.floor((new_pos[:, :2] + 1e-5) / self.wh_inv_dev) * self.wh_inv_dev
        new_pos = jnp.concatenate([xy, new_pos[:, 2:]], axis=-1)

        new_data = {'x': new_x.astype(jnp.float32),
                    'pos': new_pos.astype(jnp.float32),
                    'batch': jnp.asarray(new_batch, jnp.int32),
                    'edge_index': jnp.asarray(ei, jnp.int32)}
        for k in ('height', 'width'):
            if k in data:
                new_data[k] = data[k]
        if self.transform is not None:
            if new_data['edge_index'].size > 0:
                new_data = self.transform(new_data)
            else:
                new_data['edge_attr'] = jnp.zeros((0, new_pos.shape[1]), jnp.float32)
        return new_data


if __name__ == "__main__":
    key = jax.random.PRNGKey(0)
    k1, k2, k3, k4 = jax.random.split(key, 4)
    N, C, E = 200, 4, 400
    W = H = 16
    B = 2

    x = jax.random.normal(k1, (N, C), jnp.float32)
    pos = jax.random.uniform(k2, (N, 3), jnp.float32, minval=0.0, maxval=0.999)
    batch = jnp.sort(jax.random.randint(k3, (N,), 0, B)).astype(jnp.int32)
    edge_index = jax.random.randint(k4, (2, E), 0, N).astype(jnp.int32)
    data = {'x': x, 'pos': pos, 'batch': batch, 'edge_index': edge_index,
            'height': H, 'width': W}

    pool = PoolingPallas(size=[0.25, 0.25, 1.0], width=W, height=H, batch_size=B,
                         transform=None, aggr='max')
    out = pool.forward(data)
    jax.block_until_ready(out['x'])

    # --- correctness check of the Pallas segment reductions against pure JAX ---
    pos4 = np.concatenate([np.asarray(pos, np.float64),
                           np.asarray(batch)[:, None].astype(np.float64)], axis=-1)
    raw = pool._grid_cluster(pos4)
    _, inv = np.unique(raw, return_inverse=True)
    M = int(inv.max()) + 1
    seg = jnp.asarray(inv, jnp.int32)

    xmax_k, xsum_k, psum_k, cnt_k = pool_scatter(x, pos, inv, M, aggr='max')
    ref_xmax = jax.ops.segment_max(x, seg, num_segments=M)
    ref_xsum = jax.ops.segment_sum(x, seg, num_segments=M)
    ref_psum = jax.ops.segment_sum(pos, seg, num_segments=M)
    ref_cnt = jax.ops.segment_sum(jnp.ones((N, 1), jnp.float32), seg, num_segments=M)

    np.testing.assert_allclose(np.asarray(xmax_k), np.asarray(ref_xmax), rtol=1e-5, atol=1e-5)
    np.testing.assert_allclose(np.asarray(xsum_k), np.asarray(ref_xsum), rtol=1e-5, atol=1e-5)
    np.testing.assert_allclose(np.asarray(psum_k), np.asarray(ref_psum), rtol=1e-5, atol=1e-5)
    np.testing.assert_allclose(np.asarray(cnt_k), np.asarray(ref_cnt), rtol=1e-5, atol=1e-5)
    np.testing.assert_allclose(np.asarray(out['x']), np.asarray(ref_xmax), rtol=1e-5, atol=1e-5)

    # mean-aggregation variant (sum-only kernel, no max path)
    _, xsum_m, psum_m, cnt_m = pool_scatter(x, pos, inv, M, aggr='mean')
    np.testing.assert_allclose(np.asarray(xsum_m), np.asarray(ref_xsum), rtol=1e-5, atol=1e-5)
    np.testing.assert_allclose(np.asarray(psum_m), np.asarray(ref_psum), rtol=1e-5, atol=1e-5)
    np.testing.assert_allclose(np.asarray(cnt_m), np.asarray(ref_cnt), rtol=1e-5, atol=1e-5)

    print("KERNEL_OK")
</pallas_src>

<mosaic_0001>
module attributes {stable_mosaic.version = 11 : i64} {
  func.func @_pool_scatter_max_kernel(%arg0: i32, %arg1: memref<1xi32, #tpu.memory_space<smem>>, %arg2: memref<1xi32, #tpu.memory_space<smem>>, %arg3: memref<1x256xi32, #tpu.memory_space<vmem>>, %arg4: memref<256x8xf32, #tpu.memory_space<vmem>>, %arg5: memref<8x256xf32, #tpu.memory_space<vmem>>, %arg6: memref<128x128xf32, #tpu.memory_space<vmem>>, %arg7: memref<8x128xf32, #tpu.memory_space<vmem>>, %arg8: memref<256x128xf32, #tpu.memory_space<vmem>>) attributes {dimension_semantics = [#tpu.dimension_semantics<arbitrary>], iteration_bounds = array<i64: 1>, scalar_prefetch = 2 : i64, scratch_operands = 1 : i64, tpu.core_type = #tpu.core_type<tc>, window_params = [{transform_indices = @transform_0, window_bounds = array<i64: 1, 256>}, {transform_indices = @transform_1, window_bounds = array<i64: 256, 8>}, {transform_indices = @transform_2, window_bounds = array<i64: 8, 256>}, {transform_indices = @transform_3, window_bounds = array<i64: 128, 128>}, {transform_indices = @transform_4, window_bounds = array<i64: 8, 128>}]} {
    %0 = arith.index_cast %arg0 : i32 to index
    %1 = memref.load %arg1[%0] : memref<1xi32, #tpu.memory_space<smem>>
    %c1_i32 = arith.constant 1 : i32
    %2 = arith.subi %arg0, %c1_i32 : i32
    %c0_i32 = arith.constant 0 : i32
    %3 = arith.maxsi %2, %c0_i32 : i32
    %4 = arith.index_cast %3 : i32 to index
    %5 = memref.load %arg1[%4] : memref<1xi32, #tpu.memory_space<smem>>
    %c0_i32_0 = arith.constant 0 : i32
    %6 = arith.cmpi eq, %arg0, %c0_i32_0 : i32
    %7 = arith.cmpi ne, %5, %1 : i32
    %8 = arith.ori %6, %7 : i1
    %c0_i32_1 = arith.constant 0 : i32
    %9 = arith.cmpi eq, %arg0, %c0_i32_1 : i32
    %10 = arith.extui %9 : i1 to i32
    %c0_i32_2 = arith.constant 0 : i32
    %11 = arith.cmpi ne, %10, %c0_i32_2 : i32
    scf.if %11 {
      %cst_23 = arith.constant 0.000000e+00 : f32
      %43 = vector.broadcast %cst_23 : f32 to vector<256x128xf32>
      %c0_24 = arith.constant 0 : index
      %c0_25 = arith.constant 0 : index
      %44 = vector.load %arg8[%c0_24, %c0_25] : memref<256x128xf32, #tpu.memory_space<vmem>>, vector<256x128xf32>
      tpu.vector_store %arg8[%c0_24, %c0_25], %43 {strides = array<i32>} : memref<256x128xf32, #tpu.memory_space<vmem>>, vector<256x128xf32>,
    } else {
    }
    %c0 = arith.constant 0 : index
    %c0_3 = arith.constant 0 : index
    %12 = vector.load %arg4[%c0, %c0_3] : memref<256x8xf32, #tpu.memory_space<vmem>>, vector<256x8xf32>
    %c0_4 = arith.constant 0 : index
    %c0_5 = arith.constant 0 : index
    %13 = vector.load %arg8[%c0_4, %c0_5] : memref<256x128xf32, #tpu.memory_space<vmem>>, vector<256x8xf32>
    tpu.vector_store %arg8[%c0_4, %c0_5], %12 {strides = array<i32>} : memref<256x128xf32, #tpu.memory_space<vmem>>, vector<256x8xf32>,
    %14 = arith.extui %8 : i1 to i32
    %c0_i32_6 = arith.constant 0 : i32
    %15 = arith.cmpi ne, %14, %c0_i32_6 : i32
    scf.if %15 {
      %cst_23 = arith.constant 0.000000e+00 : f32
      %43 = vector.broadcast %cst_23 : f32 to vector<128x128xf32>
      %c0_24 = arith.constant 0 : index
      %c0_25 = arith.constant 0 : index
      %44 = vector.load %arg6[%c0_24, %c0_25] : memref<128x128xf32, #tpu.memory_space<vmem>>, vector<128x128xf32>
      tpu.vector_store %arg6[%c0_24, %c0_25], %43 {strides = array<i32>} : memref<128x128xf32, #tpu.memory_space<vmem>>, vector<128x128xf32>,
      %cst_26 = arith.constant 0xFF800000 : f32
      %45 = vector.broadcast %cst_26 : f32 to vector<8x128xf32>
      %c0_27 = arith.constant 0 : index
      %c0_28 = arith.constant 0 : index
      %46 = vector.load %arg7[%c0_27, %c0_28] : memref<8x128xf32, #tpu.memory_space<vmem>>, vector<8x128xf32>
      tpu.vector_store %arg7[%c0_27, %c0_28], %45 {strides = array<i32>} : memref<8x128xf32, #tpu.memory_space<vmem>>, vector<8x128xf32>,
    } else {
    }
    %c0_7 = arith.constant 0 : index
    %c0_8 = arith.constant 0 : index
    %16 = vector.load %arg3[%c0_7, %c0_8] : memref<1x256xi32, #tpu.memory_space<vmem>>, vector<1x256xi32>
    %c128_i32 = arith.constant 128 : i32
    %17 = arith.muli %1, %c128_i32 : i32
    %18 = vector.broadcast %17 : i32 to vector<1x256xi32>
    %19 = arith.subi %16, %18 : vector<1x256xi32>
    %20 = tpu.iota {dimensions = array<i32: 0>} : vector<128x256xi32>
    %21 = vector.broadcast %19 : vector<1x256xi32> to vector<128x256xi32>
    %22 = arith.cmpi eq, %20, %21 : vector<128x256xi32>
    %c0_9 = arith.constant 0 : index
    %c0_10 = arith.constant 0 : index
    %23 = vector.load %arg6[%c0_9, %c0_10] : memref<128x128xf32, #tpu.memory_space<vmem>>, vector<128x128xf32>
    %24 = arith.extui %22 : vector<128x256xi1> to vector<128x256xi32>
    %25 = arith.sitofp %24 : vector<128x256xi32> to vector<128x256xf32>
    %c0_11 = arith.constant 0 : index
    %c0_12 = arith.constant 0 : index
    %26 = vector.load %arg8[%c0_11, %c0_12] : memref<256x128xf32, #tpu.memory_space<vmem>>, vector<256x128xf32>
    %cst = arith.constant dense<0.000000e+00> : vector<128x128xf32>
    %27 = tpu.matmul %25, %26, %cst {dimension_numbers = #tpu.dot_dimension_numbers<[1], [0], [0], [1], [0, 0, 1, 1], [], []>, precision = #tpu.contract_precision<fp32>} : vector<128x256xf32>, vector<256x128xf32>, vector<128x128xf32> -> vector<128x128xf32>
    %28 = arith.addf %23, %27 : vector<128x128xf32>
    %c0_13 = arith.constant 0 : index
    %c0_14 = arith.constant 0 : index
    %29 = vector.load %arg6[%c0_13, %c0_14] : memref<128x128xf32, #tpu.memory_space<vmem>>, vector<128x128xf32>
    tpu.vector_store %arg6[%c0_13, %c0_14], %28 {strides = array<i32>} : memref<128x128xf32, #tpu.memory_space<vmem>>, vector<128x128xf32>,
    %c0_15 = arith.constant 0 : index
    %c0_16 = arith.constant 0 : index
    %30 = vector.load %arg5[%c0_15, %c0_16] : memref<8x256xf32, #tpu.memory_space<vmem>>, vector<8x256xf32>
    %31 = vector.shape_cast %22 : vector<128x256xi1> to vector<1x128x256xi1>
    %32 = vector.shape_cast %30 : vector<8x256xf32> to vector<8x1x256xf32>
    %cst_17 = arith.constant 0xFF800000 : f32
    %33 = vector.shape_cast %31 : vector<1x128x256xi1> to vector<1x128x256xi1>
    %34 = vector.broadcast %33 : vector<1x128x256xi1> to vector<8x128x256xi1>
    %35 = vector.shape_cast %32 : vector<8x1x256xf32> to vector<8x1x256xf32>
    %36 = vector.broadcast %35 : vector<8x1x256xf32> to vector<8x128x256xf32>
    %37 = vector.broadcast %cst_17 : f32 to vector<8x128x256xf32>
    %38 = arith.select %34, %36, %37 : vector<8x128x256xi1>, vector<8x128x256xf32>
    %c0_18 = arith.constant 0 : index
    %c0_19 = arith.constant 0 : index
    %39 = vector.load %arg7[%c0_18, %c0_19] : memref<8x128xf32, #tpu.memory_space<vmem>>, vector<8x128xf32>
    %cst_20 = arith.constant dense<0xFF800000> : vector<8x128xf32>
    %40 = vector.multi_reduction <maximumf>, %38, %cst_20 [2] : vector<8x128x256xf32> to vector<8x128xf32>
    %41 = arith.maximumf %39, %40 : vector<8x128xf32>
    %c0_21 = arith.constant 0 : index
    %c0_22 = arith.constant 0 : index
    %42 = vector.load %arg7[%c0_21, %c0_22] : memref<8x128xf32, #tpu.memory_space<vmem>>, vector<8x128xf32>
    tpu.vector_store %arg7[%c0_21, %c0_22], %41 {strides = array<i32>} : memref<8x128xf32, #tpu.memory_space<vmem>>, vector<8x128xf32>,
    return
  }
  func.func @transform_0(%arg0: i32, %arg1: memref<1xi32, #tpu.memory_space<smem>>, %arg2: memref<1xi32, #tpu.memory_space<smem>>) -> (i32, i32) {
    %0 = arith.index_cast %arg0 : i32 to index
    %1 = memref.load %arg2[%0] : memref<1xi32, #tpu.memory_space<smem>>
    %c0_i32 = arith.constant 0 : i32
    %c0_i32_0 = arith.constant 0 : i32
    return %c0_i32, %1 : i32, i32
  }
  func.func @transform_1(%arg0: i32, %arg1: memref<1xi32, #tpu.memory_space<smem>>, %arg2: memref<1xi32, #tpu.memory_space<smem>>) -> (i32, i32) {
    %0 = arith.index_cast %arg0 : i32 to index
    %1 = memref.load %arg2[%0] : memref<1xi32, #tpu.memory_space<smem>>
    %c0_i32 = arith.constant 0 : i32
    %c0_i32_0 = arith.constant 0 : i32
    return %1, %c0_i32 : i32, i32
  }
  func.func @transform_2(%arg0: i32, %arg1: memref<1xi32, #tpu.memory_space<smem>>, %arg2: memref<1xi32, #tpu.memory_space<smem>>) -> (i32, i32) {
    %0 = arith.index_cast %arg0 : i32 to index
    %1 = memref.load %arg2[%0] : memref<1xi32, #tpu.memory_space<smem>>
    %c0_i32 = arith.constant 0 : i32
    %c0_i32_0 = arith.constant 0 : i32
    return %c0_i32, %1 : i32, i32
  }
  func.func @transform_3(%arg0: i32, %arg1: memref<1xi32, #tpu.memory_space<smem>>, %arg2: memref<1xi32, #tpu.memory_space<smem>>) -> (i32, i32) {
    %0 = arith.index_cast %arg0 : i32 to index
    %1 = memref.load %arg1[%0] : memref<1xi32, #tpu.memory_space<smem>>
    %c0_i32 = arith.constant 0 : i32
    %c0_i32_0 = arith.constant 0 : i32
    return %1, %c0_i32 : i32, i32
  }
  func.func @transform_4(%arg0: i32, %arg1: memref<1xi32, #tpu.memory_space<smem>>, %arg2: memref<1xi32, #tpu.memory_space<smem>>) -> (i32, i32) {
    %0 = arith.index_cast %arg0 : i32 to index
    %1 = memref.load %arg1[%0] : memref<1xi32, #tpu.memory_space<smem>>
    %c0_i32 = arith.constant 0 : i32
    %c0_i32_0 = arith.constant 0 : i32
    return %c0_i32, %1 : i32, i32
  }
}

</mosaic_0001>

<llo_original>
// kernel: tpu_custom_call.1
$region0: #{tpu_custom_call.1}
  #allocation0 [shape = 'u32[]', space=smem, size = 0x4, offset = 0x4, fixed_abs, tag = 'smem constant byte address 0x4 - core index']
  #allocation1 [shape = 'u32[144,128]{1,0:T(1,128)}', space=vmem, size = 0x12000, scoped, tag = 'internal scratch']
  #allocation2 [shape = 'f32[256,128]{1,0:T(8,128)}', space=vmem, size = 0x20000, scoped, tag = 'scratch operand']
  #allocation3 [shape = 's32[1]{0}', space=sflag, size = 0x4, scoped, tag = 'scoped memory for tpu_custom_call.1']
  #allocation4 [shape = 's32[1]{0:T(128)S(6)}', space=smem, size = 0x200, scoped, tag = 'prefetched SMEM operand 0']
  #allocation5 [shape = 's32[1]{0:T(128)S(6)}', space=smem, size = 0x200, scoped, tag = 'prefetched SMEM operand 1']
  %s0 = inlined_call_operand.<no memory space> [shape: s32[1], index: 0, kind: input, shape index: {}]
  %s1 = inlined_call_operand.<no memory space> [shape: s32[1], index: 1, kind: input, shape index: {}]
  %s2 = inlined_call_operand.vmem [shape: s32[1,256], index: 2, kind: input, shape index: {}]
  %s3 = inlined_call_operand.vmem [shape: f32[256,8], index: 3, kind: input, shape index: {}]
  %s4 = inlined_call_operand.vmem [shape: f32[8,256], index: 4, kind: input, shape index: {}]
  %s5 = inlined_call_operand.hbm [shape: f32[128,128], index: 5, kind: output, shape index: {0}]
  %s6 = inlined_call_operand.hbm [shape: f32[8,128], index: 6, kind: output, shape index: {1}]
  %7 = xla_tuple %s5, %s6
  %s8 = sld [smem:[#allocation0]]
  $region38: #{tpu_custom_call.1} parent=0
    _
  %s10 = ssub.s32 1, %s8
  %s11 = scalar_select 0, %s10, %s8
  %12 = sst [smem:[#allocation4]] %s0
  %13 = sst [smem:[#allocation5]] %s1
  $region1: #{tpu_custom_call.1} parent=0
    #allocation6 [shape = 'u8[65536]{0}', space=vmem, size = 0x10000, scoped, tag = 'output window, operand 0, single buffered']
    #allocation7 [shape = 's32[1]{0}', space=sflag, size = 0x4, scoped, tag = 'scoped memory for tpu_custom_call.1']
    #allocation8 [shape = 'u8[4096]{0}', space=vmem, size = 0x1000, scoped, tag = 'output window, operand 1, single buffered']
    #allocation9 [shape = 's32[1]{0}', space=sflag, size = 0x4, scoped, tag = 'scoped memory for tpu_custom_call.1']
    %14 = vsyncpa [#allocation7], 0
    %15 = vsyncpa [#allocation9], 0
    // Predicated region
    $region2: #{tpu_custom_call.1} parent=1 // pred_check
      _
    $region3: #{tpu_custom_call.1} parent=1 // pred_check_branch
      %17 = sbr.rel (0) target = $region5
    $region4: #{tpu_custom_call.1} parent=1 // pred_region
      %s18 = sld [smem:[#allocation5]]
      %s19 = smul.u32 2, %s18
      %p20 = scmp.lt.s32.totalorder %s19, 1
      %s21 = scalar_select %p20, %s19, 1
      %s22 = scalar_lea.vmem %s2, %s21
      %s23 = sld [smem:[#allocation5]]
      %s24 = smul.u32 2, %s23
    $region5: #{tpu_custom_call.1} parent=1 // pred_fallthru
      _
    // Predicated region
    $region6: #{tpu_custom_call.1} parent=1 // pred_check
      _
    $region7: #{tpu_custom_call.1} parent=1 // pred_check_branch
      %26 = sbr.rel (0) target = $region9
    $region8: #{tpu_custom_call.1} parent=1 // pred_region
      %s27 = sld [smem:[#allocation5]]
      %s28 = smul.u32 32, %s27
      %p29 = scmp.lt.s32.totalorder %s28, 31
      %s30 = scalar_select %p29, %s28, 31
      %s31 = smul.addr %s30, 8
      %s32 = scalar_lea.vmem %s3, %s31
      %s33 = sld [smem:[#allocation5]]
      %s34 = smul.u32 32, %s33
    $region9: #{tpu_custom_call.1} parent=1 // pred_fallthru
      _
    // Predicated region
    $region10: #{tpu_custom_call.1} parent=1 // pred_check
      _
    $region11: #{tpu_custom_call.1} parent=1 // pred_check_branch
      %36 = sbr.rel (0) target = $region13
    $region12: #{tpu_custom_call.1} parent=1 // pred_region
      %s37 = sld [smem:[#allocation5]]
      %s38 = smul.u32 2, %s37
      %p39 = scmp.lt.s32.totalorder %s38, 1
      %s40 = scalar_select %p39, %s38, 1
      %s41 = smul.addr %s40, 8
      %s42 = scalar_lea.vmem %s4, %s41
      %s43 = sld [smem:[#allocation5]]
      %s44 = smul.u32 2, %s43
    $region13: #{tpu_custom_call.1} parent=1 // pred_fallthru
      _
    %s45 = sld [smem:[#allocation5]]
    %s46 = smul.u32 2, %s45
    %p47 = scmp.lt.s32.totalorder %s46, 1
    %s48 = scalar_select %p47, %s46, 1
    %s49 = scalar_lea.vmem %s2, %s48
    %s50 = sld [smem:[#allocation5]]
    %s51 = smul.u32 32, %s50
    %p52 = scmp.lt.s32.totalorder %s51, 31
    %s53 = scalar_select %p52, %s51, 31
    %s54 = smul.addr %s53, 8
    %s55 = scalar_lea.vmem %s3, %s54
    %s56 = sld [smem:[#allocation5]]
    %s57 = smul.u32 2, %s56
    %p58 = scmp.lt.s32.totalorder %s57, 1
    %s59 = scalar_select %p58, %s57, 1
    %s60 = smul.addr %s59, 8
    %s61 = scalar_lea.vmem %s4, %s60
    %s62 = sld [smem:[#allocation5]]
    %s63 = smul.u32 2, %s62
    %p64 = scmp.lt.s32.totalorder %s63, 1
    %s65 = scalar_select %p64, %s63, 1
    %s66 = scalar_lea.vmem %s2, %s65
    %s67 = sld [smem:[#allocation5]]
    %s68 = smul.u32 2, %s67
    %s69 = sld [smem:[#allocation5]]
    %s70 = smul.u32 32, %s69
    %p71 = scmp.lt.s32.totalorder %s70, 31
    %s72 = scalar_select %p71, %s70, 31
    %s73 = smul.addr %s72, 8
    %s74 = scalar_lea.vmem %s3, %s73
    %s75 = sld [smem:[#allocation5]]
    %s76 = smul.u32 32, %s75
    %s77 = sld [smem:[#allocation5]]
    %s78 = smul.u32 2, %s77
    %p79 = scmp.lt.s32.totalorder %s78, 1
    %s80 = scalar_select %p79, %s78, 1
    %s81 = smul.addr %s80, 8
    %s82 = scalar_lea.vmem %s4, %s81
    %s83 = sld [smem:[#allocation5]]
    %s84 = smul.u32 2, %s83
    %s85 = sld [smem:[#allocation4]]
    %s86 = smul.u32 16, %s85
    %s87 = sld [smem:[#allocation4]]
    %s88 = sld [smem:[#allocation4]]
    %s89 = ssub.s32 0, 1
    %p90 = scmp.gt.s32.totalorder %s89, 0
    %s91 = scalar_select %p90, %s89, 0
    %s92 = sld [smem:[#allocation4 + %s91]]
    %p93 = scmp.eq.s32.totalorder 0, 0
    %p94 = scmp.ne.s32.totalorder %s92, %s88
    %p95 = por %p93, %p94
    // Predicated region
    $region14: #{tpu_custom_call.1} parent=1 // pred_check
      %p96 = pneg %p93
    $region15: #{tpu_custom_call.1} parent=1 // pred_check_branch
      %98 = sbr.rel (%p96) target = $region17
    $region16: #{tpu_custom_call.1} parent=1 // pred_region
      %99 = vst [vmem:[#allocation2] sm:$0xff] 0.0
      %100 = vst [vmem:[#allocation2 + $0x8] sm:$0xff] 0.0
      %101 = vst [vmem:[#allocation2 + $0x10] sm:$0xff] 0.0
      %102 = vst [vmem:[#allocation2 + $0x18] sm:$0xff] 0.0
      %103 = vst [vmem:[#allocation2 + $0x20] sm:$0xff] 0.0
      %104 = vst [vmem:[#allocation2 + $0x28] sm:$0xff] 0.0
      %105 = vst [vmem:[#allocation2 + $0x30] sm:$0xff] 0.0
      %106 = vst [vmem:[#allocation2 + $0x38] sm:$0xff] 0.0
      %107 = vst [vmem:[#allocation2 + $0x40] sm:$0xff] 0.0
      %108 = vst [vmem:[#allocation2 + $0x48] sm:$0xff] 0.0
      %109 = vst [vmem:[#allocation2 + $0x50] sm:$0xff] 0.0
      %110 = vst [vmem:[#allocation2 + $0x58] sm:$0xff] 0.0
      %111 = vst [vmem:[#allocation2 + $0x60] sm:$0xff] 0.0
      %112 = vst [vmem:[#allocation2 + $0x68] sm:$0xff] 0.0
      %113 = vst [vmem:[#allocation2 + $0x70] sm:$0xff] 0.0
      %114 = vst [vmem:[#allocation2 + $0x78] sm:$0xff] 0.0
      %115 = vst [vmem:[#allocation2 + $0x80] sm:$0xff] 0.0
      %116 = vst [vmem:[#allocation2 + $0x88] sm:$0xff] 0.0
      %117 = vst [vmem:[#allocation2 + $0x90] sm:$0xff] 0.0
      %118 = vst [vmem:[#allocation2 + $0x98] sm:$0xff] 0.0
      %119 = vst [vmem:[#allocation2 + $0xa0] sm:$0xff] 0.0
      %120 = vst [vmem:[#allocation2 + $0xa8] sm:$0xff] 0.0
      %121 = vst [vmem:[#allocation2 + $0xb0] sm:$0xff] 0.0
      %122 = vst [vmem:[#allocation2 + $0xb8] sm:$0xff] 0.0
      %123 = vst [vmem:[#allocation2 + $0xc0] sm:$0xff] 0.0
      %124 = vst [vmem:[#allocation2 + $0xc8] sm:$0xff] 0.0
      %125 = vst [vmem:[#allocation2 + $0xd0] sm:$0xff] 0.0
      %126 = vst [vmem:[#allocation2 + $0xd8] sm:$0xff] 0.0
      %127 = vst [vmem:[#allocation2 + $0xe0] sm:$0xff] 0.0
      %128 = vst [vmem:[#allocation2 + $0xe8] sm:$0xff] 0.0
      %129 = vst [vmem:[#allocation2 + $0xf0] sm:$0xff] 0.0
      %130 = vst [vmem:[#allocation2 + $0xf8] sm:$0xff] 0.0
    $region17: #{tpu_custom_call.1} parent=1 // pred_fallthru
      _
    %v131 = vld [vmem:[%s74] sm:$0xff]
    %v132 = vld [vmem:[%s74 + $0x8] sm:$0xff]
    %v133 = vld [vmem:[%s74 + $0x10] sm:$0xff]
    %v134 = vld [vmem:[%s74 + $0x18] sm:$0xff]
    %v135 = vld [vmem:[%s74 + $0x20] sm:$0xff]
    %v136 = vld [vmem:[%s74 + $0x28] sm:$0xff]
    %v137 = vld [vmem:[%s74 + $0x30] sm:$0xff]
    %v138 = vld [vmem:[%s74 + $0x38] sm:$0xff]
    %v139 = vld [vmem:[%s74 + $0x40] sm:$0xff]
    %v140 = vld [vmem:[%s74 + $0x48] sm:$0xff]
    %v141 = vld [vmem:[%s74 + $0x50] sm:$0xff]
    %v142 = vld [vmem:[%s74 + $0x58] sm:$0xff]
    %v143 = vld [vmem:[%s74 + $0x60] sm:$0xff]
    %v144 = vld [vmem:[%s74 + $0x68] sm:$0xff]
    %v145 = vld [vmem:[%s74 + $0x70] sm:$0xff]
    %v146 = vld [vmem:[%s74 + $0x78] sm:$0xff]
    %v147 = vld [vmem:[%s74 + $0x80] sm:$0xff]
    %v148 = vld [vmem:[%s74 + $0x88] sm:$0xff]
    %v149 = vld [vmem:[%s74 + $0x90] sm:$0xff]
    %v150 = vld [vmem:[%s74 + $0x98] sm:$0xff]
    %v151 = vld [vmem:[%s74 + $0xa0] sm:$0xff]
    %v152 = vld [vmem:[%s74 + $0xa8] sm:$0xff]
    %v153 = vld [vmem:[%s74 + $0xb0] sm:$0xff]
    %v154 = vld [vmem:[%s74 + $0xb8] sm:$0xff]
    %v155 = vld [vmem:[%s74 + $0xc0] sm:$0xff]
    %v156 = vld [vmem:[%s74 + $0xc8] sm:$0xff]
    %v157 = vld [vmem:[%s74 + $0xd0] sm:$0xff]
    %v158 = vld [vmem:[%s74 + $0xd8] sm:$0xff]
    %v159 = vld [vmem:[%s74 + $0xe0] sm:$0xff]
    %v160 = vld [vmem:[%s74 + $0xe8] sm:$0xff]
    %v161 = vld [vmem:[%s74 + $0xf0] sm:$0xff]
    %v162 = vld [vmem:[%s74 + $0xf8] sm:$0xff]
    %vm163 = vcmask 64512
    %164 = vst.msk [vmem:[#allocation2] sm:$0xff] %vm163, %v131
    %165 = vst.msk [vmem:[#allocation2 + $0x8] sm:$0xff] %vm163, %v132
    %166 = vst.msk [vmem:[#allocation2 + $0x10] sm:$0xff] %vm163, %v133
    %167 = vst.msk [vmem:[#allocation2 + $0x18] sm:$0xff] %vm163, %v134
    %168 = vst.msk [vmem:[#allocation2 + $0x20] sm:$0xff] %vm163, %v135
    %169 = vst.msk [vmem:[#allocation2 + $0x28] sm:$0xff] %vm163, %v136
    %170 = vst.msk [vmem:[#allocation2 + $0x30] sm:$0xff] %vm163, %v137
    %171 = vst.msk [vmem:[#allocation2 + $0x38] sm:$0xff] %vm163, %v138
    %172 = vst.msk [vmem:[#allocation2 + $0x40] sm:$0xff] %vm163, %v139
    %173 = vst.msk [vmem:[#allocation2 + $0x48] sm:$0xff] %vm163, %v140
    %174 = vst.msk [vmem:[#allocation2 + $0x50] sm:$0xff] %vm163, %v141
    %175 = vst.msk [vmem:[#allocation2 + $0x58] sm:$0xff] %vm163, %v142
    %176 = vst.msk [vmem:[#allocation2 + $0x60] sm:$0xff] %vm163, %v143
    %177 = vst.msk [vmem:[#allocation2 + $0x68] sm:$0xff] %vm163, %v144
    %178 = vst.msk [vmem:[#allocation2 + $0x70] sm:$0xff] %vm163, %v145
    %179 = vst.msk [vmem:[#allocation2 + $0x78] sm:$0xff] %vm163, %v146
    %180 = vst.msk [vmem:[#allocation2 + $0x80] sm:$0xff] %vm163, %v147
    %181 = vst.msk [vmem:[#allocation2 + $0x88] sm:$0xff] %vm163, %v148
    %182 = vst.msk [vmem:[#allocation2 + $0x90] sm:$0xff] %vm163, %v149
    %183 = vst.msk [vmem:[#allocation2 + $0x98] sm:$0xff] %vm163, %v150
    %184 = vst.msk [vmem:[#allocation2 + $0xa0] sm:$0xff] %vm163, %v151
    %185 = vst.msk [vmem:[#allocation2 + $0xa8] sm:$0xff] %vm163, %v152
    %186 = vst.msk [vmem:[#allocation2 + $0xb0] sm:$0xff] %vm163, %v153
    %187 = vst.msk [vmem:[#allocation2 + $0xb8] sm:$0xff] %vm163, %v154
    %188 = vst.msk [vmem:[#allocation2 + $0xc0] sm:$0xff] %vm163, %v155
    %189 = vst.msk [vmem:[#allocation2 + $0xc8] sm:$0xff] %vm163, %v156
    %190 = vst.msk [vmem:[#allocation2 + $0xd0] sm:$0xff] %vm163, %v157
    %191 = vst.msk [vmem:[#allocation2 + $0xd8] sm:$0xff] %vm163, %v158
    %192 = vst.msk [vmem:[#allocation2 + $0xe0] sm:$0xff] %vm163, %v159
    %193 = vst.msk [vmem:[#allocation2 + $0xe8] sm:$0xff] %vm163, %v160
    %194 = vst.msk [vmem:[#allocation2 + $0xf0] sm:$0xff] %vm163, %v161
    %195 = vst.msk [vmem:[#allocation2 + $0xf8] sm:$0xff] %vm163, %v162
    // Predicated region
    $region18: #{tpu_custom_call.1} parent=1 // pred_check
      %p196 = pneg %p95
    $region19: #{tpu_custom_call.1} parent=1 // pred_check_branch
      %198 = sbr.rel (%p196) target = $region21
    $region20: #{tpu_custom_call.1} parent=1 // pred_region
      %199 = vst [vmem:[#allocation6] sm:$0xff] 0.0
      %200 = vst [vmem:[#allocation6 + $0x8] sm:$0xff] 0.0
      %201 = vst [vmem:[#allocation6 + $0x10] sm:$0xff] 0.0
      %202 = vst [vmem:[#allocation6 + $0x18] sm:$0xff] 0.0
      %203 = vst [vmem:[#allocation6 + $0x20] sm:$0xff] 0.0
      %204 = vst [vmem:[#allocation6 + $0x28] sm:$0xff] 0.0
      %205 = vst [vmem:[#allocation6 + $0x30] sm:$0xff] 0.0
      %206 = vst [vmem:[#allocation6 + $0x38] sm:$0xff] 0.0
      %207 = vst [vmem:[#allocation6 + $0x40] sm:$0xff] 0.0
      %208 = vst [vmem:[#allocation6 + $0x48] sm:$0xff] 0.0
      %209 = vst [vmem:[#allocation6 + $0x50] sm:$0xff] 0.0
      %210 = vst [vmem:[#allocation6 + $0x58] sm:$0xff] 0.0
      %211 = vst [vmem:[#allocation6 + $0x60] sm:$0xff] 0.0
      %212 = vst [vmem:[#allocation6 + $0x68] sm:$0xff] 0.0
      %213 = vst [vmem:[#allocation6 + $0x70] sm:$0xff] 0.0
      %214 = vst [vmem:[#allocation6 + $0x78] sm:$0xff] 0.0
      %215 = vst [vmem:[#allocation8] sm:$0xff] -inf
    $region21: #{tpu_custom_call.1} parent=1 // pred_fallthru
      _
    %v216 = vld [vmem:[%s66] sm:$0x3]
    %s217 = smul.u32 %s88, 128
    %v218 = vstv %s217
    %v219 = vsub.s32 %v216, %v218
    %v220 = vlaneseq
    %v221 = vshrl.u32 %v220, 7
    %v222 = vadd.s32 %v221, 8
    %v223 = vadd.s32 %v221, 16
    %v224 = vadd.s32 %v221, 24
    %v225 = vadd.s32 %v221, 32
    %v226 = vadd.s32 %v221, 40
    %v227 = vadd.s32 %v221, 48
    %v228 = vadd.s32 %v221, 56
    %v229 = vadd.s32 %v221, 64
    %v230 = vadd.s32 %v221, 72
    %v231 = vadd.s32 %v221, 80
    %v232 = vadd.s32 %v221, 88
    %v233 = vadd.s32 %v221, 96
    %v234 = vadd.s32 %v221, 104
    %v235 = vadd.s32 %v221, 112
    %v236 = vadd.s32 %v221, 120
    %v237 = vlaneseq
    %v238 = vshrl.u32 %v237, 7
    %v239 = vsub.s32 0, %v238
    %v240 = vrot.slane %v219, %v239
    %v241 = vlaneseq
    %v242 = vshrl.u32 %v241, 7
    %v243 = vsub.s32 1, %v242
    %v244 = vrot.slane %v219, %v243
    %vm245 = vcmp.eq.s32.totalorder %v221, %v240
    %vm246 = vcmp.eq.s32.totalorder %v221, %v244
    %vm247 = vcmp.eq.s32.totalorder %v222, %v240
    %vm248 = vcmp.eq.s32.totalorder %v222, %v244
    %vm249 = vcmp.eq.s32.totalorder %v223, %v240
    %vm250 = vcmp.eq.s32.totalorder %v223, %v244
    %vm251 = vcmp.eq.s32.totalorder %v224, %v240
    %vm252 = vcmp.eq.s32.totalorder %v224, %v244
    %vm253 = vcmp.eq.s32.totalorder %v225, %v240
    %vm254 = vcmp.eq.s32.totalorder %v225, %v244
    %vm255 = vcmp.eq.s32.totalorder %v226, %v240
    %vm256 = vcmp.eq.s32.totalorder %v226, %v244
    %vm257 = vcmp.eq.s32.totalorder %v227, %v240
    %vm258 = vcmp.eq.s32.totalorder %v227, %v244
    %vm259 = vcmp.eq.s32.totalorder %v228, %v240
    %vm260 = vcmp.eq.s32.totalorder %v228, %v244
    %vm261 = vcmp.eq.s32.totalorder %v229, %v240
    %vm262 = vcmp.eq.s32.totalorder %v229, %v244
    %vm263 = vcmp.eq.s32.totalorder %v230, %v240
    %vm264 = vcmp.eq.s32.totalorder %v230, %v244
    %vm265 = vcmp.eq.s32.totalorder %v231, %v240
    %vm266 = vcmp.eq.s32.totalorder %v231, %v244
    %vm267 = vcmp.eq.s32.totalorder %v232, %v240
    %vm268 = vcmp.eq.s32.totalorder %v232, %v244
    %vm269 = vcmp.eq.s32.totalorder %v233, %v240
    %vm270 = vcmp.eq.s32.totalorder %v233, %v244
    %vm271 = vcmp.eq.s32.totalorder %v234, %v240
    %vm272 = vcmp.eq.s32.totalorder %v234, %v244
    %vm273 = vcmp.eq.s32.totalorder %v235, %v240
    %vm274 = vcmp.eq.s32.totalorder %v235, %v244
    %vm275 = vcmp.eq.s32.totalorder %v236, %v240
    %vm276 = vcmp.eq.s32.totalorder %v236, %v244
    %v277 = vld [vmem:[#allocation6] sm:$0xff]
    %v278 = vld [vmem:[#allocation6 + $0x8] sm:$0xff]
    %v279 = vld [vmem:[#allocation6 + $0x10] sm:$0xff]
    %v280 = vld [vmem:[#allocation6 + $0x18] sm:$0xff]
    %v281 = vld [vmem:[#allocation6 + $0x20] sm:$0xff]
    %v282 = vld [vmem:[#allocation6 + $0x28] sm:$0xff]
    %v283 = vld [vmem:[#allocation6 + $0x30] sm:$0xff]
    %v284 = vld [vmem:[#allocation6 + $0x38] sm:$0xff]
    %v285 = vld [vmem:[#allocation6 + $0x40] sm:$0xff]
    %v286 = vld [vmem:[#allocation6 + $0x48] sm:$0xff]
    %v287 = vld [vmem:[#allocation6 + $0x50] sm:$0xff]
    %v288 = vld [vmem:[#allocation6 + $0x58] sm:$0xff]
    %v289 = vld [vmem:[#allocation6 + $0x60] sm:$0xff]
    %v290 = vld [vmem:[#allocation6 + $0x68] sm:$0xff]
    %v291 = vld [vmem:[#allocation6 + $0x70] sm:$0xff]
    %v292 = vld [vmem:[#allocation6 + $0x78] sm:$0xff]
    %v293 = vsel %vm245, 1, 0
    %v294 = vsel %vm246, 1, 0
    %v295 = vsel %vm247, 1, 0
    %v296 = vsel %vm248, 1, 0
    %v297 = vsel %vm249, 1, 0
    %v298 = vsel %vm250, 1, 0
    %v299 = vsel %vm251, 1, 0
    %v300 = vsel %vm252, 1, 0
    %v301 = vsel %vm253, 1, 0
    %v302 = vsel %vm254, 1, 0
    %v303 = vsel %vm255, 1, 0
    %v304 = vsel %vm256, 1, 0
    %v305 = vsel %vm257, 1, 0
    %v306 = vsel %vm258, 1, 0
    %v307 = vsel %vm259, 1, 0
    %v308 = vsel %vm260, 1, 0
    %v309 = vsel %vm261, 1, 0
    %v310 = vsel %vm262, 1, 0
    %v311 = vsel %vm263, 1, 0
    %v312 = vsel %vm264, 1, 0
    %v313 = vsel %vm265, 1, 0
    %v314 = vsel %vm266, 1, 0
    %v315 = vsel %vm267, 1, 0
    %v316 = vsel %vm268, 1, 0
    %v317 = vsel %vm269, 1, 0
    %v318 = vsel %vm270, 1, 0
    %v319 = vsel %vm271, 1, 0
    %v320 = vsel %vm272, 1, 0
    %v321 = vsel %vm273, 1, 0
    %v322 = vsel %vm274, 1, 0
    %v323 = vsel %vm275, 1, 0
    %v324 = vsel %vm276, 1, 0
    %v325 = vcvt.s32.f32 %v293
    %v326 = vcvt.s32.f32 %v294
    %v327 = vcvt.s32.f32 %v295
    %v328 = vcvt.s32.f32 %v296
    %v329 = vcvt.s32.f32 %v297
    %v330 = vcvt.s32.f32 %v298
    %v331 = vcvt.s32.f32 %v299
    %v332 = vcvt.s32.f32 %v300
    %v333 = vcvt.s32.f32 %v301
    %v334 = vcvt.s32.f32 %v302
    %v335 = vcvt.s32.f32 %v303
    %v336 = vcvt.s32.f32 %v304
    %v337 = vcvt.s32.f32 %v305
    %v338 = vcvt.s32.f32 %v306
    %v339 = vcvt.s32.f32 %v307
    %v340 = vcvt.s32.f32 %v308
    %v341 = vcvt.s32.f32 %v309
    %v342 = vcvt.s32.f32 %v310
    %v343 = vcvt.s32.f32 %v311
    %v344 = vcvt.s32.f32 %v312
    %v345 = vcvt.s32.f32 %v313
    %v346 = vcvt.s32.f32 %v314
    %v347 = vcvt.s32.f32 %v315
    %v348 = vcvt.s32.f32 %v316
    %v349 = vcvt.s32.f32 %v317
    %v350 = vcvt.s32.f32 %v318
    %v351 = vcvt.s32.f32 %v319
    %v352 = vcvt.s32.f32 %v320
    %v353 = vcvt.s32.f32 %v321
    %v354 = vcvt.s32.f32 %v322
    %v355 = vcvt.s32.f32 %v323
    %v356 = vcvt.s32.f32 %v324
    %v357 = vld [vmem:[#allocation2] sm:$0xff]
    %v358 = vld [vmem:[#allocation2 + $0x8] sm:$0xff]
    %v359 = vld [vmem:[#allocation2 + $0x10] sm:$0xff]
    %v360 = vld [vmem:[#allocation2 + $0x18] sm:$0xff]
    %v361 = vld [vmem:[#allocation2 + $0x20] sm:$0xff]
    %v362 = vld [vmem:[#allocation2 + $0x28] sm:$0xff]
    %v363 = vld [vmem:[#allocation2 + $0x30] sm:$0xff]
    %v364 = vld [vmem:[#allocation2 + $0x38] sm:$0xff]
    %v365 = vld [vmem:[#allocation2 + $0x40] sm:$0xff]
    %v366 = vld [vmem:[#allocation2 + $0x48] sm:$0xff]
    %v367 = vld [vmem:[#allocation2 + $0x50] sm:$0xff]
    %v368 = vld [vmem:[#allocation2 + $0x58] sm:$0xff]
    %v369 = vld [vmem:[#allocation2 + $0x60] sm:$0xff]
    %v370 = vld [vmem:[#allocation2 + $0x68] sm:$0xff]
    %v371 = vld [vmem:[#allocation2 + $0x70] sm:$0xff]
    %v372 = vld [vmem:[#allocation2 + $0x78] sm:$0xff]
    %v373 = vld [vmem:[#allocation2 + $0x80] sm:$0xff]
    %v374 = vld [vmem:[#allocation2 + $0x88] sm:$0xff]
    %v375 = vld [vmem:[#allocation2 + $0x90] sm:$0xff]
    %v376 = vld [vmem:[#allocation2 + $0x98] sm:$0xff]
    %v377 = vld [vmem:[#allocation2 + $0xa0] sm:$0xff]
    %v378 = vld [vmem:[#allocation2 + $0xa8] sm:$0xff]
    %v379 = vld [vmem:[#allocation2 + $0xb0] sm:$0xff]
    %v380 = vld [vmem:[#allocation2 + $0xb8] sm:$0xff]
    %v381 = vld [vmem:[#allocation2 + $0xc0] sm:$0xff]
    %v382 = vld [vmem:[#allocation2 + $0xc8] sm:$0xff]
    %v383 = vld [vmem:[#allocation2 + $0xd0] sm:$0xff]
    %v384 = vld [vmem:[#allocation2 + $0xd8] sm:$0xff]
    %v385 = vld [vmem:[#allocation2 + $0xe0] sm:$0xff]
    %v386 = vld [vmem:[#allocation2 + $0xe8] sm:$0xff]
    %v387 = vld [vmem:[#allocation2 + $0xf0] sm:$0xff]
    %v388 = vld [vmem:[#allocation2 + $0xf8] sm:$0xff]
    %389 = vmatprep.subr.mxu0 0.0
    %v390 = vand.u32 %v357, 4294901760
    %391 = vmatpush1.msra.mxu0 %v390
    %392 = vmatprep.subr.mxu0 0.0
    %v393 = vand.u32 %v358, 4294901760
    %394 = vmatpush1.msra.mxu0 %v393
    %395 = vmatprep.subr.mxu0 0.0
    %v396 = vand.u32 %v359, 4294901760
    %397 = vmatpush1.msra.mxu0 %v396
    %398 = vmatprep.subr.mxu0 0.0
    %v399 = vand.u32 %v360, 4294901760
    %400 = vmatpush1.msra.mxu0 %v399
    %401 = vmatprep.subr.mxu0 0.0
    %v402 = vand.u32 %v361, 4294901760
    %403 = vmatpush1.msra.mxu0 %v402
    %404 = vmatprep.subr.mxu0 0.0
    %v405 = vand.u32 %v362, 4294901760
    %406 = vmatpush1.msra.mxu0 %v405
    %407 = vmatprep.subr.mxu0 0.0
    %v408 = vand.u32 %v363, 4294901760
    %409 = vmatpush1.msra.mxu0 %v408
    %410 = vmatprep.subr.mxu0 0.0
    %v411 = vand.u32 %v364, 4294901760
    %412 = vmatpush1.msra.mxu0 %v411
    %413 = vmatprep.subr.mxu0 0.0
    %v414 = vand.u32 %v365, 4294901760
    %415 = vmatpush1.msra.mxu0 %v414
    %416 = vmatprep.subr.mxu0 0.0
    %v417 = vand.u32 %v366, 4294901760
    %418 = vmatpush1.msra.mxu0 %v417
    %419 = vmatprep.subr.mxu0 0.0
    %v420 = vand.u32 %v367, 4294901760
    %421 = vmatpush1.msra.mxu0 %v420
    %422 = vmatprep.subr.mxu0 0.0
    %v423 = vand.u32 %v368, 4294901760
    %424 = vmatpush1.msra.mxu0 %v423
    %425 = vmatprep.subr.mxu0 0.0
    %v426 = vand.u32 %v369, 4294901760
    %427 = vmatpush1.msra.mxu0 %v426
    %428 = vmatprep.subr.mxu0 0.0
    %v429 = vand.u32 %v370, 4294901760
    %430 = vmatpush1.msra.mxu0 %v429
    %431 = vmatprep.subr.mxu0 0.0
    %v432 = vand.u32 %v371, 4294901760
    %433 = vmatpush1.msra.mxu0 %v432
    %434 = vmatprep.subr.mxu0 0.0
    %v435 = vand.u32 %v372, 4294901760
    %436 = vmatpush1.msra.mxu0 %v435
    %437 = vmatprep.subr.mxu0 0.0
    %v438 = vand.u32 %v373, 4294901760
    %439 = vmatpush1.msra.mxu0 %v438
    %440 = vmatprep.subr.mxu0 0.0
    %v441 = vand.u32 %v374, 4294901760
    %442 = vmatpush1.msra.mxu0 %v441
    %443 = vmatprep.subr.mxu0 0.0
    %v444 = vand.u32 %v375, 4294901760
    %445 = vmatpush1.msra.mxu0 %v444
    %446 = vmatprep.subr.mxu0 0.0
    %v447 = vand.u32 %v376, 4294901760
    %448 = vmatpush1.msra.mxu0 %v447
    %449 = vmatprep.subr.mxu0 0.0
    %v450 = vand.u32 %v377, 4294901760
    %451 = vmatpush1.msra.mxu0 %v450
    %452 = vmatprep.subr.mxu0 0.0
    %v453 = vand.u32 %v378, 4294901760
    %454 = vmatpush1.msra.mxu0 %v453
    %455 = vmatprep.subr.mxu0 0.0
    %v456 = vand.u32 %v379, 4294901760
    %457 = vmatpush1.msra.mxu0 %v456
    %458 = vmatprep.subr.mxu0 0.0
    %v459 = vand.u32 %v380, 4294901760
    %460 = vmatpush1.msra.mxu0 %v459
    %461 = vmatprep.subr.mxu0 0.0
    %v462 = vand.u32 %v381, 4294901760
    %463 = vmatpush1.msra.mxu0 %v462
    %464 = vmatprep.subr.mxu0 0.0
    %v465 = vand.u32 %v382, 4294901760
    %466 = vmatpush1.msra.mxu0 %v465
    %467 = vmatprep.subr.mxu0 0.0
    %v468 = vand.u32 %v383, 4294901760
    %469 = vmatpush1.msra.mxu0 %v468
    %470 = vmatprep.subr.mxu0 0.0
    %v471 = vand.u32 %v384, 4294901760
    %472 = vmatpush1.msra.mxu0 %v471
    %473 = vmatprep.subr.mxu0 0.0
    %v474 = vand.u32 %v385, 4294901760
    %475 = vmatpush1.msra.mxu0 %v474
    %476 = vmatprep.subr.mxu0 0.0
    %v477 = vand.u32 %v386, 4294901760
    %478 = vmatpush1.msra.mxu0 %v477
    %479 = vmatprep.subr.mxu0 0.0
    %v480 = vand.u32 %v387, 4294901760
    %481 = vmatpush1.msra.mxu0 %v480
    %482 = vmatprep.subr.mxu0 0.0
    %v483 = vand.u32 %v388, 4294901760
    %484 = vmatpush1.msra.mxu0 %v483
    %v485 = vand.u32 %v326, 4294901760
    %v486 = vsub.f32 %v326, %v485
    %v487 = vand.u32 %v486, 4294901760
    %v488 = vsub.f32 %v486, %v487
    %v489 = vand.u32 %v488, 4294901760
    %490 = vmatprep.mubr.f32.mxu0 %v489
    %v491 = vand.u32 %v325, 4294901760
    %v492 = vsub.f32 %v325, %v491
    %v493 = vand.u32 %v492, 4294901760
    %v494 = vsub.f32 %v492, %v493
    %v495 = vand.u32 %v494, 4294901760
    %496 = vmatmul.mubr.f32.gmra.mrb[0].mxu0 %v495
    %v497 = vpop.f32.mrb[0].mxu0
    %v498 = vadd.f32 0.0, %v497
    %v499 = vpop.f32.mrb[0].mxu0
    %v500 = vand.u32 %v328, 4294901760
    %v501 = vsub.f32 %v328, %v500
    %v502 = vand.u32 %v501, 4294901760
    %v503 = vsub.f32 %v501, %v502
    %v504 = vand.u32 %v503, 4294901760
    %505 = vmatprep.mubr.f32.mxu0 %v504
    %v506 = vand.u32 %v327, 4294901760
    %v507 = vsub.f32 %v327, %v506
    %v508 = vand.u32 %v507, 4294901760
    %v509 = vsub.f32 %v507, %v508
    %v510 = vand.u32 %v509, 4294901760
    %511 = vmatmul.mubr.f32.gmra.mrb[0].mxu0 %v510
    %v512 = vpop.f32.mrb[0].mxu0
    %v513 = vadd.f32 0.0, %v512
    %v514 = vpop.f32.mrb[0].mxu0
    %v515 = vand.u32 %v330, 4294901760
    %v516 = vsub.f32 %v330, %v515
    %v517 = vand.u32 %v516, 4294901760
    %v518 = vsub.f32 %v516, %v517
    %v519 = vand.u32 %v518, 4294901760
    %520 = vmatprep.mubr.f32.mxu0 %v519
    %v521 = vand.u32 %v329, 4294901760
    %v522 = vsub.f32 %v329, %v521
    %v523 = vand.u32 %v522, 4294901760
    %v524 = vsub.f32 %v522, %v523
    %v525 = vand.u32 %v524, 4294901760
    %526 = vmatmul.mubr.f32.gmra.mrb[0].mxu0 %v525
    %v527 = vpop.f32.mrb[0].mxu0
    %v528 = vadd.f32 0.0, %v527
    %v529 = vpop.f32.mrb[0].mxu0
    %v530 = vand.u32 %v332, 4294901760
    %v531 = vsub.f32 %v332, %v530
    %v532 = vand.u32 %v531, 4294901760
    %v533 = vsub.f32 %v531, %v532
    %v534 = vand.u32 %v533, 4294901760
    %535 = vmatprep.mubr.f32.mxu0 %v534
    %v536 = vand.u32 %v331, 4294901760
    %v537 = vsub.f32 %v331, %v536
    %v538 = vand.u32 %v537, 4294901760
    %v539 = vsub.f32 %v537, %v538
    %v540 = vand.u32 %v539, 4294901760
    %541 = vmatmul.mubr.f32.gmra.mrb[0].mxu0 %v540
    %v542 = vpop.f32.mrb[0].mxu0
    %v543 = vadd.f32 0.0, %v542
    %v544 = vpop.f32.mrb[0].mxu0
    %v545 = vand.u32 %v334, 4294901760
    %v546 = vsub.f32 %v334, %v545
    %v547 = vand.u32 %v546, 4294901760
    %v548 = vsub.f32 %v546, %v547
    %v549 = vand.u32 %v548, 4294901760
    %550 = vmatprep.mubr.f32.mxu0 %v549
    %v551 = vand.u32 %v333, 4294901760
    %v552 = vsub.f32 %v333, %v551
    %v553 = vand.u32 %v552, 4294901760
    %v554 = vsub.f32 %v552, %v553
    %v555 = vand.u32 %v554, 4294901760
    %556 = vmatmul.mubr.f32.gmra.mrb[0].mxu0 %v555
    %v557 = vpop.f32.mrb[0].mxu0
    %v558 = vadd.f32 0.0, %v557
    %v559 = vpop.f32.mrb[0].mxu0
    %v560 = vand.u32 %v336, 4294901760
    %v561 = vsub.f32 %v336, %v560
    %v562 = vand.u32 %v561, 4294901760
    %v563 = vsub.f32 %v561, %v562
    %v564 = vand.u32 %v563, 4294901760
    %565 = vmatprep.mubr.f32.mxu0 %v564
    %v566 = vand.u32 %v335, 4294901760
    %v567 = vsub.f32 %v335, %v566
    %v568 = vand.u32 %v567, 4294901760
    %v569 = vsub.f32 %v567, %v568
    %v570 = vand.u32 %v569, 4294901760
    %571 = vmatmul.mubr.f32.gmra.mrb[0].mxu0 %v570
    %v572 = vpop.f32.mrb[0].mxu0
    %v573 = vadd.f32 0.0, %v572
    %v574 = vpop.f32.mrb[0].mxu0
    %v575 = vand.u32 %v338, 4294901760
    %v576 = vsub.f32 %v338, %v575
    %v577 = vand.u32 %v576, 4294901760
    %v578 = vsub.f32 %v576, %v577
    %v579 = vand.u32 %v578, 4294901760
    %580 = vmatprep.mubr.f32.mxu0 %v579
    %v581 = vand.u32 %v337, 4294901760
    %v582 = vsub.f32 %v337, %v581
    %v583 = vand.u32 %v582, 4294901760
    %v584 = vsub.f32 %v582, %v583
    %v585 = vand.u32 %v584, 4294901760
    %586 = vmatmul.mubr.f32.gmra.mrb[0].mxu0 %v585
    %v587 = vpop.f32.mrb[0].mxu0
    %v588 = vadd.f32 0.0, %v587
    %v589 = vpop.f32.mrb[0].mxu0
    %v590 = vand.u32 %v340, 4294901760
    %v591 = vsub.f32 %v340, %v590
    %v592 = vand.u32 %v591, 4294901760
    %v593 = vsub.f32 %v591, %v592
    %v594 = vand.u32 %v593, 4294901760
    %595 = vmatprep.mubr.f32.mxu0 %v594
    %v596 = vand.u32 %v339, 4294901760
    %v597 = vsub.f32 %v339, %v596
    %v598 = vand.u32 %v597, 4294901760
    %v599 = vsub.f32 %v597, %v598
    %v600 = vand.u32 %v599, 4294901760
    %601 = vmatmul.mubr.f32.gmra.mrb[0].mxu0 %v600
    %v602 = vpop.f32.mrb[0].mxu0
    %v603 = vadd.f32 0.0, %v602
    %v604 = vpop.f32.mrb[0].mxu0
    %v605 = vand.u32 %v342, 4294901760
    %v606 = vsub.f32 %v342, %v605
    %v607 = vand.u32 %v606, 4294901760
    %v608 = vsub.f32 %v606, %v607
    %v609 = vand.u32 %v608, 4294901760
    %610 = vmatprep.mubr.f32.mxu0 %v609
    %v611 = vand.u32 %v341, 4294901760
    %v612 = vsub.f32 %v341, %v611
    %v613 = vand.u32 %v612, 4294901760
    %v614 = vsub.f32 %v612, %v613
    %v615 = vand.u32 %v614, 4294901760
    %616 = vmatmul.mubr.f32.gmra.mrb[0].mxu0 %v615
    %v617 = vpop.f32.mrb[0].mxu0
    %v618 = vadd.f32 0.0, %v617
    %v619 = vpop.f32.mrb[0].mxu0
    %v620 = vand.u32 %v344, 4294901760
    %v621 = vsub.f32 %v344, %v620
    %v622 = vand.u32 %v621, 4294901760
    %v623 = vsub.f32 %v621, %v622
    %v624 = vand.u32 %v623, 4294901760
    %625 = vmatprep.mubr.f32.mxu0 %v624
    %v626 = vand.u32 %v343, 4294901760
    %v627 = vsub.f32 %v343, %v626
    %v628 = vand.u32 %v627, 4294901760
    %v629 = vsub.f32 %v627, %v628
    %v630 = vand.u32 %v629, 4294901760
    %631 = vmatmul.mubr.f32.gmra.mrb[0].mxu0 %v630
    %v632 = vpop.f32.mrb[0].mxu0
    %v633 = vadd.f32 0.0, %v632
    %v634 = vpop.f32.mrb[0].mxu0
    %v635 = vand.u32 %v346, 4294901760
    %v636 = vsub.f32 %v346, %v635
    %v637 = vand.u32 %v636, 4294901760
    %v638 = vsub.f32 %v636, %v637
    %v639 = vand.u32 %v638, 4294901760
    %640 = vmatprep.mubr.f32.mxu0 %v639
    %v641 = vand.u32 %v345, 4294901760
    %v642 = vsub.f32 %v345, %v641
    %v643 = vand.u32 %v642, 4294901760
    %v644 = vsub.f32 %v642, %v643
    %v645 = vand.u32 %v644, 4294901760
    %646 = vmatmul.mubr.f32.gmra.mrb[0].mxu0 %v645
    %v647 = vpop.f32.mrb[0].mxu0
    %v648 = vadd.f32 0.0, %v647
    %v649 = vpop.f32.mrb[0].mxu0
    %v650 = vand.u32 %v348, 4294901760
    %v651 = vsub.f32 %v348, %v650
    %v652 = vand.u32 %v651, 4294901760
    %v653 = vsub.f32 %v651, %v652
    %v654 = vand.u32 %v653, 4294901760
    %655 = vmatprep.mubr.f32.mxu0 %v654
    %v656 = vand.u32 %v347, 4294901760
    %v657 = vsub.f32 %v347, %v656
    %v658 = vand.u32 %v657, 4294901760
    %v659 = vsub.f32 %v657, %v658
    %v660 = vand.u32 %v659, 4294901760
    %661 = vmatmul.mubr.f32.gmra.mrb[0].mxu0 %v660
    %v662 = vpop.f32.mrb[0].mxu0
    %v663 = vadd.f32 0.0, %v662
    %v664 = vpop.f32.mrb[0].mxu0
    %v665 = vand.u32 %v350, 4294901760
    %v666 = vsub.f32 %v350, %v665
    %v667 = vand.u32 %v666, 4294901760
    %v668 = vsub.f32 %v666, %v667
    %v669 = vand.u32 %v668, 4294901760
    %670 = vmatprep.mubr.f32.mxu0 %v669
    %v671 = vand.u32 %v349, 4294901760
    %v672 = vsub.f32 %v349, %v671
    %v673 = vand.u32 %v672, 4294901760
    %v674 = vsub.f32 %v672, %v673
    %v675 = vand.u32 %v674, 4294901760
    %676 = vmatmul.mubr.f32.gmra.mrb[0].mxu0 %v675
    %v677 = vpop.f32.mrb[0].mxu0
    %v678 = vadd.f32 0.0, %v677
    %v679 = vpop.f32.mrb[0].mxu0
    %v680 = vand.u32 %v352, 4294901760
    %v681 = vsub.f32 %v352, %v680
    %v682 = vand.u32 %v681, 4294901760
    %v683 = vsub.f32 %v681, %v682
    %v684 = vand.u32 %v683, 4294901760
    %685 = vmatprep.mubr.f32.mxu0 %v684
    %v686 = vand.u32 %v351, 4294901760
    %v687 = vsub.f32 %v351, %v686
    %v688 = vand.u32 %v687, 4294901760
    %v689 = vsub.f32 %v687, %v688
    %v690 = vand.u32 %v689, 4294901760
    %691 = vmatmul.mubr.f32.gmra.mrb[0].mxu0 %v690
    %v692 = vpop.f32.mrb[0].mxu0
    %v693 = vadd.f32 0.0, %v692
    %v694 = vpop.f32.mrb[0].mxu0
    %v695 = vand.u32 %v354, 4294901760
    %v696 = vsub.f32 %v354, %v695
    %v697 = vand.u32 %v696, 4294901760
    %v698 = vsub.f32 %v696, %v697
    %v699 = vand.u32 %v698, 4294901760
    %700 = vmatprep.mubr.f32.mxu0 %v699
    %v701 = vand.u32 %v353, 4294901760
    %v702 = vsub.f32 %v353, %v701
    %v703 = vand.u32 %v702, 4294901760
    %v704 = vsub.f32 %v702, %v703
    %v705 = vand.u32 %v704, 4294901760
    %706 = vmatmul.mubr.f32.gmra.mrb[0].mxu0 %v705
    %v707 = vpop.f32.mrb[0].mxu0
    %v708 = vadd.f32 0.0, %v707
    %v709 = vpop.f32.mrb[0].mxu0
    %v710 = vand.u32 %v356, 4294901760
    %v711 = vsub.f32 %v356, %v710
    %v712 = vand.u32 %v711, 4294901760
    %v713 = vsub.f32 %v711, %v712
    %v714 = vand.u32 %v713, 4294901760
    %715 = vmatprep.mubr.f32.mxu0 %v714
    %v716 = vand.u32 %v355, 4294901760
    %v717 = vsub.f32 %v355, %v716
    %v718 = vand.u32 %v717, 4294901760
    %v719 = vsub.f32 %v717, %v718
    %v720 = vand.u32 %v719, 4294901760
    %721 = vmatmul.mubr.f32.gmra.mrb[0].mxu0 %v720
    %v722 = vpop.f32.mrb[0].mxu0
    %v723 = vadd.f32 0.0, %v722
    %v724 = vpop.f32.mrb[0].mxu0
    %725 = vdwg.mxu0
    %726 = vmatprep.subr.mxu0 0.0
    %v727 = vand.u32 %v357, 4294901760
    %v728 = vsub.f32 %v357, %v727
    %v729 = vand.u32 %v728, 4294901760
    %v730 = vsub.f32 %v728, %v729
    %v731 = vand.u32 %v730, 4294901760
    %732 = vmatpush1.msra.mxu0 %v731
    %733 = vmatprep.subr.mxu0 0.0
    %v734 = vand.u32 %v358, 4294901760
    %v735 = vsub.f32 %v358, %v734
    %v736 = vand.u32 %v735, 4294901760
    %v737 = vsub.f32 %v735, %v736
    %v738 = vand.u32 %v737, 4294901760
    %739 = vmatpush1.msra.mxu0 %v738
    %740 = vmatprep.subr.mxu0 0.0
    %v741 = vand.u32 %v359, 4294901760
    %v742 = vsub.f32 %v359, %v741
    %v743 = vand.u32 %v742, 4294901760
    %v744 = vsub.f32 %v742, %v743
    %v745 = vand.u32 %v744, 4294901760
    %746 = vmatpush1.msra.mxu0 %v745
    %747 = vmatprep.subr.mxu0 0.0
    %v748 = vand.u32 %v360, 4294901760
    %v749 = vsub.f32 %v360, %v748
    %v750 = vand.u32 %v749, 4294901760
    %v751 = vsub.f32 %v749, %v750
    %v752 = vand.u32 %v751, 4294901760
    %753 = vmatpush1.msra.mxu0 %v752
    %754 = vmatprep.subr.mxu0 0.0
    %v755 = vand.u32 %v361, 4294901760
    %v756 = vsub.f32 %v361, %v755
    %v757 = vand.u32 %v756, 4294901760
    %v758 = vsub.f32 %v756, %v757
    %v759 = vand.u32 %v758, 4294901760
    %760 = vmatpush1.msra.mxu0 %v759
    %761 = vmatprep.subr.mxu0 0.0
    %v762 = vand.u32 %v362, 4294901760
    %v763 = vsub.f32 %v362, %v762
    %v764 = vand.u32 %v763, 4294901760
    %v765 = vsub.f32 %v763, %v764
    %v766 = vand.u32 %v765, 4294901760
    %767 = vmatpush1.msra.mxu0 %v766
    %768 = vmatprep.subr.mxu0 0.0
    %v769 = vand.u32 %v363, 4294901760
    %v770 = vsub.f32 %v363, %v769
    %v771 = vand.u32 %v770, 4294901760
    %v772 = vsub.f32 %v770, %v771
    %v773 = vand.u32 %v772, 4294901760
    %774 = vmatpush1.msra.mxu0 %v773
    %775 = vmatprep.subr.mxu0 0.0
    %v776 = vand.u32 %v364, 4294901760
    %v777 = vsub.f32 %v364, %v776
    %v778 = vand.u32 %v777, 4294901760
    %v779 = vsub.f32 %v777, %v778
    %v780 = vand.u32 %v779, 4294901760
    %781 = vmatpush1.msra.mxu0 %v780
    %782 = vmatprep.subr.mxu0 0.0
    %v783 = vand.u32 %v365, 4294901760
    %v784 = vsub.f32 %v365, %v783
    %v785 = vand.u32 %v784, 4294901760
    %v786 = vsub.f32 %v784, %v785
    %v787 = vand.u32 %v786, 4294901760
    %788 = vmatpush1.msra.mxu0 %v787
    %789 = vmatprep.subr.mxu0 0.0
    %v790 = vand.u32 %v366, 4294901760
    %v791 = vsub.f32 %v366, %v790
    %v792 = vand.u32 %v791, 4294901760
    %v793 = vsub.f32 %v791, %v792
    %v794 = vand.u32 %v793, 4294901760
    %795 = vmatpush1.msra.mxu0 %v794
    %796 = vmatprep.subr.mxu0 0.0
    %v797 = vand.u32 %v367, 4294901760
    %v798 = vsub.f32 %v367, %v797
    %v799 = vand.u32 %v798, 4294901760
    %v800 = vsub.f32 %v798, %v799
    %v801 = vand.u32 %v800, 4294901760
    %802 = vmatpush1.msra.mxu0 %v801
    %803 = vmatprep.subr.mxu0 0.0
    %v804 = vand.u32 %v368, 4294901760
    %v805 = vsub.f32 %v368, %v804
    %v806 = vand.u32 %v805, 4294901760
    %v807 = vsub.f32 %v805, %v806
    %v808 = vand.u32 %v807, 4294901760
    %809 = vmatpush1.msra.mxu0 %v808
    %810 = vmatprep.subr.mxu0 0.0
    %v811 = vand.u32 %v369, 4294901760
    %v812 = vsub.f32 %v369, %v811
    %v813 = vand.u32 %v812, 4294901760
    %v814 = vsub.f32 %v812, %v813
    %v815 = vand.u32 %v814, 4294901760
    %816 = vmatpush1.msra.mxu0 %v815
    %817 = vmatprep.subr.mxu0 0.0
    %v818 = vand.u32 %v370, 4294901760
    %v819 = vsub.f32 %v370, %v818
    %v820 = vand.u32 %v819, 4294901760
    %v821 = vsub.f32 %v819, %v820
    %v822 = vand.u32 %v821, 4294901760
    %823 = vmatpush1.msra.mxu0 %v822
    %824 = vmatprep.subr.mxu0 0.0
    %v825 = vand.u32 %v371, 4294901760
    %v826 = vsub.f32 %v371, %v825
    %v827 = vand.u32 %v826, 4294901760
    %v828 = vsub.f32 %v826, %v827
    %v829 = vand.u32 %v828, 4294901760
    %830 = vmatpush1.msra.mxu0 %v829
    %831 = vmatprep.subr.mxu0 0.0
    %v832 = vand.u32 %v372, 4294901760
    %v833 = vsub.f32 %v372, %v832
    %v834 = vand.u32 %v833, 4294901760
    %v835 = vsub.f32 %v833, %v834
    %v836 = vand.u32 %v835, 4294901760
    %837 = vmatpush1.msra.mxu0 %v836
    %838 = vmatprep.subr.mxu0 0.0
    %v839 = vand.u32 %v373, 4294901760
    %v840 = vsub.f32 %v373, %v839
    %v841 = vand.u32 %v840, 4294901760
    %v842 = vsub.f32 %v840, %v841
    %v843 = vand.u32 %v842, 4294901760
    %844 = vmatpush1.msra.mxu0 %v843
    %845 = vmatprep.subr.mxu0 0.0
    %v846 = vand.u32 %v374, 4294901760
    %v847 = vsub.f32 %v374, %v846
    %v848 = vand.u32 %v847, 4294901760
    %v849 = vsub.f32 %v847, %v848
    %v850 = vand.u32 %v849, 4294901760
    %851 = vmatpush1.msra.mxu0 %v850
    %852 = vmatprep.subr.mxu0 0.0
    %v853 = vand.u32 %v375, 4294901760
    %v854 = vsub.f32 %v375, %v853
    %v855 = vand.u32 %v854, 4294901760
    %v856 = vsub.f32 %v854, %v855
    %v857 = vand.u32 %v856, 4294901760
    %858 = vmatpush1.msra.mxu0 %v857
    %859 = vmatprep.subr.mxu0 0.0
    %v860 = vand.u32 %v376, 4294901760
    %v861 = vsub.f32 %v376, %v860
    %v862 = vand.u32 %v861, 4294901760
    %v863 = vsub.f32 %v861, %v862
    %v864 = vand.u32 %v863, 4294901760
    %865 = vmatpush1.msra.mxu0 %v864
    %866 = vmatprep.subr.mxu0 0.0
    %v867 = vand.u32 %v377, 4294901760
    %v868 = vsub.f32 %v377, %v867
    %v869 = vand.u32 %v868, 4294901760
    %v870 = vsub.f32 %v868, %v869
    %v871 = vand.u32 %v870, 4294901760
    %872 = vmatpush1.msra.mxu0 %v871
    %873 = vmatprep.subr.mxu0 0.0
    %v874 = vand.u32 %v378, 4294901760
    %v875 = vsub.f32 %v378, %v874
    %v876 = vand.u32 %v875, 4294901760
    %v877 = vsub.f32 %v875, %v876
    %v878 = vand.u32 %v877, 4294901760
    %879 = vmatpush1.msra.mxu0 %v878
    %880 = vmatprep.subr.mxu0 0.0
    %v881 = vand.u32 %v379, 4294901760
    %v882 = vsub.f32 %v379, %v881
    %v883 = vand.u32 %v882, 4294901760
    %v884 = vsub.f32 %v882, %v883
    %v885 = vand.u32 %v884, 4294901760
    %886 = vmatpush1.msra.mxu0 %v885
    %887 = vmatprep.subr.mxu0 0.0
    %v888 = vand.u32 %v380, 4294901760
    %v889 = vsub.f32 %v380, %v888
    %v890 = vand.u32 %v889, 4294901760
    %v891 = vsub.f32 %v889, %v890
    %v892 = vand.u32 %v891, 4294901760
    %893 = vmatpush1.msra.mxu0 %v892
    %894 = vmatprep.subr.mxu0 0.0
    %v895 = vand.u32 %v381, 4294901760
    %v896 = vsub.f32 %v381, %v895
    %v897 = vand.u32 %v896, 4294901760
    %v898 = vsub.f32 %v896, %v897
    %v899 = vand.u32 %v898, 4294901760
    %900 = vmatpush1.msra.mxu0 %v899
    %901 = vmatprep.subr.mxu0 0.0
    %v902 = vand.u32 %v382, 4294901760
    %v903 = vsub.f32 %v382, %v902
    %v904 = vand.u32 %v903, 4294901760
    %v905 = vsub.f32 %v903, %v904
    %v906 = vand.u32 %v905, 4294901760
    %907 = vmatpush1.msra.mxu0 %v906
    %908 = vmatprep.subr.mxu0 0.0
    %v909 = vand.u32 %v383, 4294901760
    %v910 = vsub.f32 %v383, %v909
    %v911 = vand.u32 %v910, 4294901760
    %v912 = vsub.f32 %v910, %v911
    %v913 = vand.u32 %v912, 4294901760
    %914 = vmatpush1.msra.mxu0 %v913
    %915 = vmatprep.subr.mxu0 0.0
    %v916 = vand.u32 %v384, 4294901760
    %v917 = vsub.f32 %v384, %v916
    %v918 = vand.u32 %v917, 4294901760
    %v919 = vsub.f32 %v917, %v918
    %v920 = vand.u32 %v919, 4294901760
    %921 = vmatpush1.msra.mxu0 %v920
    %922 = vmatprep.subr.mxu0 0.0
    %v923 = vand.u32 %v385, 4294901760
    %v924 = vsub.f32 %v385, %v923
    %v925 = vand.u32 %v924, 4294901760
    %v926 = vsub.f32 %v924, %v925
    %v927 = vand.u32 %v926, 4294901760
    %928 = vmatpush1.msra.mxu0 %v927
    %929 = vmatprep.subr.mxu0 0.0
    %v930 = vand.u32 %v386, 4294901760
    %v931 = vsub.f32 %v386, %v930
    %v932 = vand.u32 %v931, 4294901760
    %v933 = vsub.f32 %v931, %v932
    %v934 = vand.u32 %v933, 4294901760
    %935 = vmatpush1.msra.mxu0 %v934
    %936 = vmatprep.subr.mxu0 0.0
    %v937 = vand.u32 %v387, 4294901760
    %v938 = vsub.f32 %v387, %v937
    %v939 = vand.u32 %v938, 4294901760
    %v940 = vsub.f32 %v938, %v939
    %v941 = vand.u32 %v940, 4294901760
    %942 = vmatpush1.msra.mxu0 %v941
    %943 = vmatprep.subr.mxu0 0.0
    %v944 = vand.u32 %v388, 4294901760
    %v945 = vsub.f32 %v388, %v944
    %v946 = vand.u32 %v945, 4294901760
    %v947 = vsub.f32 %v945, %v946
    %v948 = vand.u32 %v947, 4294901760
    %949 = vmatpush1.msra.mxu0 %v948
    %v950 = vand.u32 %v326, 4294901760
    %951 = vmatprep.mubr.f32.mxu0 %v950
    %v952 = vand.u32 %v325, 4294901760
    %953 = vmatmul.mubr.f32.gmra.mrb[0].mxu0 %v952
    %v954 = vpop.f32.mrb[0].mxu0
    %v955 = vadd.f32 %v498, %v954
    %v956 = vpop.f32.mrb[0].mxu0
    %v957 = vand.u32 %v328, 4294901760
    %958 = vmatprep.mubr.f32.mxu0 %v957
    %v959 = vand.u32 %v327, 4294901760
    %960 = vmatmul.mubr.f32.gmra.mrb[0].mxu0 %v959
    %v961 = vpop.f32.mrb[0].mxu0
    %v962 = vadd.f32 %v513, %v961
    %v963 = vpop.f32.mrb[0].mxu0
    %v964 = vand.u32 %v330, 4294901760
    %965 = vmatprep.mubr.f32.mxu0 %v964
    %v966 = vand.u32 %v329, 4294901760
    %967 = vmatmul.mubr.f32.gmra.mrb[0].mxu0 %v966
    %v968 = vpop.f32.mrb[0].mxu0
    %v969 = vadd.f32 %v528, %v968
    %v970 = vpop.f32.mrb[0].mxu0
    %v971 = vand.u32 %v332, 4294901760
    %972 = vmatprep.mubr.f32.mxu0 %v971
    %v973 = vand.u32 %v331, 4294901760
    %974 = vmatmul.mubr.f32.gmra.mrb[0].mxu0 %v973
    %v975 = vpop.f32.mrb[0].mxu0
    %v976 = vadd.f32 %v543, %v975
    %v977 = vpop.f32.mrb[0].mxu0
    %v978 = vand.u32 %v334, 4294901760
    %979 = vmatprep.mubr.f32.mxu0 %v978
    %v980 = vand.u32 %v333, 4294901760
    %981 = vmatmul.mubr.f32.gmra.mrb[0].mxu0 %v980
    %v982 = vpop.f32.mrb[0].mxu0
    %v983 = vadd.f32 %v558, %v982
    %v984 = vpop.f32.mrb[0].mxu0
    %v985 = vand.u32 %v336, 4294901760
    %986 = vmatprep.mubr.f32.mxu0 %v985
    %v987 = vand.u32 %v335, 4294901760
    %988 = vmatmul.mubr.f32.gmra.mrb[0].mxu0 %v987
    %v989 = vpop.f32.mrb[0].mxu0
    %v990 = vadd.f32 %v573, %v989
    %v991 = vpop.f32.mrb[0].mxu0
    %v992 = vand.u32 %v338, 4294901760
    %993 = vmatprep.mubr.f32.mxu0 %v992
    %v994 = vand.u32 %v337, 4294901760
    %995 = vmatmul.mubr.f32.gmra.mrb[0].mxu0 %v994
    %v996 = vpop.f32.mrb[0].mxu0
    %v997 = vadd.f32 %v588, %v996
    %v998 = vpop.f32.mrb[0].mxu0
    %v999 = vand.u32 %v340, 4294901760
    %1000 = vmatprep.mubr.f32.mxu0 %v999
    %v1001 = vand.u32 %v339, 4294901760
    %1002 = vmatmul.mubr.f32.gmra.mrb[0].mxu0 %v1001
    %v1003 = vpop.f32.mrb[0].mxu0
    %v1004 = vadd.f32 %v603, %v1003
    %v1005 = vpop.f32.mrb[0].mxu0
    %v1006 = vand.u32 %v342, 4294901760
    %1007 = vmatprep.mubr.f32.mxu0 %v1006
    %v1008 = vand.u32 %v341, 4294901760
    %1009 = vmatmul.mubr.f32.gmra.mrb[0].mxu0 %v1008
    %v1010 = vpop.f32.mrb[0].mxu0
    %v1011 = vadd.f32 %v618, %v1010
    %v1012 = vpop.f32.mrb[0].mxu0
    %v1013 = vand.u32 %v344, 4294901760
    %1014 = vmatprep.mubr.f32.mxu0 %v1013
    %v1015 = vand.u32 %v343, 4294901760
    %1016 = vmatmul.mubr.f32.gmra.mrb[0].mxu0 %v1015
    %v1017 = vpop.f32.mrb[0].mxu0
    %v1018 = vadd.f32 %v633, %v1017
    %v1019 = vpop.f32.mrb[0].mxu0
    %v1020 = vand.u32 %v346, 4294901760
    %1021 = vmatprep.mubr.f32.mxu0 %v1020
    %v1022 = vand.u32 %v345, 4294901760
    %1023 = vmatmul.mubr.f32.gmra.mrb[0].mxu0 %v1022
    %v1024 = vpop.f32.mrb[0].mxu0
    %v1025 = vadd.f32 %v648, %v1024
    %v1026 = vpop.f32.mrb[0].mxu0
    %v1027 = vand.u32 %v348, 4294901760
    %1028 = vmatprep.mubr.f32.mxu0 %v1027
    %v1029 = vand.u32 %v347, 4294901760
    %1030 = vmatmul.mubr.f32.gmra.mrb[0].mxu0 %v1029
    %v1031 = vpop.f32.mrb[0].mxu0
    %v1032 = vadd.f32 %v663, %v1031
    %v1033 = vpop.f32.mrb[0].mxu0
    %v1034 = vand.u32 %v350, 4294901760
    %1035 = vmatprep.mubr.f32.mxu0 %v1034
    %v1036 = vand.u32 %v349, 4294901760
    %1037 = vmatmul.mubr.f32.gmra.mrb[0].mxu0 %v1036
    %v1038 = vpop.f32.mrb[0].mxu0
    %v1039 = vadd.f32 %v678, %v1038
    %v1040 = vpop.f32.mrb[0].mxu0
    %v1041 = vand.u32 %v352, 4294901760
    %1042 = vmatprep.mubr.f32.mxu0 %v1041
    %v1043 = vand.u32 %v351, 4294901760
    %1044 = vmatmul.mubr.f32.gmra.mrb[0].mxu0 %v1043
    %v1045 = vpop.f32.mrb[0].mxu0
    %v1046 = vadd.f32 %v693, %v1045
    %v1047 = vpop.f32.mrb[0].mxu0
    %v1048 = vand.u32 %v354, 4294901760
    %1049 = vmatprep.mubr.f32.mxu0 %v1048
    %v1050 = vand.u32 %v353, 4294901760
    %1051 = vmatmul.mubr.f32.gmra.mrb[0].mxu0 %v1050
    %v1052 = vpop.f32.mrb[0].mxu0
    %v1053 = vadd.f32 %v708, %v1052
    %v1054 = vpop.f32.mrb[0].mxu0
    %v1055 = vand.u32 %v356, 4294901760
    %1056 = vmatprep.mubr.f32.mxu0 %v1055
    %v1057 = vand.u32 %v355, 4294901760
    %1058 = vmatmul.mubr.f32.gmra.mrb[0].mxu0 %v1057
    %v1059 = vpop.f32.mrb[0].mxu0
    %v1060 = vadd.f32 %v723, %v1059
    %v1061 = vpop.f32.mrb[0].mxu0
    %1062 = vdwg.mxu0
    %1063 = vmatprep.subr.mxu0 0.0
    %v1064 = vand.u32 %v357, 4294901760
    %v1065 = vsub.f32 %v357, %v1064
    %1066 = vmatpush1.msra.mxu0 %v1065
    %1067 = vmatprep.subr.mxu0 0.0
    %v1068 = vand.u32 %v358, 4294901760
    %v1069 = vsub.f32 %v358, %v1068
    %1070 = vmatpush1.msra.mxu0 %v1069
    %1071 = vmatprep.subr.mxu0 0.0
    %v1072 = vand.u32 %v359, 4294901760
    %v1073 = vsub.f32 %v359, %v1072
    %1074 = vmatpush1.msra.mxu0 %v1073
    %1075 = vmatprep.subr.mxu0 0.0
    %v1076 = vand.u32 %v360, 4294901760
    %v1077 = vsub.f32 %v360, %v1076
    %1078 = vmatpush1.msra.mxu0 %v1077
    %1079 = vmatprep.subr.mxu0 0.0
    %v1080 = vand.u32 %v361, 4294901760
    %v1081 = vsub.f32 %v361, %v1080
    %1082 = vmatpush1.msra.mxu0 %v1081
    %1083 = vmatprep.subr.mxu0 0.0
    %v1084 = vand.u32 %v362, 4294901760
    %v1085 = vsub.f32 %v362, %v1084
    %1086 = vmatpush1.msra.mxu0 %v1085
    %1087 = vmatprep.subr.mxu0 0.0
    %v1088 = vand.u32 %v363, 4294901760
    %v1089 = vsub.f32 %v363, %v1088
    %1090 = vmatpush1.msra.mxu0 %v1089
    %1091 = vmatprep.subr.mxu0 0.0
    %v1092 = vand.u32 %v364, 4294901760
    %v1093 = vsub.f32 %v364, %v1092
    %1094 = vmatpush1.msra.mxu0 %v1093
    %1095 = vmatprep.subr.mxu0 0.0
    %v1096 = vand.u32 %v365, 4294901760
    %v1097 = vsub.f32 %v365, %v1096
    %1098 = vmatpush1.msra.mxu0 %v1097
    %1099 = vmatprep.subr.mxu0 0.0
    %v1100 = vand.u32 %v366, 4294901760
    %v1101 = vsub.f32 %v366, %v1100
    %1102 = vmatpush1.msra.mxu0 %v1101
    %1103 = vmatprep.subr.mxu0 0.0
    %v1104 = vand.u32 %v367, 4294901760
    %v1105 = vsub.f32 %v367, %v1104
    %1106 = vmatpush1.msra.mxu0 %v1105
    %1107 = vmatprep.subr.mxu0 0.0
    %v1108 = vand.u32 %v368, 4294901760
    %v1109 = vsub.f32 %v368, %v1108
    %1110 = vmatpush1.msra.mxu0 %v1109
    %1111 = vmatprep.subr.mxu0 0.0
    %v1112 = vand.u32 %v369, 4294901760
    %v1113 = vsub.f32 %v369, %v1112
    %1114 = vmatpush1.msra.mxu0 %v1113
    %1115 = vmatprep.subr.mxu0 0.0
    %v1116 = vand.u32 %v370, 4294901760
    %v1117 = vsub.f32 %v370, %v1116
    %1118 = vmatpush1.msra.mxu0 %v1117
    %1119 = vmatprep.subr.mxu0 0.0
    %v1120 = vand.u32 %v371, 4294901760
    %v1121 = vsub.f32 %v371, %v1120
    %1122 = vmatpush1.msra.mxu0 %v1121
    %1123 = vmatprep.subr.mxu0 0.0
    %v1124 = vand.u32 %v372, 4294901760
    %v1125 = vsub.f32 %v372, %v1124
    %1126 = vmatpush1.msra.mxu0 %v1125
    %1127 = vmatprep.subr.mxu0 0.0
    %v1128 = vand.u32 %v373, 4294901760
    %v1129 = vsub.f32 %v373, %v1128
    %1130 = vmatpush1.msra.mxu0 %v1129
    %1131 = vmatprep.subr.mxu0 0.0
    %v1132 = vand.u32 %v374, 4294901760
    %v1133 = vsub.f32 %v374, %v1132
    %1134 = vmatpush1.msra.mxu0 %v1133
    %1135 = vmatprep.subr.mxu0 0.0
    %v1136 = vand.u32 %v375, 4294901760
    %v1137 = vsub.f32 %v375, %v1136
    %1138 = vmatpush1.msra.mxu0 %v1137
    %1139 = vmatprep.subr.mxu0 0.0
    %v1140 = vand.u32 %v376, 4294901760
    %v1141 = vsub.f32 %v376, %v1140
    %1142 = vmatpush1.msra.mxu0 %v1141
    %1143 = vmatprep.subr.mxu0 0.0
    %v1144 = vand.u32 %v377, 4294901760
    %v1145 = vsub.f32 %v377, %v1144
    %1146 = vmatpush1.msra.mxu0 %v1145
    %1147 = vmatprep.subr.mxu0 0.0
    %v1148 = vand.u32 %v378, 4294901760
    %v1149 = vsub.f32 %v378, %v1148
    %1150 = vmatpush1.msra.mxu0 %v1149
    %1151 = vmatprep.subr.mxu0 0.0
    %v1152 = vand.u32 %v379, 4294901760
    %v1153 = vsub.f32 %v379, %v1152
    %1154 = vmatpush1.msra.mxu0 %v1153
    %1155 = vmatprep.subr.mxu0 0.0
    %v1156 = vand.u32 %v380, 4294901760
    %v1157 = vsub.f32 %v380, %v1156
    %1158 = vmatpush1.msra.mxu0 %v1157
    %1159 = vmatprep.subr.mxu0 0.0
    %v1160 = vand.u32 %v381, 4294901760
    %v1161 = vsub.f32 %v381, %v1160
    %1162 = vmatpush1.msra.mxu0 %v1161
    %1163 = vmatprep.subr.mxu0 0.0
    %v1164 = vand.u32 %v382, 4294901760
    %v1165 = vsub.f32 %v382, %v1164
    %1166 = vmatpush1.msra.mxu0 %v1165
    %1167 = vmatprep.subr.mxu0 0.0
    %v1168 = vand.u32 %v383, 4294901760
    %v1169 = vsub.f32 %v383, %v1168
    %1170 = vmatpush1.msra.mxu0 %v1169
    %1171 = vmatprep.subr.mxu0 0.0
    %v1172 = vand.u32 %v384, 4294901760
    %v1173 = vsub.f32 %v384, %v1172
    %1174 = vmatpush1.msra.mxu0 %v1173
    %1175 = vmatprep.subr.mxu0 0.0
    %v1176 = vand.u32 %v385, 4294901760
    %v1177 = vsub.f32 %v385, %v1176
    %1178 = vmatpush1.msra.mxu0 %v1177
    %1179 = vmatprep.subr.mxu0 0.0
    %v1180 = vand.u32 %v386, 4294901760
    %v1181 = vsub.f32 %v386, %v1180
    %1182 = vmatpush1.msra.mxu0 %v1181
    %1183 = vmatprep.subr.mxu0 0.0
    %v1184 = vand.u32 %v387, 4294901760
    %v1185 = vsub.f32 %v387, %v1184
    %1186 = vmatpush1.msra.mxu0 %v1185
    %1187 = vmatprep.subr.mxu0 0.0
    %v1188 = vand.u32 %v388, 4294901760
    %v1189 = vsub.f32 %v388, %v1188
    %1190 = vmatpush1.msra.mxu0 %v1189
    %v1191 = vand.u32 %v326, 4294901760
    %v1192 = vsub.f32 %v326, %v1191
    %1193 = vmatprep.mubr.f32.mxu0 %v1192
    %v1194 = vand.u32 %v325, 4294901760
    %v1195 = vsub.f32 %v325, %v1194
    %1196 = vmatmul.mubr.f32.gmra.mrb[0].mxu0 %v1195
    %v1197 = vpop.f32.mrb[0].mxu0
    %v1198 = vadd.f32 %v955, %v1197
    %v1199 = vpop.f32.mrb[0].mxu0
    %v1200 = vand.u32 %v328, 4294901760
    %v1201 = vsub.f32 %v328, %v1200
    %1202 = vmatprep.mubr.f32.mxu0 %v1201
    %v1203 = vand.u32 %v327, 4294901760
    %v1204 = vsub.f32 %v327, %v1203
    %1205 = vmatmul.mubr.f32.gmra.mrb[0].mxu0 %v1204
    %v1206 = vpop.f32.mrb[0].mxu0
    %v1207 = vadd.f32 %v962, %v1206
    %v1208 = vpop.f32.mrb[0].mxu0
    %v1209 = vand.u32 %v330, 4294901760
    %v1210 = vsub.f32 %v330, %v1209
    %1211 = vmatprep.mubr.f32.mxu0 %v1210
    %v1212 = vand.u32 %v329, 4294901760
    %v1213 = vsub.f32 %v329, %v1212
    %1214 = vmatmul.mubr.f32.gmra.mrb[0].mxu0 %v1213
    %v1215 = vpop.f32.mrb[0].mxu0
    %v1216 = vadd.f32 %v969, %v1215
    %v1217 = vpop.f32.mrb[0].mxu0
    %v1218 = vand.u32 %v332, 4294901760
    %v1219 = vsub.f32 %v332, %v1218
    %1220 = vmatprep.mubr.f32.mxu0 %v1219
    %v1221 = vand.u32 %v331, 4294901760
    %v1222 = vsub.f32 %v331, %v1221
    %1223 = vmatmul.mubr.f32.gmra.mrb[0].mxu0 %v1222
    %v1224 = vpop.f32.mrb[0].mxu0
    %v1225 = vadd.f32 %v976, %v1224
    %v1226 = vpop.f32.mrb[0].mxu0
    %v1227 = vand.u32 %v334, 4294901760
    %v1228 = vsub.f32 %v334, %v1227
    %1229 = vmatprep.mubr.f32.mxu0 %v1228
    %v1230 = vand.u32 %v333, 4294901760
    %v1231 = vsub.f32 %v333, %v1230
    %1232 = vmatmul.mubr.f32.gmra.mrb[0].mxu0 %v1231
    %v1233 = vpop.f32.mrb[0].mxu0
    %v1234 = vadd.f32 %v983, %v1233
    %v1235 = vpop.f32.mrb[0].mxu0
    %v1236 = vand.u32 %v336, 4294901760
    %v1237 = vsub.f32 %v336, %v1236
    %1238 = vmatprep.mubr.f32.mxu0 %v1237
    %v1239 = vand.u32 %v335, 4294901760
    %v1240 = vsub.f32 %v335, %v1239
    %1241 = vmatmul.mubr.f32.gmra.mrb[0].mxu0 %v1240
    %v1242 = vpop.f32.mrb[0].mxu0
    %v1243 = vadd.f32 %v990, %v1242
    %v1244 = vpop.f32.mrb[0].mxu0
    %v1245 = vand.u32 %v338, 4294901760
    %v1246 = vsub.f32 %v338, %v1245
    %1247 = vmatprep.mubr.f32.mxu0 %v1246
    %v1248 = vand.u32 %v337, 4294901760
    %v1249 = vsub.f32 %v337, %v1248
    %1250 = vmatmul.mubr.f32.gmra.mrb[0].mxu0 %v1249
    %v1251 = vpop.f32.mrb[0].mxu0
    %v1252 = vadd.f32 %v997, %v1251
    %v1253 = vpop.f32.mrb[0].mxu0
    %v1254 = vand.u32 %v340, 4294901760
    %v1255 = vsub.f32 %v340, %v1254
    %1256 = vmatprep.mubr.f32.mxu0 %v1255
    %v1257 = vand.u32 %v339, 4294901760
    %v1258 = vsub.f32 %v339, %v1257
    %1259 = vmatmul.mubr.f32.gmra.mrb[0].mxu0 %v1258
    %v1260 = vpop.f32.mrb[0].mxu0
    %v1261 = vadd.f32 %v1004, %v1260
    %v1262 = vpop.f32.mrb[0].mxu0
    %v1263 = vand.u32 %v342, 4294901760
    %v1264 = vsub.f32 %v342, %v1263
    %1265 = vmatprep.mubr.f32.mxu0 %v1264
    %v1266 = vand.u32 %v341, 4294901760
    %v1267 = vsub.f32 %v341, %v1266
    %1268 = vmatmul.mubr.f32.gmra.mrb[0].mxu0 %v1267
    %v1269 = vpop.f32.mrb[0].mxu0
    %v1270 = vadd.f32 %v1011, %v1269
    %v1271 = vpop.f32.mrb[0].mxu0
    %v1272 = vand.u32 %v344, 4294901760
    %v1273 = vsub.f32 %v344, %v1272
    %1274 = vmatprep.mubr.f32.mxu0 %v1273
    %v1275 = vand.u32 %v343, 4294901760
    %v1276 = vsub.f32 %v343, %v1275
    %1277 = vmatmul.mubr.f32.gmra.mrb[0].mxu0 %v1276
    %v1278 = vpop.f32.mrb[0].mxu0
    %v1279 = vadd.f32 %v1018, %v1278
    %v1280 = vpop.f32.mrb[0].mxu0
    %v1281 = vand.u32 %v346, 4294901760
    %v1282 = vsub.f32 %v346, %v1281
    %1283 = vmatprep.mubr.f32.mxu0 %v1282
    %v1284 = vand.u32 %v345, 4294901760
    %v1285 = vsub.f32 %v345, %v1284
    %1286 = vmatmul.mubr.f32.gmra.mrb[0].mxu0 %v1285
    %v1287 = vpop.f32.mrb[0].mxu0
    %v1288 = vadd.f32 %v1025, %v1287
    %v1289 = vpop.f32.mrb[0].mxu0
    %v1290 = vand.u32 %v348, 4294901760
    %v1291 = vsub.f32 %v348, %v1290
    %1292 = vmatprep.mubr.f32.mxu0 %v1291
    %v1293 = vand.u32 %v347, 4294901760
    %v1294 = vsub.f32 %v347, %v1293
    %1295 = vmatmul.mubr.f32.gmra.mrb[0].mxu0 %v1294
    %v1296 = vpop.f32.mrb[0].mxu0
    %v1297 = vadd.f32 %v1032, %v1296
    %v1298 = vpop.f32.mrb[0].mxu0
    %v1299 = vand.u32 %v350, 4294901760
    %v1300 = vsub.f32 %v350, %v1299
    %1301 = vmatprep.mubr.f32.mxu0 %v1300
    %v1302 = vand.u32 %v349, 4294901760
    %v1303 = vsub.f32 %v349, %v1302
    %1304 = vmatmul.mubr.f32.gmra.mrb[0].mxu0 %v1303
    %v1305 = vpop.f32.mrb[0].mxu0
    %v1306 = vadd.f32 %v1039, %v1305
    %v1307 = vpop.f32.mrb[0].mxu0
    %v1308 = vand.u32 %v352, 4294901760
    %v1309 = vsub.f32 %v352, %v1308
    %1310 = vmatprep.mubr.f32.mxu0 %v1309
    %v1311 = vand.u32 %v351, 4294901760
    %v1312 = vsub.f32 %v351, %v1311
    %1313 = vmatmul.mubr.f32.gmra.mrb[0].mxu0 %v1312
    %v1314 = vpop.f32.mrb[0].mxu0
    %v1315 = vadd.f32 %v1046, %v1314
    %v1316 = vpop.f32.mrb[0].mxu0
    %v1317 = vand.u32 %v354, 4294901760
    %v1318 = vsub.f32 %v354, %v1317
    %1319 = vmatprep.mubr.f32.mxu0 %v1318
    %v1320 = vand.u32 %v353, 4294901760
    %v1321 = vsub.f32 %v353, %v1320
    %1322 = vmatmul.mubr.f32.gmra.mrb[0].mxu0 %v1321
    %v1323 = vpop.f32.mrb[0].mxu0
    %v1324 = vadd.f32 %v1053, %v1323
    %v1325 = vpop.f32.mrb[0].mxu0
    %v1326 = vand.u32 %v356, 4294901760
    %v1327 = vsub.f32 %v356, %v1326
    %1328 = vmatprep.mubr.f32.mxu0 %v1327
    %v1329 = vand.u32 %v355, 4294901760
    %v1330 = vsub.f32 %v355, %v1329
    %1331 = vmatmul.mubr.f32.gmra.mrb[0].mxu0 %v1330
    %v1332 = vpop.f32.mrb[0].mxu0
    %v1333 = vadd.f32 %v1060, %v1332
    %v1334 = vpop.f32.mrb[0].mxu0
    %1335 = vdwg.mxu0
    %1336 = vmatprep.subr.mxu0 0.0
    %v1337 = vand.u32 %v357, 4294901760
    %1338 = vmatpush1.msra.mxu0 %v1337
    %1339 = vmatprep.subr.mxu0 0.0
    %v1340 = vand.u32 %v358, 4294901760
    %1341 = vmatpush1.msra.mxu0 %v1340
    %1342 = vmatprep.subr.mxu0 0.0
    %v1343 = vand.u32 %v359, 4294901760
    %1344 = vmatpush1.msra.mxu0 %v1343
    %1345 = vmatprep.subr.mxu0 0.0
    %v1346 = vand.u32 %v360, 4294901760
    %1347 = vmatpush1.msra.mxu0 %v1346
    %1348 = vmatprep.subr.mxu0 0.0
    %v1349 = vand.u32 %v361, 4294901760
    %1350 = vmatpush1.msra.mxu0 %v1349
    %1351 = vmatprep.subr.mxu0 0.0
    %v1352 = vand.u32 %v362, 4294901760
    %1353 = vmatpush1.msra.mxu0 %v1352
    %1354 = vmatprep.subr.mxu0 0.0
    %v1355 = vand.u32 %v363, 4294901760
    %1356 = vmatpush1.msra.mxu0 %v1355
    %1357 = vmatprep.subr.mxu0 0.0
    %v1358 = vand.u32 %v364, 4294901760
    %1359 = vmatpush1.msra.mxu0 %v1358
    %1360 = vmatprep.subr.mxu0 0.0
    %v1361 = vand.u32 %v365, 4294901760
    %1362 = vmatpush1.msra.mxu0 %v1361
    %1363 = vmatprep.subr.mxu0 0.0
    %v1364 = vand.u32 %v366, 4294901760
    %1365 = vmatpush1.msra.mxu0 %v1364
    %1366 = vmatprep.subr.mxu0 0.0
    %v1367 = vand.u32 %v367, 4294901760
    %1368 = vmatpush1.msra.mxu0 %v1367
    %1369 = vmatprep.subr.mxu0 0.0
    %v1370 = vand.u32 %v368, 4294901760
    %1371 = vmatpush1.msra.mxu0 %v1370
    %1372 = vmatprep.subr.mxu0 0.0
    %v1373 = vand.u32 %v369, 4294901760
    %1374 = vmatpush1.msra.mxu0 %v1373
    %1375 = vmatprep.subr.mxu0 0.0
    %v1376 = vand.u32 %v370, 4294901760
    %1377 = vmatpush1.msra.mxu0 %v1376
    %1378 = vmatprep.subr.mxu0 0.0
    %v1379 = vand.u32 %v371, 4294901760
    %1380 = vmatpush1.msra.mxu0 %v1379
    %1381 = vmatprep.subr.mxu0 0.0
    %v1382 = vand.u32 %v372, 4294901760
    %1383 = vmatpush1.msra.mxu0 %v1382
    %1384 = vmatprep.subr.mxu0 0.0
    %v1385 = vand.u32 %v373, 4294901760
    %1386 = vmatpush1.msra.mxu0 %v1385
    %1387 = vmatprep.subr.mxu0 0.0
    %v1388 = vand.u32 %v374, 4294901760
    %1389 = vmatpush1.msra.mxu0 %v1388
    %1390 = vmatprep.subr.mxu0 0.0
    %v1391 = vand.u32 %v375, 4294901760
    %1392 = vmatpush1.msra.mxu0 %v1391
    %1393 = vmatprep.subr.mxu0 0.0
    %v1394 = vand.u32 %v376, 4294901760
    %1395 = vmatpush1.msra.mxu0 %v1394
    %1396 = vmatprep.subr.mxu0 0.0
    %v1397 = vand.u32 %v377, 4294901760
    %1398 = vmatpush1.msra.mxu0 %v1397
    %1399 = vmatprep.subr.mxu0 0.0
    %v1400 = vand.u32 %v378, 4294901760
    %1401 = vmatpush1.msra.mxu0 %v1400
    %1402 = vmatprep.subr.mxu0 0.0
    %v1403 = vand.u32 %v379, 4294901760
    %1404 = vmatpush1.msra.mxu0 %v1403
    %1405 = vmatprep.subr.mxu0 0.0
    %v1406 = vand.u32 %v380, 4294901760
    %1407 = vmatpush1.msra.mxu0 %v1406
    %1408 = vmatprep.subr.mxu0 0.0
    %v1409 = vand.u32 %v381, 4294901760
    %1410 = vmatpush1.msra.mxu0 %v1409
    %1411 = vmatprep.subr.mxu0 0.0
    %v1412 = vand.u32 %v382, 4294901760
    %1413 = vmatpush1.msra.mxu0 %v1412
    %1414 = vmatprep.subr.mxu0 0.0
    %v1415 = vand.u32 %v383, 4294901760
    %1416 = vmatpush1.msra.mxu0 %v1415
    %1417 = vmatprep.subr.mxu0 0.0
    %v1418 = vand.u32 %v384, 4294901760
    %1419 = vmatpush1.msra.mxu0 %v1418
    %1420 = vmatprep.subr.mxu0 0.0
    %v1421 = vand.u32 %v385, 4294901760
    %1422 = vmatpush1.msra.mxu0 %v1421
    %1423 = vmatprep.subr.mxu0 0.0
    %v1424 = vand.u32 %v386, 4294901760
    %1425 = vmatpush1.msra.mxu0 %v1424
    %1426 = vmatprep.subr.mxu0 0.0
    %v1427 = vand.u32 %v387, 4294901760
    %1428 = vmatpush1.msra.mxu0 %v1427
    %1429 = vmatprep.subr.mxu0 0.0
    %v1430 = vand.u32 %v388, 4294901760
    %1431 = vmatpush1.msra.mxu0 %v1430
    %v1432 = vand.u32 %v326, 4294901760
    %v1433 = vsub.f32 %v326, %v1432
    %v1434 = vand.u32 %v1433, 4294901760
    %1435 = vmatprep.mubr.f32.mxu0 %v1434
    %v1436 = vand.u32 %v325, 4294901760
    %v1437 = vsub.f32 %v325, %v1436
    %v1438 = vand.u32 %v1437, 4294901760
    %1439 = vmatmul.mubr.f32.gmra.mrb[0].mxu0 %v1438
    %v1440 = vpop.f32.mrb[0].mxu0
    %v1441 = vadd.f32 %v1198, %v1440
    %v1442 = vpop.f32.mrb[0].mxu0
    %v1443 = vand.u32 %v328, 4294901760
    %v1444 = vsub.f32 %v328, %v1443
    %v1445 = vand.u32 %v1444, 4294901760
    %1446 = vmatprep.mubr.f32.mxu0 %v1445
    %v1447 = vand.u32 %v327, 4294901760
    %v1448 = vsub.f32 %v327, %v1447
    %v1449 = vand.u32 %v1448, 4294901760
    %1450 = vmatmul.mubr.f32.gmra.mrb[0].mxu0 %v1449
    %v1451 = vpop.f32.mrb[0].mxu0
    %v1452 = vadd.f32 %v1207, %v1451
    %v1453 = vpop.f32.mrb[0].mxu0
    %v1454 = vand.u32 %v330, 4294901760
    %v1455 = vsub.f32 %v330, %v1454
    %v1456 = vand.u32 %v1455, 4294901760
    %1457 = vmatprep.mubr.f32.mxu0 %v1456
    %v1458 = vand.u32 %v329, 4294901760
    %v1459 = vsub.f32 %v329, %v1458
    %v1460 = vand.u32 %v1459, 4294901760
    %1461 = vmatmul.mubr.f32.gmra.mrb[0].mxu0 %v1460
    %v1462 = vpop.f32.mrb[0].mxu0
    %v1463 = vadd.f32 %v1216, %v1462
    %v1464 = vpop.f32.mrb[0].mxu0
    %v1465 = vand.u32 %v332, 4294901760
    %v1466 = vsub.f32 %v332, %v1465
    %v1467 = vand.u32 %v1466, 4294901760
    %1468 = vmatprep.mubr.f32.mxu0 %v1467
    %v1469 = vand.u32 %v331, 4294901760
    %v1470 = vsub.f32 %v331, %v1469
    %v1471 = vand.u32 %v1470, 4294901760
    %1472 = vmatmul.mubr.f32.gmra.mrb[0].mxu0 %v1471
    %v1473 = vpop.f32.mrb[0].mxu0
    %v1474 = vadd.f32 %v1225, %v1473
    %v1475 = vpop.f32.mrb[0].mxu0
    %v1476 = vand.u32 %v334, 4294901760
    %v1477 = vsub.f32 %v334, %v1476
    %v1478 = vand.u32 %v1477, 4294901760
    %1479 = vmatprep.mubr.f32.mxu0 %v1478
    %v1480 = vand.u32 %v333, 4294901760
    %v1481 = vsub.f32 %v333, %v1480
    %v1482 = vand.u32 %v1481, 4294901760
    %1483 = vmatmul.mubr.f32.gmra.mrb[0].mxu0 %v1482
    %v1484 = vpop.f32.mrb[0].mxu0
    %v1485 = vadd.f32 %v1234, %v1484
    %v1486 = vpop.f32.mrb[0].mxu0
    %v1487 = vand.u32 %v336, 4294901760
    %v1488 = vsub.f32 %v336, %v1487
    %v1489 = vand.u32 %v1488, 4294901760
    %1490 = vmatprep.mubr.f32.mxu0 %v1489
    %v1491 = vand.u32 %v335, 4294901760
    %v1492 = vsub.f32 %v335, %v1491
    %v1493 = vand.u32 %v1492, 4294901760
    %1494 = vmatmul.mubr.f32.gmra.mrb[0].mxu0 %v1493
    %v1495 = vpop.f32.mrb[0].mxu0
    %v1496 = vadd.f32 %v1243, %v1495
    %v1497 = vpop.f32.mrb[0].mxu0
    %v1498 = vand.u32 %v338, 4294901760
    %v1499 = vsub.f32 %v338, %v1498
    %v1500 = vand.u32 %v1499, 4294901760
    %1501 = vmatprep.mubr.f32.mxu0 %v1500
    %v1502 = vand.u32 %v337, 4294901760
    %v1503 = vsub.f32 %v337, %v1502
    %v1504 = vand.u32 %v1503, 4294901760
    %1505 = vmatmul.mubr.f32.gmra.mrb[0].mxu0 %v1504
    %v1506 = vpop.f32.mrb[0].mxu0
    %v1507 = vadd.f32 %v1252, %v1506
    %v1508 = vpop.f32.mrb[0].mxu0
    %v1509 = vand.u32 %v340, 4294901760
    %v1510 = vsub.f32 %v340, %v1509
    %v1511 = vand.u32 %v1510, 4294901760
    %1512 = vmatprep.mubr.f32.mxu0 %v1511
    %v1513 = vand.u32 %v339, 4294901760
    %v1514 = vsub.f32 %v339, %v1513
    %v1515 = vand.u32 %v1514, 4294901760
    %1516 = vmatmul.mubr.f32.gmra.mrb[0].mxu0 %v1515
    %v1517 = vpop.f32.mrb[0].mxu0
    %v1518 = vadd.f32 %v1261, %v1517
    %v1519 = vpop.f32.mrb[0].mxu0
    %v1520 = vand.u32 %v342, 4294901760
    %v1521 = vsub.f32 %v342, %v1520
    %v1522 = vand.u32 %v1521, 4294901760
    %1523 = vmatprep.mubr.f32.mxu0 %v1522
    %v1524 = vand.u32 %v341, 4294901760
    %v1525 = vsub.f32 %v341, %v1524
    %v1526 = vand.u32 %v1525, 4294901760
    %1527 = vmatmul.mubr.f32.gmra.mrb[0].mxu0 %v1526
    %v1528 = vpop.f32.mrb[0].mxu0
    %v1529 = vadd.f32 %v1270, %v1528
    %v1530 = vpop.f32.mrb[0].mxu0
    %v1531 = vand.u32 %v344, 4294901760
    %v1532 = vsub.f32 %v344, %v1531
    %v1533 = vand.u32 %v1532, 4294901760
    %1534 = vmatprep.mubr.f32.mxu0 %v1533
    %v1535 = vand.u32 %v343, 4294901760
    %v1536 = vsub.f32 %v343, %v1535
    %v1537 = vand.u32 %v1536, 4294901760
    %1538 = vmatmul.mubr.f32.gmra.mrb[0].mxu0 %v1537
    %v1539 = vpop.f32.mrb[0].mxu0
    %v1540 = vadd.f32 %v1279, %v1539
    %v1541 = vpop.f32.mrb[0].mxu0
    %v1542 = vand.u32 %v346, 4294901760
    %v1543 = vsub.f32 %v346, %v1542
    %v1544 = vand.u32 %v1543, 4294901760
    %1545 = vmatprep.mubr.f32.mxu0 %v1544
    %v1546 = vand.u32 %v345, 4294901760
    %v1547 = vsub.f32 %v345, %v1546
    %v1548 = vand.u32 %v1547, 4294901760
    %1549 = vmatmul.mubr.f32.gmra.mrb[0].mxu0 %v1548
    %v1550 = vpop.f32.mrb[0].mxu0
    %v1551 = vadd.f32 %v1288, %v1550
    %v1552 = vpop.f32.mrb[0].mxu0
    %v1553 = vand.u32 %v348, 4294901760
    %v1554 = vsub.f32 %v348, %v1553
    %v1555 = vand.u32 %v1554, 4294901760
    %1556 = vmatprep.mubr.f32.mxu0 %v1555
    %v1557 = vand.u32 %v347, 4294901760
    %v1558 = vsub.f32 %v347, %v1557
    %v1559 = vand.u32 %v1558, 4294901760
    %1560 = vmatmul.mubr.f32.gmra.mrb[0].mxu0 %v1559
    %v1561 = vpop.f32.mrb[0].mxu0
    %v1562 = vadd.f32 %v1297, %v1561
    %v1563 = vpop.f32.mrb[0].mxu0
    %v1564 = vand.u32 %v350, 4294901760
    %v1565 = vsub.f32 %v350, %v1564
    %v1566 = vand.u32 %v1565, 4294901760
    %1567 = vmatprep.mubr.f32.mxu0 %v1566
    %v1568 = vand.u32 %v349, 4294901760
    %v1569 = vsub.f32 %v349, %v1568
    %v1570 = vand.u32 %v1569, 4294901760
    %1571 = vmatmul.mubr.f32.gmra.mrb[0].mxu0 %v1570
    %v1572 = vpop.f32.mrb[0].mxu0
    %v1573 = vadd.f32 %v1306, %v1572
    %v1574 = vpop.f32.mrb[0].mxu0
    %v1575 = vand.u32 %v352, 4294901760
    %v1576 = vsub.f32 %v352, %v1575
    %v1577 = vand.u32 %v1576, 4294901760
    %1578 = vmatprep.mubr.f32.mxu0 %v1577
    %v1579 = vand.u32 %v351, 4294901760
    %v1580 = vsub.f32 %v351, %v1579
    %v1581 = vand.u32 %v1580, 4294901760
    %1582 = vmatmul.mubr.f32.gmra.mrb[0].mxu0 %v1581
    %v1583 = vpop.f32.mrb[0].mxu0
    %v1584 = vadd.f32 %v1315, %v1583
    %v1585 = vpop.f32.mrb[0].mxu0
    %v1586 = vand.u32 %v354, 4294901760
    %v1587 = vsub.f32 %v354, %v1586
    %v1588 = vand.u32 %v1587, 4294901760
    %1589 = vmatprep.mubr.f32.mxu0 %v1588
    %v1590 = vand.u32 %v353, 4294901760
    %v1591 = vsub.f32 %v353, %v1590
    %v1592 = vand.u32 %v1591, 4294901760
    %1593 = vmatmul.mubr.f32.gmra.mrb[0].mxu0 %v1592
    %v1594 = vpop.f32.mrb[0].mxu0
    %v1595 = vadd.f32 %v1324, %v1594
    %v1596 = vpop.f32.mrb[0].mxu0
    %v1597 = vand.u32 %v356, 4294901760
    %v1598 = vsub.f32 %v356, %v1597
    %v1599 = vand.u32 %v1598, 4294901760
    %1600 = vmatprep.mubr.f32.mxu0 %v1599
    %v1601 = vand.u32 %v355, 4294901760
    %v1602 = vsub.f32 %v355, %v1601
    %v1603 = vand.u32 %v1602, 4294901760
    %1604 = vmatmul.mubr.f32.gmra.mrb[0].mxu0 %v1603
    %v1605 = vpop.f32.mrb[0].mxu0
    %v1606 = vadd.f32 %v1333, %v1605
    %v1607 = vpop.f32.mrb[0].mxu0
    %1608 = vdwg.mxu0
    %1609 = vmatprep.subr.mxu0 0.0
    %v1610 = vand.u32 %v357, 4294901760
    %v1611 = vsub.f32 %v357, %v1610
    %v1612 = vand.u32 %v1611, 4294901760
    %1613 = vmatpush1.msra.mxu0 %v1612
    %1614 = vmatprep.subr.mxu0 0.0
    %v1615 = vand.u32 %v358, 4294901760
    %v1616 = vsub.f32 %v358, %v1615
    %v1617 = vand.u32 %v1616, 4294901760
    %1618 = vmatpush1.msra.mxu0 %v1617
    %1619 = vmatprep.subr.mxu0 0.0
    %v1620 = vand.u32 %v359, 4294901760
    %v1621 = vsub.f32 %v359, %v1620
    %v1622 = vand.u32 %v1621, 4294901760
    %1623 = vmatpush1.msra.mxu0 %v1622
    %1624 = vmatprep.subr.mxu0 0.0
    %v1625 = vand.u32 %v360, 4294901760
    %v1626 = vsub.f32 %v360, %v1625
    %v1627 = vand.u32 %v1626, 4294901760
    %1628 = vmatpush1.msra.mxu0 %v1627
    %1629 = vmatprep.subr.mxu0 0.0
    %v1630 = vand.u32 %v361, 4294901760
    %v1631 = vsub.f32 %v361, %v1630
    %v1632 = vand.u32 %v1631, 4294901760
    %1633 = vmatpush1.msra.mxu0 %v1632
    %1634 = vmatprep.subr.mxu0 0.0
    %v1635 = vand.u32 %v362, 4294901760
    %v1636 = vsub.f32 %v362, %v1635
    %v1637 = vand.u32 %v1636, 4294901760
    %1638 = vmatpush1.msra.mxu0 %v1637
    %1639 = vmatprep.subr.mxu0 0.0
    %v1640 = vand.u32 %v363, 4294901760
    %v1641 = vsub.f32 %v363, %v1640
    %v1642 = vand.u32 %v1641, 4294901760
    %1643 = vmatpush1.msra.mxu0 %v1642
    %1644 = vmatprep.subr.mxu0 0.0
    %v1645 = vand.u32 %v364, 4294901760
    %v1646 = vsub.f32 %v364, %v1645
    %v1647 = vand.u32 %v1646, 4294901760
    %1648 = vmatpush1.msra.mxu0 %v1647
    %1649 = vmatprep.subr.mxu0 0.0
    %v1650 = vand.u32 %v365, 4294901760
    %v1651 = vsub.f32 %v365, %v1650
    %v1652 = vand.u32 %v1651, 4294901760
    %1653 = vmatpush1.msra.mxu0 %v1652
    %1654 = vmatprep.subr.mxu0 0.0
    %v1655 = vand.u32 %v366, 4294901760
    %v1656 = vsub.f32 %v366, %v1655
    %v1657 = vand.u32 %v1656, 4294901760
    %1658 = vmatpush1.msra.mxu0 %v1657
    %1659 = vmatprep.subr.mxu0 0.0
    %v1660 = vand.u32 %v367, 4294901760
    %v1661 = vsub.f32 %v367, %v1660
    %v1662 = vand.u32 %v1661, 4294901760
    %1663 = vmatpush1.msra.mxu0 %v1662
    %1664 = vmatprep.subr.mxu0 0.0
    %v1665 = vand.u32 %v368, 4294901760
    %v1666 = vsub.f32 %v368, %v1665
    %v1667 = vand.u32 %v1666, 4294901760
    %1668 = vmatpush1.msra.mxu0 %v1667
    %1669 = vmatprep.subr.mxu0 0.0
    %v1670 = vand.u32 %v369, 4294901760
    %v1671 = vsub.f32 %v369, %v1670
    %v1672 = vand.u32 %v1671, 4294901760
    %1673 = vmatpush1.msra.mxu0 %v1672
    %1674 = vmatprep.subr.mxu0 0.0
    %v1675 = vand.u32 %v370, 4294901760
    %v1676 = vsub.f32 %v370, %v1675
    %v1677 = vand.u32 %v1676, 4294901760
    %1678 = vmatpush1.msra.mxu0 %v1677
    %1679 = vmatprep.subr.mxu0 0.0
    %v1680 = vand.u32 %v371, 4294901760
    %v1681 = vsub.f32 %v371, %v1680
    %v1682 = vand.u32 %v1681, 4294901760
    %1683 = vmatpush1.msra.mxu0 %v1682
    %1684 = vmatprep.subr.mxu0 0.0
    %v1685 = vand.u32 %v372, 4294901760
    %v1686 = vsub.f32 %v372, %v1685
    %v1687 = vand.u32 %v1686, 4294901760
    %1688 = vmatpush1.msra.mxu0 %v1687
    %1689 = vmatprep.subr.mxu0 0.0
    %v1690 = vand.u32 %v373, 4294901760
    %v1691 = vsub.f32 %v373, %v1690
    %v1692 = vand.u32 %v1691, 4294901760
    %1693 = vmatpush1.msra.mxu0 %v1692
    %1694 = vmatprep.subr.mxu0 0.0
    %v1695 = vand.u32 %v374, 4294901760
    %v1696 = vsub.f32 %v374, %v1695
    %v1697 = vand.u32 %v1696, 4294901760
    %1698 = vmatpush1.msra.mxu0 %v1697
    %1699 = vmatprep.subr.mxu0 0.0
    %v1700 = vand.u32 %v375, 4294901760
    %v1701 = vsub.f32 %v375, %v1700
    %v1702 = vand.u32 %v1701, 4294901760
    %1703 = vmatpush1.msra.mxu0 %v1702
    %1704 = vmatprep.subr.mxu0 0.0
    %v1705 = vand.u32 %v376, 4294901760
    %v1706 = vsub.f32 %v376, %v1705
    %v1707 = vand.u32 %v1706, 4294901760
    %1708 = vmatpush1.msra.mxu0 %v1707
    %1709 = vmatprep.subr.mxu0 0.0
    %v1710 = vand.u32 %v377, 4294901760
    %v1711 = vsub.f32 %v377, %v1710
    %v1712 = vand.u32 %v1711, 4294901760
    %1713 = vmatpush1.msra.mxu0 %v1712
    %1714 = vmatprep.subr.mxu0 0.0
    %v1715 = vand.u32 %v378, 4294901760
    %v1716 = vsub.f32 %v378, %v1715
    %v1717 = vand.u32 %v1716, 4294901760
    %1718 = vmatpush1.msra.mxu0 %v1717
    %1719 = vmatprep.subr.mxu0 0.0
    %v1720 = vand.u32 %v379, 4294901760
    %v1721 = vsub.f32 %v379, %v1720
    %v1722 = vand.u32 %v1721, 4294901760
    %1723 = vmatpush1.msra.mxu0 %v1722
    %1724 = vmatprep.subr.mxu0 0.0
    %v1725 = vand.u32 %v380, 4294901760
    %v1726 = vsub.f32 %v380, %v1725
    %v1727 = vand.u32 %v1726, 4294901760
    %1728 = vmatpush1.msra.mxu0 %v1727
    %1729 = vmatprep.subr.mxu0 0.0
    %v1730 = vand.u32 %v381, 4294901760
    %v1731 = vsub.f32 %v381, %v1730
    %v1732 = vand.u32 %v1731, 4294901760
    %1733 = vmatpush1.msra.mxu0 %v1732
    %1734 = vmatprep.subr.mxu0 0.0
    %v1735 = vand.u32 %v382, 4294901760
    %v1736 = vsub.f32 %v382, %v1735
    %v1737 = vand.u32 %v1736, 4294901760
    %1738 = vmatpush1.msra.mxu0 %v1737
    %1739 = vmatprep.subr.mxu0 0.0
    %v1740 = vand.u32 %v383, 4294901760
    %v1741 = vsub.f32 %v383, %v1740
    %v1742 = vand.u32 %v1741, 4294901760
    %1743 = vmatpush1.msra.mxu0 %v1742
    %1744 = vmatprep.subr.mxu0 0.0
    %v1745 = vand.u32 %v384, 4294901760
    %v1746 = vsub.f32 %v384, %v1745
    %v1747 = vand.u32 %v1746, 4294901760
    %1748 = vmatpush1.msra.mxu0 %v1747
    %1749 = vmatprep.subr.mxu0 0.0
    %v1750 = vand.u32 %v385, 4294901760
    %v1751 = vsub.f32 %v385, %v1750
    %v1752 = vand.u32 %v1751, 4294901760
    %1753 = vmatpush1.msra.mxu0 %v1752
    %1754 = vmatprep.subr.mxu0 0.0
    %v1755 = vand.u32 %v386, 4294901760
    %v1756 = vsub.f32 %v386, %v1755
    %v1757 = vand.u32 %v1756, 4294901760
    %1758 = vmatpush1.msra.mxu0 %v1757
    %1759 = vmatprep.subr.mxu0 0.0
    %v1760 = vand.u32 %v387, 4294901760
    %v1761 = vsub.f32 %v387, %v1760
    %v1762 = vand.u32 %v1761, 4294901760
    %1763 = vmatpush1.msra.mxu0 %v1762
    %1764 = vmatprep.subr.mxu0 0.0
    %v1765 = vand.u32 %v388, 4294901760
    %v1766 = vsub.f32 %v388, %v1765
    %v1767 = vand.u32 %v1766, 4294901760
    %1768 = vmatpush1.msra.mxu0 %v1767
    %v1769 = vand.u32 %v326, 4294901760
    %1770 = vmatprep.mubr.f32.mxu0 %v1769
    %v1771 = vand.u32 %v325, 4294901760
    %1772 = vmatmul.mubr.f32.gmra.mrb[0].mxu0 %v1771
    %v1773 = vpop.f32.mrb[0].mxu0
    %v1774 = vadd.f32 %v1441, %v1773
    %v1775 = vpop.f32.mrb[0].mxu0
    %v1776 = vand.u32 %v328, 4294901760
    %1777 = vmatprep.mubr.f32.mxu0 %v1776
    %v1778 = vand.u32 %v327, 4294901760
    %1779 = vmatmul.mubr.f32.gmra.mrb[0].mxu0 %v1778
    %v1780 = vpop.f32.mrb[0].mxu0
    %v1781 = vadd.f32 %v1452, %v1780
    %v1782 = vpop.f32.mrb[0].mxu0
    %v1783 = vand.u32 %v330, 4294901760
    %1784 = vmatprep.mubr.f32.mxu0 %v1783
    %v1785 = vand.u32 %v329, 4294901760
    %1786 = vmatmul.mubr.f32.gmra.mrb[0].mxu0 %v1785
    %v1787 = vpop.f32.mrb[0].mxu0
    %v1788 = vadd.f32 %v1463, %v1787
    %v1789 = vpop.f32.mrb[0].mxu0
    %v1790 = vand.u32 %v332, 4294901760
    %1791 = vmatprep.mubr.f32.mxu0 %v1790
    %v1792 = vand.u32 %v331, 4294901760
    %1793 = vmatmul.mubr.f32.gmra.mrb[0].mxu0 %v1792
    %v1794 = vpop.f32.mrb[0].mxu0
    %v1795 = vadd.f32 %v1474, %v1794
    %v1796 = vpop.f32.mrb[0].mxu0
    %v1797 = vand.u32 %v334, 4294901760
    %1798 = vmatprep.mubr.f32.mxu0 %v1797
    %v1799 = vand.u32 %v333, 4294901760
    %1800 = vmatmul.mubr.f32.gmra.mrb[0].mxu0 %v1799
    %v1801 = vpop.f32.mrb[0].mxu0
    %v1802 = vadd.f32 %v1485, %v1801
    %v1803 = vpop.f32.mrb[0].mxu0
    %v1804 = vand.u32 %v336, 4294901760
    %1805 = vmatprep.mubr.f32.mxu0 %v1804
    %v1806 = vand.u32 %v335, 4294901760
    %1807 = vmatmul.mubr.f32.gmra.mrb[0].mxu0 %v1806
    %v1808 = vpop.f32.mrb[0].mxu0
    %v1809 = vadd.f32 %v1496, %v1808
    %v1810 = vpop.f32.mrb[0].mxu0
    %v1811 = vand.u32 %v338, 4294901760
    %1812 = vmatprep.mubr.f32.mxu0 %v1811
    %v1813 = vand.u32 %v337, 4294901760
    %1814 = vmatmul.mubr.f32.gmra.mrb[0].mxu0 %v1813
    %v1815 = vpop.f32.mrb[0].mxu0
    %v1816 = vadd.f32 %v1507, %v1815
    %v1817 = vpop.f32.mrb[0].mxu0
    %v1818 = vand.u32 %v340, 4294901760
    %1819 = vmatprep.mubr.f32.mxu0 %v1818
    %v1820 = vand.u32 %v339, 4294901760
    %1821 = vmatmul.mubr.f32.gmra.mrb[0].mxu0 %v1820
    %v1822 = vpop.f32.mrb[0].mxu0
    %v1823 = vadd.f32 %v1518, %v1822
    %v1824 = vpop.f32.mrb[0].mxu0
    %v1825 = vand.u32 %v342, 4294901760
    %1826 = vmatprep.mubr.f32.mxu0 %v1825
    %v1827 = vand.u32 %v341, 4294901760
    %1828 = vmatmul.mubr.f32.gmra.mrb[0].mxu0 %v1827
    %v1829 = vpop.f32.mrb[0].mxu0
    %v1830 = vadd.f32 %v1529, %v1829
    %v1831 = vpop.f32.mrb[0].mxu0
    %v1832 = vand.u32 %v344, 4294901760
    %1833 = vmatprep.mubr.f32.mxu0 %v1832
    %v1834 = vand.u32 %v343, 4294901760
    %1835 = vmatmul.mubr.f32.gmra.mrb[0].mxu0 %v1834
    %v1836 = vpop.f32.mrb[0].mxu0
    %v1837 = vadd.f32 %v1540, %v1836
    %v1838 = vpop.f32.mrb[0].mxu0
    %v1839 = vand.u32 %v346, 4294901760
    %1840 = vmatprep.mubr.f32.mxu0 %v1839
    %v1841 = vand.u32 %v345, 4294901760
    %1842 = vmatmul.mubr.f32.gmra.mrb[0].mxu0 %v1841
    %v1843 = vpop.f32.mrb[0].mxu0
    %v1844 = vadd.f32 %v1551, %v1843
    %v1845 = vpop.f32.mrb[0].mxu0
    %v1846 = vand.u32 %v348, 4294901760
    %1847 = vmatprep.mubr.f32.mxu0 %v1846
    %v1848 = vand.u32 %v347, 4294901760
    %1849 = vmatmul.mubr.f32.gmra.mrb[0].mxu0 %v1848
    %v1850 = vpop.f32.mrb[0].mxu0
    %v1851 = vadd.f32 %v1562, %v1850
    %v1852 = vpop.f32.mrb[0].mxu0
    %v1853 = vand.u32 %v350, 4294901760
    %1854 = vmatprep.mubr.f32.mxu0 %v1853
    %v1855 = vand.u32 %v349, 4294901760
    %1856 = vmatmul.mubr.f32.gmra.mrb[0].mxu0 %v1855
    %v1857 = vpop.f32.mrb[0].mxu0
    %v1858 = vadd.f32 %v1573, %v1857
    %v1859 = vpop.f32.mrb[0].mxu0
    %v1860 = vand.u32 %v352, 4294901760
    %1861 = vmatprep.mubr.f32.mxu0 %v1860
    %v1862 = vand.u32 %v351, 4294901760
    %1863 = vmatmul.mubr.f32.gmra.mrb[0].mxu0 %v1862
    %v1864 = vpop.f32.mrb[0].mxu0
    %v1865 = vadd.f32 %v1584, %v1864
    %v1866 = vpop.f32.mrb[0].mxu0
    %v1867 = vand.u32 %v354, 4294901760
    %1868 = vmatprep.mubr.f32.mxu0 %v1867
    %v1869 = vand.u32 %v353, 4294901760
    %1870 = vmatmul.mubr.f32.gmra.mrb[0].mxu0 %v1869
    %v1871 = vpop.f32.mrb[0].mxu0
    %v1872 = vadd.f32 %v1595, %v1871
    %v1873 = vpop.f32.mrb[0].mxu0
    %v1874 = vand.u32 %v356, 4294901760
    %1875 = vmatprep.mubr.f32.mxu0 %v1874
    %v1876 = vand.u32 %v355, 4294901760
    %1877 = vmatmul.mubr.f32.gmra.mrb[0].mxu0 %v1876
    %v1878 = vpop.f32.mrb[0].mxu0
    %v1879 = vadd.f32 %v1606, %v1878
    %v1880 = vpop.f32.mrb[0].mxu0
    %1881 = vdwg.mxu0
    %1882 = vmatprep.subr.mxu0 0.0
    %v1883 = vand.u32 %v357, 4294901760
    %1884 = vmatpush1.msra.mxu0 %v1883
    %1885 = vmatprep.subr.mxu0 0.0
    %v1886 = vand.u32 %v358, 4294901760
    %1887 = vmatpush1.msra.mxu0 %v1886
    %1888 = vmatprep.subr.mxu0 0.0
    %v1889 = vand.u32 %v359, 4294901760
    %1890 = vmatpush1.msra.mxu0 %v1889
    %1891 = vmatprep.subr.mxu0 0.0
    %v1892 = vand.u32 %v360, 4294901760
    %1893 = vmatpush1.msra.mxu0 %v1892
    %1894 = vmatprep.subr.mxu0 0.0
    %v1895 = vand.u32 %v361, 4294901760
    %1896 = vmatpush1.msra.mxu0 %v1895
    %1897 = vmatprep.subr.mxu0 0.0
    %v1898 = vand.u32 %v362, 4294901760
    %1899 = vmatpush1.msra.mxu0 %v1898
    %1900 = vmatprep.subr.mxu0 0.0
    %v1901 = vand.u32 %v363, 4294901760
    %1902 = vmatpush1.msra.mxu0 %v1901
    %1903 = vmatprep.subr.mxu0 0.0
    %v1904 = vand.u32 %v364, 4294901760
    %1905 = vmatpush1.msra.mxu0 %v1904
    %1906 = vmatprep.subr.mxu0 0.0
    %v1907 = vand.u32 %v365, 4294901760
    %1908 = vmatpush1.msra.mxu0 %v1907
    %1909 = vmatprep.subr.mxu0 0.0
    %v1910 = vand.u32 %v366, 4294901760
    %1911 = vmatpush1.msra.mxu0 %v1910
    %1912 = vmatprep.subr.mxu0 0.0
    %v1913 = vand.u32 %v367, 4294901760
    %1914 = vmatpush1.msra.mxu0 %v1913
    %1915 = vmatprep.subr.mxu0 0.0
    %v1916 = vand.u32 %v368, 4294901760
    %1917 = vmatpush1.msra.mxu0 %v1916
    %1918 = vmatprep.subr.mxu0 0.0
    %v1919 = vand.u32 %v369, 4294901760
    %1920 = vmatpush1.msra.mxu0 %v1919
    %1921 = vmatprep.subr.mxu0 0.0
    %v1922 = vand.u32 %v370, 4294901760
    %1923 = vmatpush1.msra.mxu0 %v1922
    %1924 = vmatprep.subr.mxu0 0.0
    %v1925 = vand.u32 %v371, 4294901760
    %1926 = vmatpush1.msra.mxu0 %v1925
    %1927 = vmatprep.subr.mxu0 0.0
    %v1928 = vand.u32 %v372, 4294901760
    %1929 = vmatpush1.msra.mxu0 %v1928
    %1930 = vmatprep.subr.mxu0 0.0
    %v1931 = vand.u32 %v373, 4294901760
    %1932 = vmatpush1.msra.mxu0 %v1931
    %1933 = vmatprep.subr.mxu0 0.0
    %v1934 = vand.u32 %v374, 4294901760
    %1935 = vmatpush1.msra.mxu0 %v1934
    %1936 = vmatprep.subr.mxu0 0.0
    %v1937 = vand.u32 %v375, 4294901760
    %1938 = vmatpush1.msra.mxu0 %v1937
    %1939 = vmatprep.subr.mxu0 0.0
    %v1940 = vand.u32 %v376, 4294901760
    %1941 = vmatpush1.msra.mxu0 %v1940
    %1942 = vmatprep.subr.mxu0 0.0
    %v1943 = vand.u32 %v377, 4294901760
    %1944 = vmatpush1.msra.mxu0 %v1943
    %1945 = vmatprep.subr.mxu0 0.0
    %v1946 = vand.u32 %v378, 4294901760
    %1947 = vmatpush1.msra.mxu0 %v1946
    %1948 = vmatprep.subr.mxu0 0.0
    %v1949 = vand.u32 %v379, 4294901760
    %1950 = vmatpush1.msra.mxu0 %v1949
    %1951 = vmatprep.subr.mxu0 0.0
    %v1952 = vand.u32 %v380, 4294901760
    %1953 = vmatpush1.msra.mxu0 %v1952
    %1954 = vmatprep.subr.mxu0 0.0
    %v1955 = vand.u32 %v381, 4294901760
    %1956 = vmatpush1.msra.mxu0 %v1955
    %1957 = vmatprep.subr.mxu0 0.0
    %v1958 = vand.u32 %v382, 4294901760
    %1959 = vmatpush1.msra.mxu0 %v1958
    %1960 = vmatprep.subr.mxu0 0.0
    %v1961 = vand.u32 %v383, 4294901760
    %1962 = vmatpush1.msra.mxu0 %v1961
    %1963 = vmatprep.subr.mxu0 0.0
    %v1964 = vand.u32 %v384, 4294901760
    %1965 = vmatpush1.msra.mxu0 %v1964
    %1966 = vmatprep.subr.mxu0 0.0
    %v1967 = vand.u32 %v385, 4294901760
    %1968 = vmatpush1.msra.mxu0 %v1967
    %1969 = vmatprep.subr.mxu0 0.0
    %v1970 = vand.u32 %v386, 4294901760
    %1971 = vmatpush1.msra.mxu0 %v1970
    %1972 = vmatprep.subr.mxu0 0.0
    %v1973 = vand.u32 %v387, 4294901760
    %1974 = vmatpush1.msra.mxu0 %v1973
    %1975 = vmatprep.subr.mxu0 0.0
    %v1976 = vand.u32 %v388, 4294901760
    %1977 = vmatpush1.msra.mxu0 %v1976
    %v1978 = vand.u32 %v326, 4294901760
    %1979 = vmatprep.mubr.f32.mxu0 %v1978
    %v1980 = vand.u32 %v325, 4294901760
    %1981 = vmatmul.mubr.f32.gmra.mrb[0].mxu0 %v1980
    %v1982 = vpop.f32.mrb[0].mxu0
    %v1983 = vadd.f32 %v1774, %v1982
    %v1984 = vpop.f32.mrb[0].mxu0
    %v1985 = vand.u32 %v328, 4294901760
    %1986 = vmatprep.mubr.f32.mxu0 %v1985
    %v1987 = vand.u32 %v327, 4294901760
    %1988 = vmatmul.mubr.f32.gmra.mrb[0].mxu0 %v1987
    %v1989 = vpop.f32.mrb[0].mxu0
    %v1990 = vadd.f32 %v1781, %v1989
    %v1991 = vpop.f32.mrb[0].mxu0
    %v1992 = vand.u32 %v330, 4294901760
    %1993 = vmatprep.mubr.f32.mxu0 %v1992
    %v1994 = vand.u32 %v329, 4294901760
    %1995 = vmatmul.mubr.f32.gmra.mrb[0].mxu0 %v1994
    %v1996 = vpop.f32.mrb[0].mxu0
    %v1997 = vadd.f32 %v1788, %v1996
    %v1998 = vpop.f32.mrb[0].mxu0
    %v1999 = vand.u32 %v332, 4294901760
    %2000 = vmatprep.mubr.f32.mxu0 %v1999
    %v2001 = vand.u32 %v331, 4294901760
    %2002 = vmatmul.mubr.f32.gmra.mrb[0].mxu0 %v2001
    %v2003 = vpop.f32.mrb[0].mxu0
    %v2004 = vadd.f32 %v1795, %v2003
    %v2005 = vpop.f32.mrb[0].mxu0
    %v2006 = vand.u32 %v334, 4294901760
    %2007 = vmatprep.mubr.f32.mxu0 %v2006
    %v2008 = vand.u32 %v333, 4294901760
    %2009 = vmatmul.mubr.f32.gmra.mrb[0].mxu0 %v2008
    %v2010 = vpop.f32.mrb[0].mxu0
    %v2011 = vadd.f32 %v1802, %v2010
    %v2012 = vpop.f32.mrb[0].mxu0
    %v2013 = vand.u32 %v336, 4294901760
    %2014 = vmatprep.mubr.f32.mxu0 %v2013
    %v2015 = vand.u32 %v335, 4294901760
    %2016 = vmatmul.mubr.f32.gmra.mrb[0].mxu0 %v2015
    %v2017 = vpop.f32.mrb[0].mxu0
    %v2018 = vadd.f32 %v1809, %v2017
    %v2019 = vpop.f32.mrb[0].mxu0
    %v2020 = vand.u32 %v338, 4294901760
    %2021 = vmatprep.mubr.f32.mxu0 %v2020
    %v2022 = vand.u32 %v337, 4294901760
    %2023 = vmatmul.mubr.f32.gmra.mrb[0].mxu0 %v2022
    %v2024 = vpop.f32.mrb[0].mxu0
    %v2025 = vadd.f32 %v1816, %v2024
    %v2026 = vpop.f32.mrb[0].mxu0
    %v2027 = vand.u32 %v340, 4294901760
    %2028 = vmatprep.mubr.f32.mxu0 %v2027
    %v2029 = vand.u32 %v339, 4294901760
    %2030 = vmatmul.mubr.f32.gmra.mrb[0].mxu0 %v2029
    %v2031 = vpop.f32.mrb[0].mxu0
    %v2032 = vadd.f32 %v1823, %v2031
    %v2033 = vpop.f32.mrb[0].mxu0
    %v2034 = vand.u32 %v342, 4294901760
    %2035 = vmatprep.mubr.f32.mxu0 %v2034
    %v2036 = vand.u32 %v341, 4294901760
    %2037 = vmatmul.mubr.f32.gmra.mrb[0].mxu0 %v2036
    %v2038 = vpop.f32.mrb[0].mxu0
    %v2039 = vadd.f32 %v1830, %v2038
    %v2040 = vpop.f32.mrb[0].mxu0
    %v2041 = vand.u32 %v344, 4294901760
    %2042 = vmatprep.mubr.f32.mxu0 %v2041
    %v2043 = vand.u32 %v343, 4294901760
    %2044 = vmatmul.mubr.f32.gmra.mrb[0].mxu0 %v2043
    %v2045 = vpop.f32.mrb[0].mxu0
    %v2046 = vadd.f32 %v1837, %v2045
    %v2047 = vpop.f32.mrb[0].mxu0
    %v2048 = vand.u32 %v346, 4294901760
    %2049 = vmatprep.mubr.f32.mxu0 %v2048
    %v2050 = vand.u32 %v345, 4294901760
    %2051 = vmatmul.mubr.f32.gmra.mrb[0].mxu0 %v2050
    %v2052 = vpop.f32.mrb[0].mxu0
    %v2053 = vadd.f32 %v1844, %v2052
    %v2054 = vpop.f32.mrb[0].mxu0
    %v2055 = vand.u32 %v348, 4294901760
    %2056 = vmatprep.mubr.f32.mxu0 %v2055
    %v2057 = vand.u32 %v347, 4294901760
    %2058 = vmatmul.mubr.f32.gmra.mrb[0].mxu0 %v2057
    %v2059 = vpop.f32.mrb[0].mxu0
    %v2060 = vadd.f32 %v1851, %v2059
    %v2061 = vpop.f32.mrb[0].mxu0
    %v2062 = vand.u32 %v350, 4294901760
    %2063 = vmatprep.mubr.f32.mxu0 %v2062
    %v2064 = vand.u32 %v349, 4294901760
    %2065 = vmatmul.mubr.f32.gmra.mrb[0].mxu0 %v2064
    %v2066 = vpop.f32.mrb[0].mxu0
    %v2067 = vadd.f32 %v1858, %v2066
    %v2068 = vpop.f32.mrb[0].mxu0
    %v2069 = vand.u32 %v352, 4294901760
    %2070 = vmatprep.mubr.f32.mxu0 %v2069
    %v2071 = vand.u32 %v351, 4294901760
    %2072 = vmatmul.mubr.f32.gmra.mrb[0].mxu0 %v2071
    %v2073 = vpop.f32.mrb[0].mxu0
    %v2074 = vadd.f32 %v1865, %v2073
    %v2075 = vpop.f32.mrb[0].mxu0
    %v2076 = vand.u32 %v354, 4294901760
    %2077 = vmatprep.mubr.f32.mxu0 %v2076
    %v2078 = vand.u32 %v353, 4294901760
    %2079 = vmatmul.mubr.f32.gmra.mrb[0].mxu0 %v2078
    %v2080 = vpop.f32.mrb[0].mxu0
    %v2081 = vadd.f32 %v1872, %v2080
    %v2082 = vpop.f32.mrb[0].mxu0
    %v2083 = vand.u32 %v356, 4294901760
    %2084 = vmatprep.mubr.f32.mxu0 %v2083
    %v2085 = vand.u32 %v355, 4294901760
    %2086 = vmatmul.mubr.f32.gmra.mrb[0].mxu0 %v2085
    %v2087 = vpop.f32.mrb[0].mxu0
    %v2088 = vadd.f32 %v1879, %v2087
    %v2089 = vpop.f32.mrb[0].mxu0
    %2090 = vdwg.mxu0
    %v2091 = vadd.f32 %v277, %v1983
    %v2092 = vadd.f32 %v278, %v1990
    %v2093 = vadd.f32 %v279, %v1997
    %v2094 = vadd.f32 %v280, %v2004
    %v2095 = vadd.f32 %v281, %v2011
    %v2096 = vadd.f32 %v282, %v2018
    %v2097 = vadd.f32 %v283, %v2025
    %v2098 = vadd.f32 %v284, %v2032
    %v2099 = vadd.f32 %v285, %v2039
    %v2100 = vadd.f32 %v286, %v2046
    %v2101 = vadd.f32 %v287, %v2053
    %v2102 = vadd.f32 %v288, %v2060
    %v2103 = vadd.f32 %v289, %v2067
    %v2104 = vadd.f32 %v290, %v2074
    %v2105 = vadd.f32 %v291, %v2081
    %v2106 = vadd.f32 %v292, %v2088
    %2107 = vst [vmem:[#allocation6] sm:$0xff] %v2091
    %2108 = vst [vmem:[#allocation6 + $0x8] sm:$0xff] %v2092
    %2109 = vst [vmem:[#allocation6 + $0x10] sm:$0xff] %v2093
    %2110 = vst [vmem:[#allocation6 + $0x18] sm:$0xff] %v2094
    %2111 = vst [vmem:[#allocation6 + $0x20] sm:$0xff] %v2095
    %2112 = vst [vmem:[#allocation6 + $0x28] sm:$0xff] %v2096
    %2113 = vst [vmem:[#allocation6 + $0x30] sm:$0xff] %v2097
    %2114 = vst [vmem:[#allocation6 + $0x38] sm:$0xff] %v2098
    %2115 = vst [vmem:[#allocation6 + $0x40] sm:$0xff] %v2099
    %2116 = vst [vmem:[#allocation6 + $0x48] sm:$0xff] %v2100
    %2117 = vst [vmem:[#allocation6 + $0x50] sm:$0xff] %v2101
    %2118 = vst [vmem:[#allocation6 + $0x58] sm:$0xff] %v2102
    %2119 = vst [vmem:[#allocation6 + $0x60] sm:$0xff] %v2103
    %2120 = vst [vmem:[#allocation6 + $0x68] sm:$0xff] %v2104
    %2121 = vst [vmem:[#allocation6 + $0x70] sm:$0xff] %v2105
    %2122 = vst [vmem:[#allocation6 + $0x78] sm:$0xff] %v2106
    %v2123 = vld [vmem:[%s82] sm:$0xff]
    %v2124 = vld [vmem:[%s82 + $0x8] sm:$0xff]
    %v2127 = vcombine.low %v2123, %v2124
    %v2128 = vcombine.high %v2123, %v2124
    %v2130 = vunpack.c.l.s4 1966171168
    %v2131 = vunpack.c.0.s8 %v2130
    %v2132 = vlaneseq
    %v2133 = vshrl.u32 %v2132, 7
    %v2134 = vsub.s32 %v2131, %v2133
    %v2135 = vrot.slane %v2127, %v2134
    %v2137 = vunpack.c.l.s4 1966171168
    %v2138 = vunpack.c.0.s8 %v2137
    %v2139 = vlaneseq
    %v2140 = vshrl.u32 %v2139, 7
    %v2141 = vsub.s32 %v2138, %v2140
    %v2142 = vrot.slane %v2128, %v2141
    %v2143 = vcombine.high %v2135, %v2135
    %v2144 = vcombine.high %v2142, %v2142
    %v2146 = vunpack.c.l.s4 1966171168
    %v2147 = vunpack.c.0.s8 %v2146
    %v2148 = vlaneseq
    %v2149 = vshrl.u32 %v2148, 7
    %v2150 = vsub.s32 %v2147, %v2149
    %v2151 = vrot.slane %v2135, %v2150
    %v2153 = vunpack.c.l.s4 1966171168
    %v2154 = vunpack.c.0.s8 %v2153
    %v2155 = vlaneseq
    %v2156 = vshrl.u32 %v2155, 7
    %v2157 = vsub.s32 %v2154, %v2156
    %v2158 = vrot.slane %v2142, %v2157
    %v2160 = vunpack.c.l.s4 1966171168
    %v2161 = vunpack.c.0.s8 %v2160
    %v2162 = vlaneseq
    %v2163 = vshrl.u32 %v2162, 7
    %v2164 = vsub.s32 %v2161, %v2163
    %v2165 = vrot.slane %v2143, %v2164
    %v2167 = vunpack.c.l.s4 1966171168
    %v2168 = vunpack.c.0.s8 %v2167
    %v2169 = vlaneseq
    %v2170 = vshrl.u32 %v2169, 7
    %v2171 = vsub.s32 %v2168, %v2170
    %v2172 = vrot.slane %v2144, %v2171
    %v2173 = vcombine.high %v2151, %v2151
    %v2174 = vcombine.high %v2158, %v2158
    %v2175 = vcombine.high %v2165, %v2165
    %v2176 = vcombine.high %v2172, %v2172
    %vm2177 = vcmp.eq.s32.totalorder %v293, 1
    %vm2178 = vcmp.eq.s32.totalorder %v294, 1
    %vm2179 = vcmp.eq.s32.totalorder %v295, 1
    %vm2180 = vcmp.eq.s32.totalorder %v296, 1
    %vm2181 = vcmp.eq.s32.totalorder %v297, 1
    %vm2182 = vcmp.eq.s32.totalorder %v298, 1
    %vm2183 = vcmp.eq.s32.totalorder %v299, 1
    %vm2184 = vcmp.eq.s32.totalorder %v300, 1
    %vm2185 = vcmp.eq.s32.totalorder %v301, 1
    %vm2186 = vcmp.eq.s32.totalorder %v302, 1
    %vm2187 = vcmp.eq.s32.totalorder %v303, 1
    %vm2188 = vcmp.eq.s32.totalorder %v304, 1
    %vm2189 = vcmp.eq.s32.totalorder %v305, 1
    %vm2190 = vcmp.eq.s32.totalorder %v306, 1
    %vm2191 = vcmp.eq.s32.totalorder %v307, 1
    %vm2192 = vcmp.eq.s32.totalorder %v308, 1
    %vm2193 = vcmp.eq.s32.totalorder %v309, 1
    %vm2194 = vcmp.eq.s32.totalorder %v310, 1
    %vm2195 = vcmp.eq.s32.totalorder %v311, 1
    %vm2196 = vcmp.eq.s32.totalorder %v312, 1
    %vm2197 = vcmp.eq.s32.totalorder %v313, 1
    %vm2198 = vcmp.eq.s32.totalorder %v314, 1
    %vm2199 = vcmp.eq.s32.totalorder %v315, 1
    %vm2200 = vcmp.eq.s32.totalorder %v316, 1
    %vm2201 = vcmp.eq.s32.totalorder %v317, 1
    %vm2202 = vcmp.eq.s32.totalorder %v318, 1
    %vm2203 = vcmp.eq.s32.totalorder %v319, 1
    %vm2204 = vcmp.eq.s32.totalorder %v320, 1
    %vm2205 = vcmp.eq.s32.totalorder %v321, 1
    %vm2206 = vcmp.eq.s32.totalorder %v322, 1
    %vm2207 = vcmp.eq.s32.totalorder %v323, 1
    %vm2208 = vcmp.eq.s32.totalorder %v324, 1
    %v2209 = vlaneseq
    %v2210 = vshrl.u32 %v2209, 7
    %v2211 = vsub.s32 0, %v2210
    %v2212 = vrot.slane %v2151, %v2211
    %v2213 = vlaneseq
    %v2214 = vshrl.u32 %v2213, 7
    %v2215 = vsub.s32 1, %v2214
    %v2216 = vrot.slane %v2151, %v2215
    %v2217 = vlaneseq
    %v2218 = vshrl.u32 %v2217, 7
    %v2219 = vsub.s32 0, %v2218
    %v2220 = vrot.slane %v2165, %v2219
    %v2221 = vlaneseq
    %v2222 = vshrl.u32 %v2221, 7
    %v2223 = vsub.s32 1, %v2222
    %v2224 = vrot.slane %v2165, %v2223
    %v2225 = vlaneseq
    %v2226 = vshrl.u32 %v2225, 7
    %v2227 = vsub.s32 0, %v2226
    %v2228 = vrot.slane %v2173, %v2227
    %v2229 = vlaneseq
    %v2230 = vshrl.u32 %v2229, 7
    %v2231 = vsub.s32 1, %v2230
    %v2232 = vrot.slane %v2173, %v2231
    %v2233 = vlaneseq
    %v2234 = vshrl.u32 %v2233, 7
    %v2235 = vsub.s32 0, %v2234
    %v2236 = vrot.slane %v2175, %v2235
    %v2237 = vlaneseq
    %v2238 = vshrl.u32 %v2237, 7
    %v2239 = vsub.s32 1, %v2238
    %v2240 = vrot.slane %v2175, %v2239
    %v2241 = vlaneseq
    %v2242 = vshrl.u32 %v2241, 7
    %v2243 = vsub.s32 0, %v2242
    %v2244 = vrot.slane %v2158, %v2243
    %v2245 = vlaneseq
    %v2246 = vshrl.u32 %v2245, 7
    %v2247 = vsub.s32 1, %v2246
    %v2248 = vrot.slane %v2158, %v2247
    %v2249 = vlaneseq
    %v2250 = vshrl.u32 %v2249, 7
    %v2251 = vsub.s32 0, %v2250
    %v2252 = vrot.slane %v2172, %v2251
    %v2253 = vlaneseq
    %v2254 = vshrl.u32 %v2253, 7
    %v2255 = vsub.s32 1, %v2254
    %v2256 = vrot.slane %v2172, %v2255
    %v2257 = vlaneseq
    %v2258 = vshrl.u32 %v2257, 7
    %v2259 = vsub.s32 0, %v2258
    %v2260 = vrot.slane %v2174, %v2259
    %v2261 = vlaneseq
    %v2262 = vshrl.u32 %v2261, 7
    %v2263 = vsub.s32 1, %v2262
    %v2264 = vrot.slane %v2174, %v2263
    %v2265 = vlaneseq
    %v2266 = vshrl.u32 %v2265, 7
    %v2267 = vsub.s32 0, %v2266
    %v2268 = vrot.slane %v2176, %v2267
    %v2269 = vlaneseq
    %v2270 = vshrl.u32 %v2269, 7
    %v2271 = vsub.s32 1, %v2270
    %v2272 = vrot.slane %v2176, %v2271
    %v2289 = vsel %vm2177, %v2212, -inf
    %v2290 = vsel %vm2178, %v2216, -inf
    %v2291 = vsel %vm2179, %v2212, -inf
    %v2292 = vsel %vm2180, %v2216, -inf
    %v2293 = vsel %vm2181, %v2212, -inf
    %v2294 = vsel %vm2182, %v2216, -inf
    %v2295 = vsel %vm2183, %v2212, -inf
    %v2296 = vsel %vm2184, %v2216, -inf
    %v2297 = vsel %vm2185, %v2212, -inf
    %v2298 = vsel %vm2186, %v2216, -inf
    %v2299 = vsel %vm2187, %v2212, -inf
    %v2300 = vsel %vm2188, %v2216, -inf
    %v2301 = vsel %vm2189, %v2212, -inf
    %v2302 = vsel %vm2190, %v2216, -inf
    %v2303 = vsel %vm2191, %v2212, -inf
    %v2304 = vsel %vm2192, %v2216, -inf
    %v2305 = vsel %vm2193, %v2212, -inf
    %v2306 = vsel %vm2194, %v2216, -inf
    %v2307 = vsel %vm2195, %v2212, -inf
    %v2308 = vsel %vm2196, %v2216, -inf
    %v2309 = vsel %vm2197, %v2212, -inf
    %v2310 = vsel %vm2198, %v2216, -inf
    %v2311 = vsel %vm2199, %v2212, -inf
    %v2312 = vsel %vm2200, %v2216, -inf
    %v2313 = vsel %vm2201, %v2212, -inf
    %v2314 = vsel %vm2202, %v2216, -inf
    %v2315 = vsel %vm2203, %v2212, -inf
    %v2316 = vsel %vm2204, %v2216, -inf
    %v2317 = vsel %vm2205, %v2212, -inf
    %v2318 = vsel %vm2206, %v2216, -inf
    %v2319 = vsel %vm2207, %v2212, -inf
    %v2320 = vsel %vm2208, %v2216, -inf
    %v2321 = vsel %vm2177, %v2220, -inf
    %v2322 = vsel %vm2178, %v2224, -inf
    %v2323 = vsel %vm2179, %v2220, -inf
    %v2324 = vsel %vm2180, %v2224, -inf
    %v2325 = vsel %vm2181, %v2220, -inf
    %v2326 = vsel %vm2182, %v2224, -inf
    %v2327 = vsel %vm2183, %v2220, -inf
    %v2328 = vsel %vm2184, %v2224, -inf
    %v2329 = vsel %vm2185, %v2220, -inf
    %v2330 = vsel %vm2186, %v2224, -inf
    %v2331 = vsel %vm2187, %v2220, -inf
    %v2332 = vsel %vm2188, %v2224, -inf
    %v2333 = vsel %vm2189, %v2220, -inf
    %v2334 = vsel %vm2190, %v2224, -inf
    %v2335 = vsel %vm2191, %v2220, -inf
    %v2336 = vsel %vm2192, %v2224, -inf
    %v2337 = vsel %vm2193, %v2220, -inf
    %v2338 = vsel %vm2194, %v2224, -inf
    %v2339 = vsel %vm2195, %v2220, -inf
    %v2340 = vsel %vm2196, %v2224, -inf
    %v2341 = vsel %vm2197, %v2220, -inf
    %v2342 = vsel %vm2198, %v2224, -inf
    %v2343 = vsel %vm2199, %v2220, -inf
    %v2344 = vsel %vm2200, %v2224, -inf
    %v2345 = vsel %vm2201, %v2220, -inf
    %v2346 = vsel %vm2202, %v2224, -inf
    %v2347 = vsel %vm2203, %v2220, -inf
    %v2348 = vsel %vm2204, %v2224, -inf
    %v2349 = vsel %vm2205, %v2220, -inf
    %v2350 = vsel %vm2206, %v2224, -inf
    %v2351 = vsel %vm2207, %v2220, -inf
    %v2352 = vsel %vm2208, %v2224, -inf
    %v2353 = vsel %vm2177, %v2228, -inf
    %v2354 = vsel %vm2178, %v2232, -inf
    %v2355 = vsel %vm2179, %v2228, -inf
    %v2356 = vsel %vm2180, %v2232, -inf
    %v2357 = vsel %vm2181, %v2228, -inf
    %v2358 = vsel %vm2182, %v2232, -inf
    %v2359 = vsel %vm2183, %v2228, -inf
    %v2360 = vsel %vm2184, %v2232, -inf
    %v2361 = vsel %vm2185, %v2228, -inf
    %v2362 = vsel %vm2186, %v2232, -inf
    %v2363 = vsel %vm2187, %v2228, -inf
    %v2364 = vsel %vm2188, %v2232, -inf
    %v2365 = vsel %vm2189, %v2228, -inf
    %v2366 = vsel %vm2190, %v2232, -inf
    %v2367 = vsel %vm2191, %v2228, -inf
    %v2368 = vsel %vm2192, %v2232, -inf
    %v2369 = vsel %vm2193, %v2228, -inf
    %v2370 = vsel %vm2194, %v2232, -inf
    %v2371 = vsel %vm2195, %v2228, -inf
    %v2372 = vsel %vm2196, %v2232, -inf
    %v2373 = vsel %vm2197, %v2228, -inf
    %v2374 = vsel %vm2198, %v2232, -inf
    %v2375 = vsel %vm2199, %v2228, -inf
    %v2376 = vsel %vm2200, %v2232, -inf
    %v2377 = vsel %vm2201, %v2228, -inf
    %v2378 = vsel %vm2202, %v2232, -inf
    %v2379 = vsel %vm2203, %v2228, -inf
    %v2380 = vsel %vm2204, %v2232, -inf
    %v2381 = vsel %vm2205, %v2228, -inf
    %v2382 = vsel %vm2206, %v2232, -inf
    %v2383 = vsel %vm2207, %v2228, -inf
    %v2384 = vsel %vm2208, %v2232, -inf
    %v2385 = vsel %vm2177, %v2236, -inf
    %v2386 = vsel %vm2178, %v2240, -inf
    %v2387 = vsel %vm2179, %v2236, -inf
    %v2388 = vsel %vm2180, %v2240, -inf
    %v2389 = vsel %vm2181, %v2236, -inf
    %v2390 = vsel %vm2182, %v2240, -inf
    %v2391 = vsel %vm2183, %v2236, -inf
    %v2392 = vsel %vm2184, %v2240, -inf
    %v2393 = vsel %vm2185, %v2236, -inf
    %v2394 = vsel %vm2186, %v2240, -inf
    %v2395 = vsel %vm2187, %v2236, -inf
    %v2396 = vsel %vm2188, %v2240, -inf
    %v2397 = vsel %vm2189, %v2236, -inf
    %v2398 = vsel %vm2190, %v2240, -inf
    %v2399 = vsel %vm2191, %v2236, -inf
    %v2400 = vsel %vm2192, %v2240, -inf
    %v2401 = vsel %vm2193, %v2236, -inf
    %v2402 = vsel %vm2194, %v2240, -inf
    %v2403 = vsel %vm2195, %v2236, -inf
    %v2404 = vsel %vm2196, %v2240, -inf
    %v2405 = vsel %vm2197, %v2236, -inf
    %v2406 = vsel %vm2198, %v2240, -inf
    %v2407 = vsel %vm2199, %v2236, -inf
    %v2408 = vsel %vm2200, %v2240, -inf
    %v2409 = vsel %vm2201, %v2236, -inf
    %v2410 = vsel %vm2202, %v2240, -inf
    %v2411 = vsel %vm2203, %v2236, -inf
    %v2412 = vsel %vm2204, %v2240, -inf
    %v2413 = vsel %vm2205, %v2236, -inf
    %v2414 = vsel %vm2206, %v2240, -inf
    %v2415 = vsel %vm2207, %v2236, -inf
    %v2416 = vsel %vm2208, %v2240, -inf
    %v2417 = vsel %vm2177, %v2244, -inf
    %v2418 = vsel %vm2178, %v2248, -inf
    %v2419 = vsel %vm2179, %v2244, -inf
    %v2420 = vsel %vm2180, %v2248, -inf
    %v2421 = vsel %vm2181, %v2244, -inf
    %v2422 = vsel %vm2182, %v2248, -inf
    %v2423 = vsel %vm2183, %v2244, -inf
    %v2424 = vsel %vm2184, %v2248, -inf
    %v2425 = vsel %vm2185, %v2244, -inf
    %v2426 = vsel %vm2186, %v2248, -inf
    %v2427 = vsel %vm2187, %v2244, -inf
    %v2428 = vsel %vm2188, %v2248, -inf
    %v2429 = vsel %vm2189, %v2244, -inf
    %v2430 = vsel %vm2190, %v2248, -inf
    %v2431 = vsel %vm2191, %v2244, -inf
    %v2432 = vsel %vm2192, %v2248, -inf
    %v2433 = vsel %vm2193, %v2244, -inf
    %v2434 = vsel %vm2194, %v2248, -inf
    %v2435 = vsel %vm2195, %v2244, -inf
    %v2436 = vsel %vm2196, %v2248, -inf
    %v2437 = vsel %vm2197, %v2244, -inf
    %v2438 = vsel %vm2198, %v2248, -inf
    %v2439 = vsel %vm2199, %v2244, -inf
    %v2440 = vsel %vm2200, %v2248, -inf
    %v2441 = vsel %vm2201, %v2244, -inf
    %v2442 = vsel %vm2202, %v2248, -inf
    %v2443 = vsel %vm2203, %v2244, -inf
    %v2444 = vsel %vm2204, %v2248, -inf
    %v2445 = vsel %vm2205, %v2244, -inf
    %v2446 = vsel %vm2206, %v2248, -inf
    %v2447 = vsel %vm2207, %v2244, -inf
    %v2448 = vsel %vm2208, %v2248, -inf
    %v2449 = vsel %vm2177, %v2252, -inf
    %v2450 = vsel %vm2178, %v2256, -inf
    %v2451 = vsel %vm2179, %v2252, -inf
    %v2452 = vsel %vm2180, %v2256, -inf
    %v2453 = vsel %vm2181, %v2252, -inf
    %v2454 = vsel %vm2182, %v2256, -inf
    %v2455 = vsel %vm2183, %v2252, -inf
    %v2456 = vsel %vm2184, %v2256, -inf
    %v2457 = vsel %vm2185, %v2252, -inf
    %v2458 = vsel %vm2186, %v2256, -inf
    %v2459 = vsel %vm2187, %v2252, -inf
    %v2460 = vsel %vm2188, %v2256, -inf
    %v2461 = vsel %vm2189, %v2252, -inf
    %v2462 = vsel %vm2190, %v2256, -inf
    %v2463 = vsel %vm2191, %v2252, -inf
    %v2464 = vsel %vm2192, %v2256, -inf
    %v2465 = vsel %vm2193, %v2252, -inf
    %v2466 = vsel %vm2194, %v2256, -inf
    %v2467 = vsel %vm2195, %v2252, -inf
    %v2468 = vsel %vm2196, %v2256, -inf
    %v2469 = vsel %vm2197, %v2252, -inf
    %v2470 = vsel %vm2198, %v2256, -inf
    %v2471 = vsel %vm2199, %v2252, -inf
    %v2472 = vsel %vm2200, %v2256, -inf
    %v2473 = vsel %vm2201, %v2252, -inf
    %v2474 = vsel %vm2202, %v2256, -inf
    %v2475 = vsel %vm2203, %v2252, -inf
    %v2476 = vsel %vm2204, %v2256, -inf
    %v2477 = vsel %vm2205, %v2252, -inf
    %v2478 = vsel %vm2206, %v2256, -inf
    %v2479 = vsel %vm2207, %v2252, -inf
    %v2480 = vsel %vm2208, %v2256, -inf
    %v2481 = vsel %vm2177, %v2260, -inf
    %v2482 = vsel %vm2178, %v2264, -inf
    %v2483 = vsel %vm2179, %v2260, -inf
    %v2484 = vsel %vm2180, %v2264, -inf
    %v2485 = vsel %vm2181, %v2260, -inf
    %v2486 = vsel %vm2182, %v2264, -inf
    %v2487 = vsel %vm2183, %v2260, -inf
    %v2488 = vsel %vm2184, %v2264, -inf
    %v2489 = vsel %vm2185, %v2260, -inf
    %v2490 = vsel %vm2186, %v2264, -inf
    %v2491 = vsel %vm2187, %v2260, -inf
    %v2492 = vsel %vm2188, %v2264, -inf
    %v2493 = vsel %vm2189, %v2260, -inf
    %v2494 = vsel %vm2190, %v2264, -inf
    %v2495 = vsel %vm2191, %v2260, -inf
    %v2496 = vsel %vm2192, %v2264, -inf
    %v2497 = vsel %vm2193, %v2260, -inf
    %v2498 = vsel %vm2194, %v2264, -inf
    %v2499 = vsel %vm2195, %v2260, -inf
    %v2500 = vsel %vm2196, %v2264, -inf
    %v2501 = vsel %vm2197, %v2260, -inf
    %v2502 = vsel %vm2198, %v2264, -inf
    %v2503 = vsel %vm2199, %v2260, -inf
    %v2504 = vsel %vm2200, %v2264, -inf
    %v2505 = vsel %vm2201, %v2260, -inf
    %v2506 = vsel %vm2202, %v2264, -inf
    %v2507 = vsel %vm2203, %v2260, -inf
    %v2508 = vsel %vm2204, %v2264, -inf
    %v2509 = vsel %vm2205, %v2260, -inf
    %v2510 = vsel %vm2206, %v2264, -inf
    %v2511 = vsel %vm2207, %v2260, -inf
    %v2512 = vsel %vm2208, %v2264, -inf
    %v2513 = vsel %vm2177, %v2268, -inf
    %v2514 = vsel %vm2178, %v2272, -inf
    %v2515 = vsel %vm2179, %v2268, -inf
    %v2516 = vsel %vm2180, %v2272, -inf
    %v2517 = vsel %vm2181, %v2268, -inf
    %v2518 = vsel %vm2182, %v2272, -inf
    %v2519 = vsel %vm2183, %v2268, -inf
    %v2520 = vsel %vm2184, %v2272, -inf
    %v2521 = vsel %vm2185, %v2268, -inf
    %v2522 = vsel %vm2186, %v2272, -inf
    %v2523 = vsel %vm2187, %v2268, -inf
    %v2524 = vsel %vm2188, %v2272, -inf
    %v2525 = vsel %vm2189, %v2268, -inf
    %v2526 = vsel %vm2190, %v2272, -inf
    %v2527 = vsel %vm2191, %v2268, -inf
    %v2528 = vsel %vm2192, %v2272, -inf
    %v2529 = vsel %vm2193, %v2268, -inf
    %v2530 = vsel %vm2194, %v2272, -inf
    %v2531 = vsel %vm2195, %v2268, -inf
    %v2532 = vsel %vm2196, %v2272, -inf
    %v2533 = vsel %vm2197, %v2268, -inf
    %v2534 = vsel %vm2198, %v2272, -inf
    %v2535 = vsel %vm2199, %v2268, -inf
    %v2536 = vsel %vm2200, %v2272, -inf
    %v2537 = vsel %vm2201, %v2268, -inf
    %v2538 = vsel %vm2202, %v2272, -inf
    %v2539 = vsel %vm2203, %v2268, -inf
    %v2540 = vsel %vm2204, %v2272, -inf
    %v2541 = vsel %vm2205, %v2268, -inf
    %v2542 = vsel %vm2206, %v2272, -inf
    %v2543 = vsel %vm2207, %v2268, -inf
    %v2544 = vsel %vm2208, %v2272, -inf
    %v2545 = vld [vmem:[#allocation8] sm:$0xff]
    %v2546 = vmax.f32 %v2289, %v2290
    %2547 = vmax.xlane.f32.xlu0 %v2546
    %v2548 = vpop.xlane.xlu0 %2547
    %v2549 = vmax.f32 %v2291, %v2292
    %2550 = vmax.xlane.f32.xlu0 %v2549
    %v2551 = vpop.xlane.xlu0 %2550
    %v2552 = vmax.f32 %v2293, %v2294
    %2553 = vmax.xlane.f32.xlu0 %v2552
    %v2554 = vpop.xlane.xlu0 %2553
    %v2555 = vmax.f32 %v2295, %v2296
    %2556 = vmax.xlane.f32.xlu0 %v2555
    %v2557 = vpop.xlane.xlu0 %2556
    %v2558 = vmax.f32 %v2297, %v2298
    %2559 = vmax.xlane.f32.xlu0 %v2558
    %v2560 = vpop.xlane.xlu0 %2559
    %v2561 = vmax.f32 %v2299, %v2300
    %2562 = vmax.xlane.f32.xlu0 %v2561
    %v2563 = vpop.xlane.xlu0 %2562
    %v2564 = vmax.f32 %v2301, %v2302
    %2565 = vmax.xlane.f32.xlu0 %v2564
    %v2566 = vpop.xlane.xlu0 %2565
    %v2567 = vmax.f32 %v2303, %v2304
    %2568 = vmax.xlane.f32.xlu0 %v2567
    %v2569 = vpop.xlane.xlu0 %2568
    %v2570 = vmax.f32 %v2305, %v2306
    %2571 = vmax.xlane.f32.xlu0 %v2570
    %v2572 = vpop.xlane.xlu0 %2571
    %v2573 = vmax.f32 %v2307, %v2308
    %2574 = vmax.xlane.f32.xlu0 %v2573
    %v2575 = vpop.xlane.xlu0 %2574
    %v2576 = vmax.f32 %v2309, %v2310
    %2577 = vmax.xlane.f32.xlu0 %v2576
    %v2578 = vpop.xlane.xlu0 %2577
    %v2579 = vmax.f32 %v2311, %v2312
    %2580 = vmax.xlane.f32.xlu0 %v2579
    %v2581 = vpop.xlane.xlu0 %2580
    %v2582 = vmax.f32 %v2313, %v2314
    %2583 = vmax.xlane.f32.xlu0 %v2582
    %v2584 = vpop.xlane.xlu0 %2583
    %v2585 = vmax.f32 %v2315, %v2316
    %2586 = vmax.xlane.f32.xlu0 %v2585
    %v2587 = vpop.xlane.xlu0 %2586
    %v2588 = vmax.f32 %v2317, %v2318
    %2589 = vmax.xlane.f32.xlu0 %v2588
    %v2590 = vpop.xlane.xlu0 %2589
    %v2591 = vmax.f32 %v2319, %v2320
    %2592 = vmax.xlane.f32.xlu0 %v2591
    %v2593 = vpop.xlane.xlu0 %2592
    %v2594 = vmax.f32 %v2321, %v2322
    %2595 = vmax.xlane.f32.xlu0 %v2594
    %v2596 = vpop.xlane.xlu0 %2595
    %v2597 = vmax.f32 %v2323, %v2324
    %2598 = vmax.xlane.f32.xlu0 %v2597
    %v2599 = vpop.xlane.xlu0 %2598
    %v2600 = vmax.f32 %v2325, %v2326
    %2601 = vmax.xlane.f32.xlu0 %v2600
    %v2602 = vpop.xlane.xlu0 %2601
    %v2603 = vmax.f32 %v2327, %v2328
    %2604 = vmax.xlane.f32.xlu0 %v2603
    %v2605 = vpop.xlane.xlu0 %2604
    %v2606 = vmax.f32 %v2329, %v2330
    %2607 = vmax.xlane.f32.xlu0 %v2606
    %v2608 = vpop.xlane.xlu0 %2607
    %v2609 = vmax.f32 %v2331, %v2332
    %2610 = vmax.xlane.f32.xlu0 %v2609
    %v2611 = vpop.xlane.xlu0 %2610
    %v2612 = vmax.f32 %v2333, %v2334
    %2613 = vmax.xlane.f32.xlu0 %v2612
    %v2614 = vpop.xlane.xlu0 %2613
    %v2615 = vmax.f32 %v2335, %v2336
    %2616 = vmax.xlane.f32.xlu0 %v2615
    %v2617 = vpop.xlane.xlu0 %2616
    %v2618 = vmax.f32 %v2337, %v2338
    %2619 = vmax.xlane.f32.xlu0 %v2618
    %v2620 = vpop.xlane.xlu0 %2619
    %v2621 = vmax.f32 %v2339, %v2340
    %2622 = vmax.xlane.f32.xlu0 %v2621
    %v2623 = vpop.xlane.xlu0 %2622
    %v2624 = vmax.f32 %v2341, %v2342
    %2625 = vmax.xlane.f32.xlu0 %v2624
    %v2626 = vpop.xlane.xlu0 %2625
    %v2627 = vmax.f32 %v2343, %v2344
    %2628 = vmax.xlane.f32.xlu0 %v2627
    %v2629 = vpop.xlane.xlu0 %2628
    %v2630 = vmax.f32 %v2345, %v2346
    %2631 = vmax.xlane.f32.xlu0 %v2630
    %v2632 = vpop.xlane.xlu0 %2631
    %v2633 = vmax.f32 %v2347, %v2348
    %2634 = vmax.xlane.f32.xlu0 %v2633
    %v2635 = vpop.xlane.xlu0 %2634
    %v2636 = vmax.f32 %v2349, %v2350
    %2637 = vmax.xlane.f32.xlu0 %v2636
    %v2638 = vpop.xlane.xlu0 %2637
    %v2639 = vmax.f32 %v2351, %v2352
    %2640 = vmax.xlane.f32.xlu0 %v2639
    %v2641 = vpop.xlane.xlu0 %2640
    %v2642 = vmax.f32 %v2353, %v2354
    %2643 = vmax.xlane.f32.xlu0 %v2642
    %v2644 = vpop.xlane.xlu0 %2643
    %v2645 = vmax.f32 %v2355, %v2356
    %2646 = vmax.xlane.f32.xlu0 %v2645
    %v2647 = vpop.xlane.xlu0 %2646
    %v2648 = vmax.f32 %v2357, %v2358
    %2649 = vmax.xlane.f32.xlu0 %v2648
    %v2650 = vpop.xlane.xlu0 %2649
    %v2651 = vmax.f32 %v2359, %v2360
    %2652 = vmax.xlane.f32.xlu0 %v2651
    %v2653 = vpop.xlane.xlu0 %2652
    %v2654 = vmax.f32 %v2361, %v2362
    %2655 = vmax.xlane.f32.xlu0 %v2654
    %v2656 = vpop.xlane.xlu0 %2655
    %v2657 = vmax.f32 %v2363, %v2364
    %2658 = vmax.xlane.f32.xlu0 %v2657
    %v2659 = vpop.xlane.xlu0 %2658
    %v2660 = vmax.f32 %v2365, %v2366
    %2661 = vmax.xlane.f32.xlu0 %v2660
    %v2662 = vpop.xlane.xlu0 %2661
    %v2663 = vmax.f32 %v2367, %v2368
    %2664 = vmax.xlane.f32.xlu0 %v2663
    %v2665 = vpop.xlane.xlu0 %2664
    %v2666 = vmax.f32 %v2369, %v2370
    %2667 = vmax.xlane.f32.xlu0 %v2666
    %v2668 = vpop.xlane.xlu0 %2667
    %v2669 = vmax.f32 %v2371, %v2372
    %2670 = vmax.xlane.f32.xlu0 %v2669
    %v2671 = vpop.xlane.xlu0 %2670
    %v2672 = vmax.f32 %v2373, %v2374
    %2673 = vmax.xlane.f32.xlu0 %v2672
    %v2674 = vpop.xlane.xlu0 %2673
    %v2675 = vmax.f32 %v2375, %v2376
    %2676 = vmax.xlane.f32.xlu0 %v2675
    %v2677 = vpop.xlane.xlu0 %2676
    %v2678 = vmax.f32 %v2377, %v2378
    %2679 = vmax.xlane.f32.xlu0 %v2678
    %v2680 = vpop.xlane.xlu0 %2679
    %v2681 = vmax.f32 %v2379, %v2380
    %2682 = vmax.xlane.f32.xlu0 %v2681
    %v2683 = vpop.xlane.xlu0 %2682
    %v2684 = vmax.f32 %v2381, %v2382
    %2685 = vmax.xlane.f32.xlu0 %v2684
    %v2686 = vpop.xlane.xlu0 %2685
    %v2687 = vmax.f32 %v2383, %v2384
    %2688 = vmax.xlane.f32.xlu0 %v2687
    %v2689 = vpop.xlane.xlu0 %2688
    %v2690 = vmax.f32 %v2385, %v2386
    %2691 = vmax.xlane.f32.xlu0 %v2690
    %v2692 = vpop.xlane.xlu0 %2691
    %v2693 = vmax.f32 %v2387, %v2388
    %2694 = vmax.xlane.f32.xlu0 %v2693
    %v2695 = vpop.xlane.xlu0 %2694
    %v2696 = vmax.f32 %v2389, %v2390
    %2697 = vmax.xlane.f32.xlu0 %v2696
    %v2698 = vpop.xlane.xlu0 %2697
    %v2699 = vmax.f32 %v2391, %v2392
    %2700 = vmax.xlane.f32.xlu0 %v2699
    %v2701 = vpop.xlane.xlu0 %2700
    %v2702 = vmax.f32 %v2393, %v2394
    %2703 = vmax.xlane.f32.xlu0 %v2702
    %v2704 = vpop.xlane.xlu0 %2703
    %v2705 = vmax.f32 %v2395, %v2396
    %2706 = vmax.xlane.f32.xlu0 %v2705
    %v2707 = vpop.xlane.xlu0 %2706
    %v2708 = vmax.f32 %v2397, %v2398
    %2709 = vmax.xlane.f32.xlu0 %v2708
    %v2710 = vpop.xlane.xlu0 %2709
    %v2711 = vmax.f32 %v2399, %v2400
    %2712 = vmax.xlane.f32.xlu0 %v2711
    %v2713 = vpop.xlane.xlu0 %2712
    %v2714 = vmax.f32 %v2401, %v2402
    %2715 = vmax.xlane.f32.xlu0 %v2714
    %v2716 = vpop.xlane.xlu0 %2715
    %v2717 = vmax.f32 %v2403, %v2404
    %2718 = vmax.xlane.f32.xlu0 %v2717
    %v2719 = vpop.xlane.xlu0 %2718
    %v2720 = vmax.f32 %v2405, %v2406
    %2721 = vmax.xlane.f32.xlu0 %v2720
    %v2722 = vpop.xlane.xlu0 %2721
    %v2723 = vmax.f32 %v2407, %v2408
    %2724 = vmax.xlane.f32.xlu0 %v2723
    %v2725 = vpop.xlane.xlu0 %2724
    %v2726 = vmax.f32 %v2409, %v2410
    %2727 = vmax.xlane.f32.xlu0 %v2726
    %v2728 = vpop.xlane.xlu0 %2727
    %v2729 = vmax.f32 %v2411, %v2412
    %2730 = vmax.xlane.f32.xlu0 %v2729
    %v2731 = vpop.xlane.xlu0 %2730
    %v2732 = vmax.f32 %v2413, %v2414
    %2733 = vmax.xlane.f32.xlu0 %v2732
    %v2734 = vpop.xlane.xlu0 %2733
    %v2735 = vmax.f32 %v2415, %v2416
    %2736 = vmax.xlane.f32.xlu0 %v2735
    %v2737 = vpop.xlane.xlu0 %2736
    %v2738 = vmax.f32 %v2417, %v2418
    %2739 = vmax.xlane.f32.xlu0 %v2738
    %v2740 = vpop.xlane.xlu0 %2739
    %v2741 = vmax.f32 %v2419, %v2420
    %2742 = vmax.xlane.f32.xlu0 %v2741
    %v2743 = vpop.xlane.xlu0 %2742
    %v2744 = vmax.f32 %v2421, %v2422
    %2745 = vmax.xlane.f32.xlu0 %v2744
    %v2746 = vpop.xlane.xlu0 %2745
    %v2747 = vmax.f32 %v2423, %v2424
    %2748 = vmax.xlane.f32.xlu0 %v2747
    %v2749 = vpop.xlane.xlu0 %2748
    %v2750 = vmax.f32 %v2425, %v2426
    %2751 = vmax.xlane.f32.xlu0 %v2750
    %v2752 = vpop.xlane.xlu0 %2751
    %v2753 = vmax.f32 %v2427, %v2428
    %2754 = vmax.xlane.f32.xlu0 %v2753
    %v2755 = vpop.xlane.xlu0 %2754
    %v2756 = vmax.f32 %v2429, %v2430
    %2757 = vmax.xlane.f32.xlu0 %v2756
    %v2758 = vpop.xlane.xlu0 %2757
    %v2759 = vmax.f32 %v2431, %v2432
    %2760 = vmax.xlane.f32.xlu0 %v2759
    %v2761 = vpop.xlane.xlu0 %2760
    %v2762 = vmax.f32 %v2433, %v2434
    %2763 = vmax.xlane.f32.xlu0 %v2762
    %v2764 = vpop.xlane.xlu0 %2763
    %v2765 = vmax.f32 %v2435, %v2436
    %2766 = vmax.xlane.f32.xlu0 %v2765
    %v2767 = vpop.xlane.xlu0 %2766
    %v2768 = vmax.f32 %v2437, %v2438
    %2769 = vmax.xlane.f32.xlu0 %v2768
    %v2770 = vpop.xlane.xlu0 %2769
    %v2771 = vmax.f32 %v2439, %v2440
    %2772 = vmax.xlane.f32.xlu0 %v2771
    %v2773 = vpop.xlane.xlu0 %2772
    %v2774 = vmax.f32 %v2441, %v2442
    %2775 = vmax.xlane.f32.xlu0 %v2774
    %v2776 = vpop.xlane.xlu0 %2775
    %v2777 = vmax.f32 %v2443, %v2444
    %2778 = vmax.xlane.f32.xlu0 %v2777
    %v2779 = vpop.xlane.xlu0 %2778
    %v2780 = vmax.f32 %v2445, %v2446
    %2781 = vmax.xlane.f32.xlu0 %v2780
    %v2782 = vpop.xlane.xlu0 %2781
    %v2783 = vmax.f32 %v2447, %v2448
    %2784 = vmax.xlane.f32.xlu0 %v2783
    %v2785 = vpop.xlane.xlu0 %2784
    %v2786 = vmax.f32 %v2449, %v2450
    %2787 = vmax.xlane.f32.xlu0 %v2786
    %v2788 = vpop.xlane.xlu0 %2787
    %v2789 = vmax.f32 %v2451, %v2452
    %2790 = vmax.xlane.f32.xlu0 %v2789
    %v2791 = vpop.xlane.xlu0 %2790
    %v2792 = vmax.f32 %v2453, %v2454
    %2793 = vmax.xlane.f32.xlu0 %v2792
    %v2794 = vpop.xlane.xlu0 %2793
    %v2795 = vmax.f32 %v2455, %v2456
    %2796 = vmax.xlane.f32.xlu0 %v2795
    %v2797 = vpop.xlane.xlu0 %2796
    %v2798 = vmax.f32 %v2457, %v2458
    %2799 = vmax.xlane.f32.xlu0 %v2798
    %v2800 = vpop.xlane.xlu0 %2799
    %v2801 = vmax.f32 %v2459, %v2460
    %2802 = vmax.xlane.f32.xlu0 %v2801
    %v2803 = vpop.xlane.xlu0 %2802
    %v2804 = vmax.f32 %v2461, %v2462
    %2805 = vmax.xlane.f32.xlu0 %v2804
    %v2806 = vpop.xlane.xlu0 %2805
    %v2807 = vmax.f32 %v2463, %v2464
    %2808 = vmax.xlane.f32.xlu0 %v2807
    %v2809 = vpop.xlane.xlu0 %2808
    %v2810 = vmax.f32 %v2465, %v2466
    %2811 = vmax.xlane.f32.xlu0 %v2810
    %v2812 = vpop.xlane.xlu0 %2811
    %v2813 = vmax.f32 %v2467, %v2468
    %2814 = vmax.xlane.f32.xlu0 %v2813
    %v2815 = vpop.xlane.xlu0 %2814
    %v2816 = vmax.f32 %v2469, %v2470
    %2817 = vmax.xlane.f32.xlu0 %v2816
    %v2818 = vpop.xlane.xlu0 %2817
    %v2819 = vmax.f32 %v2471, %v2472
    %2820 = vmax.xlane.f32.xlu0 %v2819
    %v2821 = vpop.xlane.xlu0 %2820
    %v2822 = vmax.f32 %v2473, %v2474
    %2823 = vmax.xlane.f32.xlu0 %v2822
    %v2824 = vpop.xlane.xlu0 %2823
    %v2825 = vmax.f32 %v2475, %v2476
    %2826 = vmax.xlane.f32.xlu0 %v2825
    %v2827 = vpop.xlane.xlu0 %2826
    %v2828 = vmax.f32 %v2477, %v2478
    %2829 = vmax.xlane.f32.xlu0 %v2828
    %v2830 = vpop.xlane.xlu0 %2829
    %v2831 = vmax.f32 %v2479, %v2480
    %2832 = vmax.xlane.f32.xlu0 %v2831
    %v2833 = vpop.xlane.xlu0 %2832
    %v2834 = vmax.f32 %v2481, %v2482
    %2835 = vmax.xlane.f32.xlu0 %v2834
    %v2836 = vpop.xlane.xlu0 %2835
    %v2837 = vmax.f32 %v2483, %v2484
    %2838 = vmax.xlane.f32.xlu0 %v2837
    %v2839 = vpop.xlane.xlu0 %2838
    %v2840 = vmax.f32 %v2485, %v2486
    %2841 = vmax.xlane.f32.xlu0 %v2840
    %v2842 = vpop.xlane.xlu0 %2841
    %v2843 = vmax.f32 %v2487, %v2488
    %2844 = vmax.xlane.f32.xlu0 %v2843
    %v2845 = vpop.xlane.xlu0 %2844
    %v2846 = vmax.f32 %v2489, %v2490
    %2847 = vmax.xlane.f32.xlu0 %v2846
    %v2848 = vpop.xlane.xlu0 %2847
    %v2849 = vmax.f32 %v2491, %v2492
    %2850 = vmax.xlane.f32.xlu0 %v2849
    %v2851 = vpop.xlane.xlu0 %2850
    %v2852 = vmax.f32 %v2493, %v2494
    %2853 = vmax.xlane.f32.xlu0 %v2852
    %v2854 = vpop.xlane.xlu0 %2853
    %v2855 = vmax.f32 %v2495, %v2496
    %2856 = vmax.xlane.f32.xlu0 %v2855
    %v2857 = vpop.xlane.xlu0 %2856
    %v2858 = vmax.f32 %v2497, %v2498
    %2859 = vmax.xlane.f32.xlu0 %v2858
    %v2860 = vpop.xlane.xlu0 %2859
    %v2861 = vmax.f32 %v2499, %v2500
    %2862 = vmax.xlane.f32.xlu0 %v2861
    %v2863 = vpop.xlane.xlu0 %2862
    %v2864 = vmax.f32 %v2501, %v2502
    %2865 = vmax.xlane.f32.xlu0 %v2864
    %v2866 = vpop.xlane.xlu0 %2865
    %v2867 = vmax.f32 %v2503, %v2504
    %2868 = vmax.xlane.f32.xlu0 %v2867
    %v2869 = vpop.xlane.xlu0 %2868
    %v2870 = vmax.f32 %v2505, %v2506
    %2871 = vmax.xlane.f32.xlu0 %v2870
    %v2872 = vpop.xlane.xlu0 %2871
    %v2873 = vmax.f32 %v2507, %v2508
    %2874 = vmax.xlane.f32.xlu0 %v2873
    %v2875 = vpop.xlane.xlu0 %2874
    %v2876 = vmax.f32 %v2509, %v2510
    %2877 = vmax.xlane.f32.xlu0 %v2876
    %v2878 = vpop.xlane.xlu0 %2877
    %v2879 = vmax.f32 %v2511, %v2512
    %2880 = vmax.xlane.f32.xlu0 %v2879
    %v2881 = vpop.xlane.xlu0 %2880
    %v2882 = vmax.f32 %v2513, %v2514
    %2883 = vmax.xlane.f32.xlu0 %v2882
    %v2884 = vpop.xlane.xlu0 %2883
    %v2885 = vmax.f32 %v2515, %v2516
    %2886 = vmax.xlane.f32.xlu0 %v2885
    %v2887 = vpop.xlane.xlu0 %2886
    %v2888 = vmax.f32 %v2517, %v2518
    %2889 = vmax.xlane.f32.xlu0 %v2888
    %v2890 = vpop.xlane.xlu0 %2889
    %v2891 = vmax.f32 %v2519, %v2520
    %2892 = vmax.xlane.f32.xlu0 %v2891
    %v2893 = vpop.xlane.xlu0 %2892
    %v2894 = vmax.f32 %v2521, %v2522
    %2895 = vmax.xlane.f32.xlu0 %v2894
    %v2896 = vpop.xlane.xlu0 %2895
    %v2897 = vmax.f32 %v2523, %v2524
    %2898 = vmax.xlane.f32.xlu0 %v2897
    %v2899 = vpop.xlane.xlu0 %2898
    %v2900 = vmax.f32 %v2525, %v2526
    %2901 = vmax.xlane.f32.xlu0 %v2900
    %v2902 = vpop.xlane.xlu0 %2901
    %v2903 = vmax.f32 %v2527, %v2528
    %2904 = vmax.xlane.f32.xlu0 %v2903
    %v2905 = vpop.xlane.xlu0 %2904
    %v2906 = vmax.f32 %v2529, %v2530
    %2907 = vmax.xlane.f32.xlu0 %v2906
    %v2908 = vpop.xlane.xlu0 %2907
    %v2909 = vmax.f32 %v2531, %v2532
    %2910 = vmax.xlane.f32.xlu0 %v2909
    %v2911 = vpop.xlane.xlu0 %2910
    %v2912 = vmax.f32 %v2533, %v2534
    %2913 = vmax.xlane.f32.xlu0 %v2912
    %v2914 = vpop.xlane.xlu0 %2913
    %v2915 = vmax.f32 %v2535, %v2536
    %2916 = vmax.xlane.f32.xlu0 %v2915
    %v2917 = vpop.xlane.xlu0 %2916
    %v2918 = vmax.f32 %v2537, %v2538
    %2919 = vmax.xlane.f32.xlu0 %v2918
    %v2920 = vpop.xlane.xlu0 %2919
    %v2921 = vmax.f32 %v2539, %v2540
    %2922 = vmax.xlane.f32.xlu0 %v2921
    %v2923 = vpop.xlane.xlu0 %2922
    %v2924 = vmax.f32 %v2541, %v2542
    %2925 = vmax.xlane.f32.xlu0 %v2924
    %v2926 = vpop.xlane.xlu0 %2925
    %v2927 = vmax.f32 %v2543, %v2544
    %2928 = vmax.xlane.f32.xlu0 %v2927
    %v2929 = vpop.xlane.xlu0 %2928
    %v3058 = vlaneseq
    %v3059 = vand.u32 %v3058, 127
    %v3060 = vlaneseq
    %v3061 = vshrl.u32 %v3060, 7
    %v3062 = vsub.s32 %v3059, %v3061
    %v3063 = vrot.slane %v2548, %v3062
    %v3064 = vadd.s32 %v3059, 4294967288
    %v3065 = vlaneseq
    %v3066 = vshrl.u32 %v3065, 7
    %v3067 = vsub.s32 %v3064, %v3066
    %v3068 = vrot.slane %v2551, %v3067
    %vm3069 = vcmask 130112
    %v3070 = vsel %vm3069, %v3068, %v3063
    %v3071 = vadd.s32 %v3059, 4294967280
    %v3072 = vlaneseq
    %v3073 = vshrl.u32 %v3072, 7
    %v3074 = vsub.s32 %v3071, %v3073
    %v3075 = vrot.slane %v2554, %v3074
    %vm3076 = vcmask 195712
    %v3077 = vsel %vm3076, %v3075, %v3070
    %v3078 = vadd.s32 %v3059, 4294967272
    %v3079 = vlaneseq
    %v3080 = vshrl.u32 %v3079, 7
    %v3081 = vsub.s32 %v3078, %v3080
    %v3082 = vrot.slane %v2557, %v3081
    %vm3083 = vcmask 261312
    %v3084 = vsel %vm3083, %v3082, %v3077
    %v3085 = vadd.s32 %v3059, 4294967264
    %v3086 = vlaneseq
    %v3087 = vshrl.u32 %v3086, 7
    %v3088 = vsub.s32 %v3085, %v3087
    %v3089 = vrot.slane %v2560, %v3088
    %vm3090 = vcmask 326912
    %v3091 = vsel %vm3090, %v3089, %v3084
    %v3092 = vadd.s32 %v3059, 4294967256
    %v3093 = vlaneseq
    %v3094 = vshrl.u32 %v3093, 7
    %v3095 = vsub.s32 %v3092, %v3094
    %v3096 = vrot.slane %v2563, %v3095
    %vm3097 = vcmask 392512
    %v3098 = vsel %vm3097, %v3096, %v3091
    %v3099 = vadd.s32 %v3059, 4294967248
    %v3100 = vlaneseq
    %v3101 = vshrl.u32 %v3100, 7
    %v3102 = vsub.s32 %v3099, %v3101
    %v3103 = vrot.slane %v2566, %v3102
    %vm3104 = vcmask 458112
    %v3105 = vsel %vm3104, %v3103, %v3098
    %v3106 = vadd.s32 %v3059, 4294967240
    %v3107 = vlaneseq
    %v3108 = vshrl.u32 %v3107, 7
    %v3109 = vsub.s32 %v3106, %v3108
    %v3110 = vrot.slane %v2569, %v3109
    %vm3111 = vcmask 523712
    %v3112 = vsel %vm3111, %v3110, %v3105
    %v3113 = vadd.s32 %v3059, 4294967232
    %v3114 = vlaneseq
    %v3115 = vshrl.u32 %v3114, 7
    %v3116 = vsub.s32 %v3113, %v3115
    %v3117 = vrot.slane %v2572, %v3116
    %vm3118 = vcmask 589312
    %v3119 = vsel %vm3118, %v3117, %v3112
    %v3120 = vadd.s32 %v3059, 4294967224
    %v3121 = vlaneseq
    %v3122 = vshrl.u32 %v3121, 7
    %v3123 = vsub.s32 %v3120, %v3122
    %v3124 = vrot.slane %v2575, %v3123
    %vm3125 = vcmask 654912
    %v3126 = vsel %vm3125, %v3124, %v3119
    %v3127 = vadd.s32 %v3059, 4294967216
    %v3128 = vlaneseq
    %v3129 = vshrl.u32 %v3128, 7
    %v3130 = vsub.s32 %v3127, %v3129
    %v3131 = vrot.slane %v2578, %v3130
    %vm3132 = vcmask 720512
    %v3133 = vsel %vm3132, %v3131, %v3126
    %v3134 = vadd.s32 %v3059, 4294967208
    %v3135 = vlaneseq
    %v3136 = vshrl.u32 %v3135, 7
    %v3137 = vsub.s32 %v3134, %v3136
    %v3138 = vrot.slane %v2581, %v3137
    %vm3139 = vcmask 786112
    %v3140 = vsel %vm3139, %v3138, %v3133
    %v3141 = vadd.s32 %v3059, 4294967200
    %v3142 = vlaneseq
    %v3143 = vshrl.u32 %v3142, 7
    %v3144 = vsub.s32 %v3141, %v3143
    %v3145 = vrot.slane %v2584, %v3144
    %vm3146 = vcmask 851712
    %v3147 = vsel %vm3146, %v3145, %v3140
    %v3148 = vadd.s32 %v3059, 4294967192
    %v3149 = vlaneseq
    %v3150 = vshrl.u32 %v3149, 7
    %v3151 = vsub.s32 %v3148, %v3150
    %v3152 = vrot.slane %v2587, %v3151
    %vm3153 = vcmask 917312
    %v3154 = vsel %vm3153, %v3152, %v3147
    %v3155 = vadd.s32 %v3059, 4294967184
    %v3156 = vlaneseq
    %v3157 = vshrl.u32 %v3156, 7
    %v3158 = vsub.s32 %v3155, %v3157
    %v3159 = vrot.slane %v2590, %v3158
    %vm3160 = vcmask 982912
    %v3161 = vsel %vm3160, %v3159, %v3154
    %v3162 = vadd.s32 %v3059, 4294967176
    %v3163 = vlaneseq
    %v3164 = vshrl.u32 %v3163, 7
    %v3165 = vsub.s32 %v3162, %v3164
    %v3166 = vrot.slane %v2593, %v3165
    %vm3167 = vcmask 1048512
    %v3168 = vsel %vm3167, %v3166, %v3161
    %v3169 = vlaneseq
    %v3170 = vshrl.u32 %v3169, 7
    %v3171 = vsub.s32 %v3059, %v3170
    %v3172 = vrot.slane %v2596, %v3171
    %v3173 = vlaneseq
    %v3174 = vshrl.u32 %v3173, 7
    %v3175 = vsub.s32 %v3064, %v3174
    %v3176 = vrot.slane %v2599, %v3175
    %v3177 = vsel %vm3069, %v3176, %v3172
    %v3178 = vlaneseq
    %v3179 = vshrl.u32 %v3178, 7
    %v3180 = vsub.s32 %v3071, %v3179
    %v3181 = vrot.slane %v2602, %v3180
    %v3182 = vsel %vm3076, %v3181, %v3177
    %v3183 = vlaneseq
    %v3184 = vshrl.u32 %v3183, 7
    %v3185 = vsub.s32 %v3078, %v3184
    %v3186 = vrot.slane %v2605, %v3185
    %v3187 = vsel %vm3083, %v3186, %v3182
    %v3188 = vlaneseq
    %v3189 = vshrl.u32 %v3188, 7
    %v3190 = vsub.s32 %v3085, %v3189
    %v3191 = vrot.slane %v2608, %v3190
    %v3192 = vsel %vm3090, %v3191, %v3187
    %v3193 = vlaneseq
    %v3194 = vshrl.u32 %v3193, 7
    %v3195 = vsub.s32 %v3092, %v3194
    %v3196 = vrot.slane %v2611, %v3195
    %v3197 = vsel %vm3097, %v3196, %v3192
    %v3198 = vlaneseq
    %v3199 = vshrl.u32 %v3198, 7
    %v3200 = vsub.s32 %v3099, %v3199
    %v3201 = vrot.slane %v2614, %v3200
    %v3202 = vsel %vm3104, %v3201, %v3197
    %v3203 = vlaneseq
    %v3204 = vshrl.u32 %v3203, 7
    %v3205 = vsub.s32 %v3106, %v3204
    %v3206 = vrot.slane %v2617, %v3205
    %v3207 = vsel %vm3111, %v3206, %v3202
    %v3208 = vlaneseq
    %v3209 = vshrl.u32 %v3208, 7
    %v3210 = vsub.s32 %v3113, %v3209
    %v3211 = vrot.slane %v2620, %v3210
    %v3212 = vsel %vm3118, %v3211, %v3207
    %v3213 = vlaneseq
    %v3214 = vshrl.u32 %v3213, 7
    %v3215 = vsub.s32 %v3120, %v3214
    %v3216 = vrot.slane %v2623, %v3215
    %v3217 = vsel %vm3125, %v3216, %v3212
    %v3218 = vlaneseq
    %v3219 = vshrl.u32 %v3218, 7
    %v3220 = vsub.s32 %v3127, %v3219
    %v3221 = vrot.slane %v2626, %v3220
    %v3222 = vsel %vm3132, %v3221, %v3217
    %v3223 = vlaneseq
    %v3224 = vshrl.u32 %v3223, 7
    %v3225 = vsub.s32 %v3134, %v3224
    %v3226 = vrot.slane %v2629, %v3225
    %v3227 = vsel %vm3139, %v3226, %v3222
    %v3228 = vlaneseq
    %v3229 = vshrl.u32 %v3228, 7
    %v3230 = vsub.s32 %v3141, %v3229
    %v3231 = vrot.slane %v2632, %v3230
    %v3232 = vsel %vm3146, %v3231, %v3227
    %v3233 = vlaneseq
    %v3234 = vshrl.u32 %v3233, 7
    %v3235 = vsub.s32 %v3148, %v3234
    %v3236 = vrot.slane %v2635, %v3235
    %v3237 = vsel %vm3153, %v3236, %v3232
    %v3238 = vlaneseq
    %v3239 = vshrl.u32 %v3238, 7
    %v3240 = vsub.s32 %v3155, %v3239
    %v3241 = vrot.slane %v2638, %v3240
    %v3242 = vsel %vm3160, %v3241, %v3237
    %v3243 = vlaneseq
    %v3244 = vshrl.u32 %v3243, 7
    %v3245 = vsub.s32 %v3162, %v3244
    %v3246 = vrot.slane %v2641, %v3245
    %v3247 = vsel %vm3167, %v3246, %v3242
    %v3248 = vlaneseq
    %v3249 = vshrl.u32 %v3248, 7
    %v3250 = vsub.s32 %v3059, %v3249
    %v3251 = vrot.slane %v2644, %v3250
    %v3252 = vlaneseq
    %v3253 = vshrl.u32 %v3252, 7
    %v3254 = vsub.s32 %v3064, %v3253
    %v3255 = vrot.slane %v2647, %v3254
    %v3256 = vsel %vm3069, %v3255, %v3251
    %v3257 = vlaneseq
    %v3258 = vshrl.u32 %v3257, 7
    %v3259 = vsub.s32 %v3071, %v3258
    %v3260 = vrot.slane %v2650, %v3259
    %v3261 = vsel %vm3076, %v3260, %v3256
    %v3262 = vlaneseq
    %v3263 = vshrl.u32 %v3262, 7
    %v3264 = vsub.s32 %v3078, %v3263
    %v3265 = vrot.slane %v2653, %v3264
    %v3266 = vsel %vm3083, %v3265, %v3261
    %v3267 = vlaneseq
    %v3268 = vshrl.u32 %v3267, 7
    %v3269 = vsub.s32 %v3085, %v3268
    %v3270 = vrot.slane %v2656, %v3269
    %v3271 = vsel %vm3090, %v3270, %v3266
    %v3272 = vlaneseq
    %v3273 = vshrl.u32 %v3272, 7
    %v3274 = vsub.s32 %v3092, %v3273
    %v3275 = vrot.slane %v2659, %v3274
    %v3276 = vsel %vm3097, %v3275, %v3271
    %v3277 = vlaneseq
    %v3278 = vshrl.u32 %v3277, 7
    %v3279 = vsub.s32 %v3099, %v3278
    %v3280 = vrot.slane %v2662, %v3279
    %v3281 = vsel %vm3104, %v3280, %v3276
    %v3282 = vlaneseq
    %v3283 = vshrl.u32 %v3282, 7
    %v3284 = vsub.s32 %v3106, %v3283
    %v3285 = vrot.slane %v2665, %v3284
    %v3286 = vsel %vm3111, %v3285, %v3281
    %v3287 = vlaneseq
    %v3288 = vshrl.u32 %v3287, 7
    %v3289 = vsub.s32 %v3113, %v3288
    %v3290 = vrot.slane %v2668, %v3289
    %v3291 = vsel %vm3118, %v3290, %v3286
    %v3292 = vlaneseq
    %v3293 = vshrl.u32 %v3292, 7
    %v3294 = vsub.s32 %v3120, %v3293
    %v3295 = vrot.slane %v2671, %v3294
    %v3296 = vsel %vm3125, %v3295, %v3291
    %v3297 = vlaneseq
    %v3298 = vshrl.u32 %v3297, 7
    %v3299 = vsub.s32 %v3127, %v3298
    %v3300 = vrot.slane %v2674, %v3299
    %v3301 = vsel %vm3132, %v3300, %v3296
    %v3302 = vlaneseq
    %v3303 = vshrl.u32 %v3302, 7
    %v3304 = vsub.s32 %v3134, %v3303
    %v3305 = vrot.slane %v2677, %v3304
    %v3306 = vsel %vm3139, %v3305, %v3301
    %v3307 = vlaneseq
    %v3308 = vshrl.u32 %v3307, 7
    %v3309 = vsub.s32 %v3141, %v3308
    %v3310 = vrot.slane %v2680, %v3309
    %v3311 = vsel %vm3146, %v3310, %v3306
    %v3312 = vlaneseq
    %v3313 = vshrl.u32 %v3312, 7
    %v3314 = vsub.s32 %v3148, %v3313
    %v3315 = vrot.slane %v2683, %v3314
    %v3316 = vsel %vm3153, %v3315, %v3311
    %v3317 = vlaneseq
    %v3318 = vshrl.u32 %v3317, 7
    %v3319 = vsub.s32 %v3155, %v3318
    %v3320 = vrot.slane %v2686, %v3319
    %v3321 = vsel %vm3160, %v3320, %v3316
    %v3322 = vlaneseq
    %v3323 = vshrl.u32 %v3322, 7
    %v3324 = vsub.s32 %v3162, %v3323
    %v3325 = vrot.slane %v2689, %v3324
    %v3326 = vsel %vm3167, %v3325, %v3321
    %v3327 = vlaneseq
    %v3328 = vshrl.u32 %v3327, 7
    %v3329 = vsub.s32 %v3059, %v3328
    %v3330 = vrot.slane %v2692, %v3329
    %v3331 = vlaneseq
    %v3332 = vshrl.u32 %v3331, 7
    %v3333 = vsub.s32 %v3064, %v3332
    %v3334 = vrot.slane %v2695, %v3333
    %v3335 = vsel %vm3069, %v3334, %v3330
    %v3336 = vlaneseq
    %v3337 = vshrl.u32 %v3336, 7
    %v3338 = vsub.s32 %v3071, %v3337
    %v3339 = vrot.slane %v2698, %v3338
    %v3340 = vsel %vm3076, %v3339, %v3335
    %v3341 = vlaneseq
    %v3342 = vshrl.u32 %v3341, 7
    %v3343 = vsub.s32 %v3078, %v3342
    %v3344 = vrot.slane %v2701, %v3343
    %v3345 = vsel %vm3083, %v3344, %v3340
    %v3346 = vlaneseq
    %v3347 = vshrl.u32 %v3346, 7
    %v3348 = vsub.s32 %v3085, %v3347
    %v3349 = vrot.slane %v2704, %v3348
    %v3350 = vsel %vm3090, %v3349, %v3345
    %v3351 = vlaneseq
    %v3352 = vshrl.u32 %v3351, 7
    %v3353 = vsub.s32 %v3092, %v3352
    %v3354 = vrot.slane %v2707, %v3353
    %v3355 = vsel %vm3097, %v3354, %v3350
    %v3356 = vlaneseq
    %v3357 = vshrl.u32 %v3356, 7
    %v3358 = vsub.s32 %v3099, %v3357
    %v3359 = vrot.slane %v2710, %v3358
    %v3360 = vsel %vm3104, %v3359, %v3355
    %v3361 = vlaneseq
    %v3362 = vshrl.u32 %v3361, 7
    %v3363 = vsub.s32 %v3106, %v3362
    %v3364 = vrot.slane %v2713, %v3363
    %v3365 = vsel %vm3111, %v3364, %v3360
    %v3366 = vlaneseq
    %v3367 = vshrl.u32 %v3366, 7
    %v3368 = vsub.s32 %v3113, %v3367
    %v3369 = vrot.slane %v2716, %v3368
    %v3370 = vsel %vm3118, %v3369, %v3365
    %v3371 = vlaneseq
    %v3372 = vshrl.u32 %v3371, 7
    %v3373 = vsub.s32 %v3120, %v3372
    %v3374 = vrot.slane %v2719, %v3373
    %v3375 = vsel %vm3125, %v3374, %v3370
    %v3376 = vlaneseq
    %v3377 = vshrl.u32 %v3376, 7
    %v3378 = vsub.s32 %v3127, %v3377
    %v3379 = vrot.slane %v2722, %v3378
    %v3380 = vsel %vm3132, %v3379, %v3375
    %v3381 = vlaneseq
    %v3382 = vshrl.u32 %v3381, 7
    %v3383 = vsub.s32 %v3134, %v3382
    %v3384 = vrot.slane %v2725, %v3383
    %v3385 = vsel %vm3139, %v3384, %v3380
    %v3386 = vlaneseq
    %v3387 = vshrl.u32 %v3386, 7
    %v3388 = vsub.s32 %v3141, %v3387
    %v3389 = vrot.slane %v2728, %v3388
    %v3390 = vsel %vm3146, %v3389, %v3385
    %v3391 = vlaneseq
    %v3392 = vshrl.u32 %v3391, 7
    %v3393 = vsub.s32 %v3148, %v3392
    %v3394 = vrot.slane %v2731, %v3393
    %v3395 = vsel %vm3153, %v3394, %v3390
    %v3396 = vlaneseq
    %v3397 = vshrl.u32 %v3396, 7
    %v3398 = vsub.s32 %v3155, %v3397
    %v3399 = vrot.slane %v2734, %v3398
    %v3400 = vsel %vm3160, %v3399, %v3395
    %v3401 = vlaneseq
    %v3402 = vshrl.u32 %v3401, 7
    %v3403 = vsub.s32 %v3162, %v3402
    %v3404 = vrot.slane %v2737, %v3403
    %v3405 = vsel %vm3167, %v3404, %v3400
    %v3406 = vlaneseq
    %v3407 = vshrl.u32 %v3406, 7
    %v3408 = vsub.s32 %v3059, %v3407
    %v3409 = vrot.slane %v2740, %v3408
    %v3410 = vlaneseq
    %v3411 = vshrl.u32 %v3410, 7
    %v3412 = vsub.s32 %v3064, %v3411
    %v3413 = vrot.slane %v2743, %v3412
    %v3414 = vsel %vm3069, %v3413, %v3409
    %v3415 = vlaneseq
    %v3416 = vshrl.u32 %v3415, 7
    %v3417 = vsub.s32 %v3071, %v3416
    %v3418 = vrot.slane %v2746, %v3417
    %v3419 = vsel %vm3076, %v3418, %v3414
    %v3420 = vlaneseq
    %v3421 = vshrl.u32 %v3420, 7
    %v3422 = vsub.s32 %v3078, %v3421
    %v3423 = vrot.slane %v2749, %v3422
    %v3424 = vsel %vm3083, %v3423, %v3419
    %v3425 = vlaneseq
    %v3426 = vshrl.u32 %v3425, 7
    %v3427 = vsub.s32 %v3085, %v3426
    %v3428 = vrot.slane %v2752, %v3427
    %v3429 = vsel %vm3090, %v3428, %v3424
    %v3430 = vlaneseq
    %v3431 = vshrl.u32 %v3430, 7
    %v3432 = vsub.s32 %v3092, %v3431
    %v3433 = vrot.slane %v2755, %v3432
    %v3434 = vsel %vm3097, %v3433, %v3429
    %v3435 = vlaneseq
    %v3436 = vshrl.u32 %v3435, 7
    %v3437 = vsub.s32 %v3099, %v3436
    %v3438 = vrot.slane %v2758, %v3437
    %v3439 = vsel %vm3104, %v3438, %v3434
    %v3440 = vlaneseq
    %v3441 = vshrl.u32 %v3440, 7
    %v3442 = vsub.s32 %v3106, %v3441
    %v3443 = vrot.slane %v2761, %v3442
    %v3444 = vsel %vm3111, %v3443, %v3439
    %v3445 = vlaneseq
    %v3446 = vshrl.u32 %v3445, 7
    %v3447 = vsub.s32 %v3113, %v3446
    %v3448 = vrot.slane %v2764, %v3447
    %v3449 = vsel %vm3118, %v3448, %v3444
    %v3450 = vlaneseq
    %v3451 = vshrl.u32 %v3450, 7
    %v3452 = vsub.s32 %v3120, %v3451
    %v3453 = vrot.slane %v2767, %v3452
    %v3454 = vsel %vm3125, %v3453, %v3449
    %v3455 = vlaneseq
    %v3456 = vshrl.u32 %v3455, 7
    %v3457 = vsub.s32 %v3127, %v3456
    %v3458 = vrot.slane %v2770, %v3457
    %v3459 = vsel %vm3132, %v3458, %v3454
    %v3460 = vlaneseq
    %v3461 = vshrl.u32 %v3460, 7
    %v3462 = vsub.s32 %v3134, %v3461
    %v3463 = vrot.slane %v2773, %v3462
    %v3464 = vsel %vm3139, %v3463, %v3459
    %v3465 = vlaneseq
    %v3466 = vshrl.u32 %v3465, 7
    %v3467 = vsub.s32 %v3141, %v3466
    %v3468 = vrot.slane %v2776, %v3467
    %v3469 = vsel %vm3146, %v3468, %v3464
    %v3470 = vlaneseq
    %v3471 = vshrl.u32 %v3470, 7
    %v3472 = vsub.s32 %v3148, %v3471
    %v3473 = vrot.slane %v2779, %v3472
    %v3474 = vsel %vm3153, %v3473, %v3469
    %v3475 = vlaneseq
    %v3476 = vshrl.u32 %v3475, 7
    %v3477 = vsub.s32 %v3155, %v3476
    %v3478 = vrot.slane %v2782, %v3477
    %v3479 = vsel %vm3160, %v3478, %v3474
    %v3480 = vlaneseq
    %v3481 = vshrl.u32 %v3480, 7
    %v3482 = vsub.s32 %v3162, %v3481
    %v3483 = vrot.slane %v2785, %v3482
    %v3484 = vsel %vm3167, %v3483, %v3479
    %v3485 = vlaneseq
    %v3486 = vshrl.u32 %v3485, 7
    %v3487 = vsub.s32 %v3059, %v3486
    %v3488 = vrot.slane %v2788, %v3487
    %v3489 = vlaneseq
    %v3490 = vshrl.u32 %v3489, 7
    %v3491 = vsub.s32 %v3064, %v3490
    %v3492 = vrot.slane %v2791, %v3491
    %v3493 = vsel %vm3069, %v3492, %v3488
    %v3494 = vlaneseq
    %v3495 = vshrl.u32 %v3494, 7
    %v3496 = vsub.s32 %v3071, %v3495
    %v3497 = vrot.slane %v2794, %v3496
    %v3498 = vsel %vm3076, %v3497, %v3493
    %v3499 = vlaneseq
    %v3500 = vshrl.u32 %v3499, 7
    %v3501 = vsub.s32 %v3078, %v3500
    %v3502 = vrot.slane %v2797, %v3501
    %v3503 = vsel %vm3083, %v3502, %v3498
    %v3504 = vlaneseq
    %v3505 = vshrl.u32 %v3504, 7
    %v3506 = vsub.s32 %v3085, %v3505
    %v3507 = vrot.slane %v2800, %v3506
    %v3508 = vsel %vm3090, %v3507, %v3503
    %v3509 = vlaneseq
    %v3510 = vshrl.u32 %v3509, 7
    %v3511 = vsub.s32 %v3092, %v3510
    %v3512 = vrot.slane %v2803, %v3511
    %v3513 = vsel %vm3097, %v3512, %v3508
    %v3514 = vlaneseq
    %v3515 = vshrl.u32 %v3514, 7
    %v3516 = vsub.s32 %v3099, %v3515
    %v3517 = vrot.slane %v2806, %v3516
    %v3518 = vsel %vm3104, %v3517, %v3513
    %v3519 = vlaneseq
    %v3520 = vshrl.u32 %v3519, 7
    %v3521 = vsub.s32 %v3106, %v3520
    %v3522 = vrot.slane %v2809, %v3521
    %v3523 = vsel %vm3111, %v3522, %v3518
    %v3524 = vlaneseq
    %v3525 = vshrl.u32 %v3524, 7
    %v3526 = vsub.s32 %v3113, %v3525
    %v3527 = vrot.slane %v2812, %v3526
    %v3528 = vsel %vm3118, %v3527, %v3523
    %v3529 = vlaneseq
    %v3530 = vshrl.u32 %v3529, 7
    %v3531 = vsub.s32 %v3120, %v3530
    %v3532 = vrot.slane %v2815, %v3531
    %v3533 = vsel %vm3125, %v3532, %v3528
    %v3534 = vlaneseq
    %v3535 = vshrl.u32 %v3534, 7
    %v3536 = vsub.s32 %v3127, %v3535
    %v3537 = vrot.slane %v2818, %v3536
    %v3538 = vsel %vm3132, %v3537, %v3533
    %v3539 = vlaneseq
    %v3540 = vshrl.u32 %v3539, 7
    %v3541 = vsub.s32 %v3134, %v3540
    %v3542 = vrot.slane %v2821, %v3541
    %v3543 = vsel %vm3139, %v3542, %v3538
    %v3544 = vlaneseq
    %v3545 = vshrl.u32 %v3544, 7
    %v3546 = vsub.s32 %v3141, %v3545
    %v3547 = vrot.slane %v2824, %v3546
    %v3548 = vsel %vm3146, %v3547, %v3543
    %v3549 = vlaneseq
    %v3550 = vshrl.u32 %v3549, 7
    %v3551 = vsub.s32 %v3148, %v3550
    %v3552 = vrot.slane %v2827, %v3551
    %v3553 = vsel %vm3153, %v3552, %v3548
    %v3554 = vlaneseq
    %v3555 = vshrl.u32 %v3554, 7
    %v3556 = vsub.s32 %v3155, %v3555
    %v3557 = vrot.slane %v2830, %v3556
    %v3558 = vsel %vm3160, %v3557, %v3553
    %v3559 = vlaneseq
    %v3560 = vshrl.u32 %v3559, 7
    %v3561 = vsub.s32 %v3162, %v3560
    %v3562 = vrot.slane %v2833, %v3561
    %v3563 = vsel %vm3167, %v3562, %v3558
    %v3564 = vlaneseq
    %v3565 = vshrl.u32 %v3564, 7
    %v3566 = vsub.s32 %v3059, %v3565
    %v3567 = vrot.slane %v2836, %v3566
    %v3568 = vlaneseq
    %v3569 = vshrl.u32 %v3568, 7
    %v3570 = vsub.s32 %v3064, %v3569
    %v3571 = vrot.slane %v2839, %v3570
    %v3572 = vsel %vm3069, %v3571, %v3567
    %v3573 = vlaneseq
    %v3574 = vshrl.u32 %v3573, 7
    %v3575 = vsub.s32 %v3071, %v3574
    %v3576 = vrot.slane %v2842, %v3575
    %v3577 = vsel %vm3076, %v3576, %v3572
    %v3578 = vlaneseq
    %v3579 = vshrl.u32 %v3578, 7
    %v3580 = vsub.s32 %v3078, %v3579
    %v3581 = vrot.slane %v2845, %v3580
    %v3582 = vsel %vm3083, %v3581, %v3577
    %v3583 = vlaneseq
    %v3584 = vshrl.u32 %v3583, 7
    %v3585 = vsub.s32 %v3085, %v3584
    %v3586 = vrot.slane %v2848, %v3585
    %v3587 = vsel %vm3090, %v3586, %v3582
    %v3588 = vlaneseq
    %v3589 = vshrl.u32 %v3588, 7
    %v3590 = vsub.s32 %v3092, %v3589
    %v3591 = vrot.slane %v2851, %v3590
    %v3592 = vsel %vm3097, %v3591, %v3587
    %v3593 = vlaneseq
    %v3594 = vshrl.u32 %v3593, 7
    %v3595 = vsub.s32 %v3099, %v3594
    %v3596 = vrot.slane %v2854, %v3595
    %v3597 = vsel %vm3104, %v3596, %v3592
    %v3598 = vlaneseq
    %v3599 = vshrl.u32 %v3598, 7
    %v3600 = vsub.s32 %v3106, %v3599
    %v3601 = vrot.slane %v2857, %v3600
    %v3602 = vsel %vm3111, %v3601, %v3597
    %v3603 = vlaneseq
    %v3604 = vshrl.u32 %v3603, 7
    %v3605 = vsub.s32 %v3113, %v3604
    %v3606 = vrot.slane %v2860, %v3605
    %v3607 = vsel %vm3118, %v3606, %v3602
    %v3608 = vlaneseq
    %v3609 = vshrl.u32 %v3608, 7
    %v3610 = vsub.s32 %v3120, %v3609
    %v3611 = vrot.slane %v2863, %v3610
    %v3612 = vsel %vm3125, %v3611, %v3607
    %v3613 = vlaneseq
    %v3614 = vshrl.u32 %v3613, 7
    %v3615 = vsub.s32 %v3127, %v3614
    %v3616 = vrot.slane %v2866, %v3615
    %v3617 = vsel %vm3132, %v3616, %v3612
    %v3618 = vlaneseq
    %v3619 = vshrl.u32 %v3618, 7
    %v3620 = vsub.s32 %v3134, %v3619
    %v3621 = vrot.slane %v2869, %v3620
    %v3622 = vsel %vm3139, %v3621, %v3617
    %v3623 = vlaneseq
    %v3624 = vshrl.u32 %v3623, 7
    %v3625 = vsub.s32 %v3141, %v3624
    %v3626 = vrot.slane %v2872, %v3625
    %v3627 = vsel %vm3146, %v3626, %v3622
    %v3628 = vlaneseq
    %v3629 = vshrl.u32 %v3628, 7
    %v3630 = vsub.s32 %v3148, %v3629
    %v3631 = vrot.slane %v2875, %v3630
    %v3632 = vsel %vm3153, %v3631, %v3627
    %v3633 = vlaneseq
    %v3634 = vshrl.u32 %v3633, 7
    %v3635 = vsub.s32 %v3155, %v3634
    %v3636 = vrot.slane %v2878, %v3635
    %v3637 = vsel %vm3160, %v3636, %v3632
    %v3638 = vlaneseq
    %v3639 = vshrl.u32 %v3638, 7
    %v3640 = vsub.s32 %v3162, %v3639
    %v3641 = vrot.slane %v2881, %v3640
    %v3642 = vsel %vm3167, %v3641, %v3637
    %v3643 = vlaneseq
    %v3644 = vshrl.u32 %v3643, 7
    %v3645 = vsub.s32 %v3059, %v3644
    %v3646 = vrot.slane %v2884, %v3645
    %v3647 = vlaneseq
    %v3648 = vshrl.u32 %v3647, 7
    %v3649 = vsub.s32 %v3064, %v3648
    %v3650 = vrot.slane %v2887, %v3649
    %v3651 = vsel %vm3069, %v3650, %v3646
    %v3652 = vlaneseq
    %v3653 = vshrl.u32 %v3652, 7
    %v3654 = vsub.s32 %v3071, %v3653
    %v3655 = vrot.slane %v2890, %v3654
    %v3656 = vsel %vm3076, %v3655, %v3651
    %v3657 = vlaneseq
    %v3658 = vshrl.u32 %v3657, 7
    %v3659 = vsub.s32 %v3078, %v3658
    %v3660 = vrot.slane %v2893, %v3659
    %v3661 = vsel %vm3083, %v3660, %v3656
    %v3662 = vlaneseq
    %v3663 = vshrl.u32 %v3662, 7
    %v3664 = vsub.s32 %v3085, %v3663
    %v3665 = vrot.slane %v2896, %v3664
    %v3666 = vsel %vm3090, %v3665, %v3661
    %v3667 = vlaneseq
    %v3668 = vshrl.u32 %v3667, 7
    %v3669 = vsub.s32 %v3092, %v3668
    %v3670 = vrot.slane %v2899, %v3669
    %v3671 = vsel %vm3097, %v3670, %v3666
    %v3672 = vlaneseq
    %v3673 = vshrl.u32 %v3672, 7
    %v3674 = vsub.s32 %v3099, %v3673
    %v3675 = vrot.slane %v2902, %v3674
    %v3676 = vsel %vm3104, %v3675, %v3671
    %v3677 = vlaneseq
    %v3678 = vshrl.u32 %v3677, 7
    %v3679 = vsub.s32 %v3106, %v3678
    %v3680 = vrot.slane %v2905, %v3679
    %v3681 = vsel %vm3111, %v3680, %v3676
    %v3682 = vlaneseq
    %v3683 = vshrl.u32 %v3682, 7
    %v3684 = vsub.s32 %v3113, %v3683
    %v3685 = vrot.slane %v2908, %v3684
    %v3686 = vsel %vm3118, %v3685, %v3681
    %v3687 = vlaneseq
    %v3688 = vshrl.u32 %v3687, 7
    %v3689 = vsub.s32 %v3120, %v3688
    %v3690 = vrot.slane %v2911, %v3689
    %v3691 = vsel %vm3125, %v3690, %v3686
    %v3692 = vlaneseq
    %v3693 = vshrl.u32 %v3692, 7
    %v3694 = vsub.s32 %v3127, %v3693
    %v3695 = vrot.slane %v2914, %v3694
    %v3696 = vsel %vm3132, %v3695, %v3691
    %v3697 = vlaneseq
    %v3698 = vshrl.u32 %v3697, 7
    %v3699 = vsub.s32 %v3134, %v3698
    %v3700 = vrot.slane %v2917, %v3699
    %v3701 = vsel %vm3139, %v3700, %v3696
    %v3702 = vlaneseq
    %v3703 = vshrl.u32 %v3702, 7
    %v3704 = vsub.s32 %v3141, %v3703
    %v3705 = vrot.slane %v2920, %v3704
    %v3706 = vsel %vm3146, %v3705, %v3701
    %v3707 = vlaneseq
    %v3708 = vshrl.u32 %v3707, 7
    %v3709 = vsub.s32 %v3148, %v3708
    %v3710 = vrot.slane %v2923, %v3709
    %v3711 = vsel %vm3153, %v3710, %v3706
    %v3712 = vlaneseq
    %v3713 = vshrl.u32 %v3712, 7
    %v3714 = vsub.s32 %v3155, %v3713
    %v3715 = vrot.slane %v2926, %v3714
    %v3716 = vsel %vm3160, %v3715, %v3711
    %v3717 = vlaneseq
    %v3718 = vshrl.u32 %v3717, 7
    %v3719 = vsub.s32 %v3162, %v3718
    %v3720 = vrot.slane %v2929, %v3719
    %v3721 = vsel %vm3167, %v3720, %v3716
    %vm3722 = vcmask 1041409
    %v3723 = vsel %vm3722, %v3247, %v3168
    %vm3724 = vcmask 1042434
    %v3725 = vsel %vm3724, %v3326, %v3723
    %vm3726 = vcmask 1043459
    %v3727 = vsel %vm3726, %v3405, %v3725
    %vm3728 = vcmask 1044484
    %v3729 = vsel %vm3728, %v3484, %v3727
    %vm3730 = vcmask 1045509
    %v3731 = vsel %vm3730, %v3563, %v3729
    %vm3732 = vcmask 1046534
    %v3733 = vsel %vm3732, %v3642, %v3731
    %vm3734 = vcmask 1047559
    %v3735 = vsel %vm3734, %v3721, %v3733
    %v3737 = vmax.f32 %v2545, %v3735
    %3738 = vst [vmem:[#allocation8] sm:$0xff] %v3737
    // Predicated region
    $region22: #{tpu_custom_call.1} parent=1 // pred_check
      _
    $region23: #{tpu_custom_call.1} parent=1 // pred_check_branch
      %3740 = sbr.rel (0) target = $region25
    $region24: #{tpu_custom_call.1} parent=1 // pred_region
      %s3741 = sld [smem:[#allocation4]]
      %s3742 = smul.u32 16, %s3741
      %s3744 = ssub.s32 2048, 2048
      %3745 = vsyncadd [#allocation7], %s3744
      %s3746 = smul.addr %s3742, 128
      %s3747 = scalar_lea.hbm %s5, %s3746
      %s3748 = sshll.u32 [#allocation6], 4
      %s3749 = int_to_ptr.vmem [resolvable:$true] %s3748
      %3754 = dma.vmem_to_hbm [thread:$0]  %s3749, 2048, %s3747, [#allocation7], 128, 128, 8
    $region25: #{tpu_custom_call.1} parent=1 // pred_fallthru
      _
    // Predicated region
    $region26: #{tpu_custom_call.1} parent=1 // pred_check
      _
    $region27: #{tpu_custom_call.1} parent=1 // pred_check_branch
      %3756 = sbr.rel (0) target = $region29
    $region28: #{tpu_custom_call.1} parent=1 // pred_region
      %s3757 = sld [smem:[#allocation4]]
      %s3759 = ssub.s32 128, 128
      %3760 = vsyncadd [#allocation9], %s3759
      %s3761 = smul.addr %s3757, 128
      %s3762 = scalar_lea.hbm %s6, %s3761
      %s3764 = sshll.u32 [#allocation8], 4
      %s3765 = int_to_ptr.vmem [resolvable:$true] %s3764
      %3767 = dma.vmem_to_hbm [thread:$0]  %s3765, 128, %s3762, [#allocation9]
    $region29: #{tpu_custom_call.1} parent=1 // pred_fallthru
      _
    // Predicated region
    $region30: #{tpu_custom_call.1} parent=1 // pred_check
      _
    $region31: #{tpu_custom_call.1} parent=1 // pred_check_branch
      %3769 = sbr.rel (0) target = $region33
    $region32: #{tpu_custom_call.1} parent=1 // pred_region
      %3770 = dma.done [#allocation7], 2048
    $region33: #{tpu_custom_call.1} parent=1 // pred_fallthru
      _
    // Predicated region
    $region34: #{tpu_custom_call.1} parent=1 // pred_check
      _
    $region35: #{tpu_custom_call.1} parent=1 // pred_check_branch
      %3772 = sbr.rel (0) target = $region37
    $region36: #{tpu_custom_call.1} parent=1 // pred_region
      %3773 = dma.done [#allocation9], 128
    $region37: #{tpu_custom_call.1} parent=1 // pred_fallthru
      _
    %3774 = vsyncpa [#allocation7], 1
    %3775 = vsyncpa [#allocation9], 1

</llo_original>
